<compile_context>
chip_gen: v7x
topology: tpu7x:2x2x1
jax: 0.10.0
libtpu: 0.0.40
codegen_flags: <defaults>
</compile_context>

<pallas_src>
import functools

import numpy as np
import jax
import jax.numpy as jnp
from jax.experimental import pallas as pl
from jax.experimental.pallas import tpu as pltpu


# ----------------------------------------------------------------------------
# Fused kernel: in-kernel embedding gather, word GRU over T steps, document-
# batched sentence GRU, blog mean, scoring MLP, softmax.  Everything stays in VMEM.
# ----------------------------------------------------------------------------
def _fused_kernel(doc_lens, H,
                  ids_ref,                                    # [T*N, 1] int32, time-major
                  embed_ref,                                  # [V, D]
                  w_wih_ref, w_whh_ref, w_b_ref, w_bhn_ref,   # word GRU [3,D,H],[3,H,H],[3,1,H],[1,H]
                  s_wih_ref, s_whh_ref, s_b_ref, s_bhn_ref,   # sent GRU [3,H,H],[3,H,H],[3,1,H],[1,H]
                  sel_ref,                                    # [max_dl*num_docs, N] one-hot gather
                  act_ref,                                    # [num_docs, max_dl] active mask
                  w0t_ref, w1t_ref, w2t_ref,                  # scoring MLP
                  out_ref):                                   # [N, 1] probs
    f32 = jnp.float32
    TN = ids_ref.shape[0]
    V, D = embed_ref.shape
    N = out_ref.shape[0]
    T = TN // N
    num_docs = len(doc_lens)
    max_dl = max(doc_lens)
    min_dl = min(doc_lens)

    # ---- embedding gather in-kernel: one-hot [TN, V] @ [V, D] on the MXU -----------
    # TODO(synk): at production vocab sizes tile the one-hot over V (or use a DMA
    # row gather); at V=50 the [TN, V] one-hot is tiny and stays in vregs/VMEM.
    ids = ids_ref[...]                                                  # [TN, 1] int32
    v_iota = jax.lax.broadcasted_iota(jnp.int32, (TN, V), 1)
    onehot = jnp.where(v_iota == ids, 1.0, 0.0)                         # [TN, V] f32
    x_all = jnp.dot(onehot, embed_ref[...], preferred_element_type=f32)  # [TN, D]

    # ---- word GRU: input-side projections hoisted (gate order 0=r, 1=z, 2=n) -------
    gi_w = [jnp.dot(x_all, w_wih_ref[g], preferred_element_type=f32) + w_b_ref[g]
            for g in range(3)]                                          # 3 x [TN, H]
    whh = [w_whh_ref[g] for g in range(3)]
    w_bhn = jnp.broadcast_to(w_bhn_ref[...], (N, H))                    # hoisted broadcast

    h = jnp.zeros((N, H), f32)
    for t in range(T):                      # static trip count -> straight-line code
        lo = t * N
        gh_r = jnp.dot(h, whh[0], preferred_element_type=f32)
        gh_z = jnp.dot(h, whh[1], preferred_element_type=f32)
        gh_n = jnp.dot(h, whh[2], preferred_element_type=f32)
        r = jax.nn.sigmoid(gi_w[0][lo:lo + N] + gh_r)
        z = jax.nn.sigmoid(gi_w[1][lo:lo + N] + gh_z)
        n = jnp.tanh(gi_w[2][lo:lo + N] + r * (gh_n + w_bhn))
        h = (1.0 - z) * n + z * h
    sents_h = h                                                         # [N, H]

    # ---- sentence GRU: documents batched along sublanes ----------------------------
    # Gather to a step-major padded [max_dl*num_docs, H] layout with one static
    # one-hot matmul; the recurrence is then max(doc_lens) steps over [num_docs, H].
    sents_pad = jnp.dot(sel_ref[...], sents_h, preferred_element_type=f32)   # [P, H]
    gi_s = [jnp.dot(sents_pad, s_wih_ref[g], preferred_element_type=f32) + s_b_ref[g]
            for g in range(3)]                                          # 3 x [P, H]
    swhh = [s_whh_ref[g] for g in range(3)]
    s_bhn = jnp.broadcast_to(s_bhn_ref[...], (num_docs, H))

    hd = jnp.zeros((num_docs, H), f32)
    for j in range(max_dl):
        lo = j * num_docs
        gh_r = jnp.dot(hd, swhh[0], preferred_element_type=f32)
        gh_z = jnp.dot(hd, swhh[1], preferred_element_type=f32)
        gh_n = jnp.dot(hd, swhh[2], preferred_element_type=f32)
        r = jax.nn.sigmoid(gi_s[0][lo:lo + num_docs] + gh_r)
        z = jax.nn.sigmoid(gi_s[1][lo:lo + num_docs] + gh_z)
        n = jnp.tanh(gi_s[2][lo:lo + num_docs] + r * (gh_n + s_bhn))
        h_new = (1.0 - z) * n + z * hd
        if j < min_dl:
            hd = h_new                                # every document still active
        else:
            a = act_ref[:, j:j + 1]                   # [num_docs, 1], static slice
            hd = a * h_new + (1.0 - a) * hd           # freeze finished documents

    blog = jnp.sum(hd, axis=0, keepdims=True) * (1.0 / float(num_docs))      # [1, H]

    # ---- scoring MLP + softmax over all sentences (fused, stays in VMEM) -----------
    a0 = jnp.dot(blog, w0t_ref[...], preferred_element_type=f32)             # [1, H]
    c = jnp.dot(sents_h, w1t_ref[...], preferred_element_type=f32)           # [N, H]
    t_act = jnp.tanh(a0 + c)                                                 # [N, H]
    s = jnp.dot(t_act, w2t_ref[...], preferred_element_type=f32)             # [N, 1]
    m = jnp.max(s, axis=0, keepdims=True)
    e = jnp.exp(s - m)
    # exact division (not approx reciprocal) to keep parity with torch.softmax
    out_ref[...] = e / jnp.sum(e, axis=0, keepdims=True)


# ----------------------------------------------------------------------------
# Forward wrapper: only tiny static prep in XLA (id column, static gather/mask
# matrices); everything else runs inside one pallas_call.
# ----------------------------------------------------------------------------
def rnn_gcn_forward(params, sent_ids, doc_lens, sim_matrix=None):
    # sim_matrix, graph_w_*, content, saliance, bias are unused by the reference
    # forward pass (kept only for signature parity).
    del sim_matrix

    N, T = sent_ids.shape
    V, D = params["embed"].shape
    H = params["w_whh"].shape[-1]

    doc_lens = tuple(int(d) for d in doc_lens)
    num_docs = len(doc_lens)
    max_dl = max(doc_lens)
    P = max_dl * num_docs
    assert sum(doc_lens) == N

    # time-major flat token-id column for the in-kernel one-hot embedding gather
    ids_col = sent_ids.T.reshape(T * N, 1).astype(jnp.int32)

    # Static (doc_lens are Python ints) document gather matrix + active mask for the
    # sublane-batched sentence GRU.
    sel_np = np.zeros((P, N), np.float32)
    act_np = np.zeros((num_docs, max_dl), np.float32)
    start = 0
    for d, dl in enumerate(doc_lens):
        for j in range(dl):
            sel_np[j * num_docs + d, start + j] = 1.0
            act_np[d, j] = 1.0
        start += dl
    sel = jnp.asarray(sel_np)
    act = jnp.asarray(act_np)

    kernel = functools.partial(_fused_kernel, doc_lens, H)

    def full(*shape):
        n = len(shape)
        return pl.BlockSpec(shape, lambda i: (0,) * n)

    # TODO(synk): for multi-blog batches add a leading 'parallel' grid axis so both
    # v7x TensorCores are used; a single blog per call keeps grid=(1,).
    probs = pl.pallas_call(
        kernel,
        out_shape=jax.ShapeDtypeStruct((N, 1), jnp.float32),
        grid_spec=pl.GridSpec(
            grid=(1,),
            in_specs=[
                full(T * N, 1),                                           # token ids
                full(V, D),                                               # embedding
                full(3, D, H), full(3, H, H), full(3, 1, H), full(1, H),  # word GRU
                full(3, H, H), full(3, H, H), full(3, 1, H), full(1, H),  # sent GRU
                full(P, N), full(num_docs, max_dl),                       # sel / act
                full(H, H), full(H, H), full(H, 1),                       # scoring MLP
            ],
            out_specs=pl.BlockSpec((N, 1), lambda i: (0, 0)),
        ),
        compiler_params=pltpu.CompilerParams(
            dimension_semantics=("arbitrary",)),
    )(ids_col, params["embed"],
      params["w_wih"], params["w_whh"], params["w_b"], params["w_bhn"],
      params["s_wih"], params["s_whh"], params["s_b"], params["s_bhn"],
      sel, act,
      params["w0t"], params["w1t"], params["w2t"])
    return probs[:, 0]


# ----------------------------------------------------------------------------
# Deterministic parameter construction (per-gate stacked weights, order r, z, n).
# ----------------------------------------------------------------------------
def make_params(key, V, D, H):
    ks = jax.random.split(key, 6)
    u = lambda k, shape, scale: jax.random.uniform(k, shape, jnp.float32, -scale, scale)

    embed = jax.random.normal(ks[0], (V, D), jnp.float32)
    embed = embed.at[0].set(0.0)                              # padding_idx=0

    sw = 1.0 / float(np.sqrt(H))

    def gru_params(k, din):
        kw, ku, kbi, kbh = jax.random.split(k, 4)
        wih = u(kw, (3, din, H), sw)                          # stacked gates 0=r,1=z,2=n
        whh = u(ku, (3, H, H), sw)
        bih = u(kbi, (3, 1, H), sw)
        bhh = u(kbh, (3, 1, H), sw)
        # pre-add b_ih + b_hh for the r and z gates; keep b_hh_n separate
        # (it sits inside r * (h @ W_hn + b_hn)).
        b = jnp.concatenate([bih[:2] + bhh[:2], bih[2:]], axis=0)   # [3, 1, H]
        bhn = bhh[2]                                                # [1, H]
        return wih, whh, b, bhn

    w_wih, w_whh, w_b, w_bhn = gru_params(ks[1], D)           # word GRU (D -> H)
    s_wih, s_whh, s_b, s_bhn = gru_params(ks[2], H)           # sent GRU (H -> H)

    params = {
        "embed": embed,
        # word_RNN
        "w_wih": w_wih, "w_whh": w_whh, "w_b": w_b, "w_bhn": w_bhn,
        # sent_RNN
        "s_wih": s_wih, "s_whh": s_whh, "s_b": s_b, "s_bhn": s_bhn,
        # pre_linear_0/1: Linear(H, H, bias=False)  (stored transposed: y = x @ W^T)
        "w0t": u(ks[3], (H, H), sw),
        "w1t": u(ks[4], (H, H), sw),
        # pre_linear_2: Linear(H, 1, bias=False)
        "w2t": u(ks[5], (H, 1), sw),
        # TODO(synk): graph_w_0/1/2, content, saliance, bias are declared in
        # __init__ but never used in forward(); omitted here.
    }
    return params


if __name__ == "__main__":
    key = jax.random.PRNGKey(0)
    V, D, H = 50, 32, 32          # embed_num, embed_dim, hidden_size
    T = 8                         # tokens per sentence
    doc_lens = (3, 2, 3)          # unequal lengths exercise the doc-freeze mask path
    N = sum(doc_lens)             # total sentences

    k_ids, k_params = jax.random.split(key)
    sent_ids = jax.random.randint(k_ids, (N, T), 0, V, dtype=jnp.int32)
    sim_matrix = jnp.eye(N, dtype=jnp.float32)   # unused in forward (parity only)

    params = make_params(k_params, V, D, H)

    fwd = jax.jit(functools.partial(rnn_gcn_forward, doc_lens=doc_lens))
    probs = fwd(params, sent_ids, sim_matrix=sim_matrix)
    probs = jax.block_until_ready(probs)

    assert probs.shape == (N,)
    assert bool(jnp.isfinite(probs).all())
    assert abs(float(probs.sum()) - 1.0) < 1e-4
    print("KERNEL_OK")
</pallas_src>

<mosaic_0001>
module attributes {stable_mosaic.version = 11 : i64} {
  func.func @_fused_kernel(%arg0: i32, %arg1: memref<64x1xi32, #tpu.memory_space<vmem>>, %arg2: memref<50x32xf32, #tpu.memory_space<vmem>>, %arg3: memref<3x32x32xf32, #tpu.memory_space<vmem>>, %arg4: memref<3x32x32xf32, #tpu.memory_space<vmem>>, %arg5: memref<3x1x32xf32, #tpu.memory_space<vmem>>, %arg6: memref<1x32xf32, #tpu.memory_space<vmem>>, %arg7: memref<3x32x32xf32, #tpu.memory_space<vmem>>, %arg8: memref<3x32x32xf32, #tpu.memory_space<vmem>>, %arg9: memref<3x1x32xf32, #tpu.memory_space<vmem>>, %arg10: memref<1x32xf32, #tpu.memory_space<vmem>>, %arg11: memref<9x8xf32, #tpu.memory_space<vmem>>, %arg12: memref<3x3xf32, #tpu.memory_space<vmem>>, %arg13: memref<32x32xf32, #tpu.memory_space<vmem>>, %arg14: memref<32x32xf32, #tpu.memory_space<vmem>>, %arg15: memref<32x1xf32, #tpu.memory_space<vmem>>, %arg16: memref<8x1xf32, #tpu.memory_space<vmem>>) attributes {dimension_semantics = [#tpu.dimension_semantics<arbitrary>], iteration_bounds = array<i64: 1>, scalar_prefetch = 0 : i64, scratch_operands = 0 : i64, tpu.core_type = #tpu.core_type<tc>, window_params = [{pipeline_mode = #tpu.pipeline_mode<synchronous>, transform_indices = @transform_0, window_bounds = array<i64: 64, 1>}, {pipeline_mode = #tpu.pipeline_mode<synchronous>, transform_indices = @transform_1, window_bounds = array<i64: 50, 32>}, {pipeline_mode = #tpu.pipeline_mode<synchronous>, transform_indices = @transform_2, window_bounds = array<i64: 3, 32, 32>}, {pipeline_mode = #tpu.pipeline_mode<synchronous>, transform_indices = @transform_3, window_bounds = array<i64: 3, 32, 32>}, {pipeline_mode = #tpu.pipeline_mode<synchronous>, transform_indices = @transform_4, window_bounds = array<i64: 3, 1, 32>}, {pipeline_mode = #tpu.pipeline_mode<synchronous>, transform_indices = @transform_5, window_bounds = array<i64: 1, 32>}, {pipeline_mode = #tpu.pipeline_mode<synchronous>, transform_indices = @transform_6, window_bounds = array<i64: 3, 32, 32>}, {pipeline_mode = #tpu.pipeline_mode<synchronous>, transform_indices = @transform_7, window_bounds = array<i64: 3, 32, 32>}, {pipeline_mode = #tpu.pipeline_mode<synchronous>, transform_indices = @transform_8, window_bounds = array<i64: 3, 1, 32>}, {pipeline_mode = #tpu.pipeline_mode<synchronous>, transform_indices = @transform_9, window_bounds = array<i64: 1, 32>}, {pipeline_mode = #tpu.pipeline_mode<synchronous>, transform_indices = @transform_10, window_bounds = array<i64: 9, 8>}, {pipeline_mode = #tpu.pipeline_mode<synchronous>, transform_indices = @transform_11, window_bounds = array<i64: 3, 3>}, {pipeline_mode = #tpu.pipeline_mode<synchronous>, transform_indices = @transform_12, window_bounds = array<i64: 32, 32>}, {pipeline_mode = #tpu.pipeline_mode<synchronous>, transform_indices = @transform_13, window_bounds = array<i64: 32, 32>}, {pipeline_mode = #tpu.pipeline_mode<synchronous>, transform_indices = @transform_14, window_bounds = array<i64: 32, 1>}, {pipeline_mode = #tpu.pipeline_mode<synchronous>, transform_indices = @transform_15, window_bounds = array<i64: 8, 1>}]} {
    %c0 = arith.constant 0 : index
    %c0_0 = arith.constant 0 : index
    %0 = vector.load %arg1[%c0, %c0_0] : memref<64x1xi32, #tpu.memory_space<vmem>>, vector<64x1xi32>
    %1 = tpu.iota {dimensions = array<i32: 1>} : vector<64x50xi32>
    %2 = vector.broadcast %0 : vector<64x1xi32> to vector<64x50xi32>
    %3 = arith.cmpi eq, %1, %2 : vector<64x50xi32>
    %cst = arith.constant 1.000000e+00 : f32
    %cst_1 = arith.constant 0.000000e+00 : f32
    %4 = vector.broadcast %cst : f32 to vector<64x50xf32>
    %5 = vector.broadcast %cst_1 : f32 to vector<64x50xf32>
    %6 = arith.select %3, %4, %5 : vector<64x50xi1>, vector<64x50xf32>
    %c0_2 = arith.constant 0 : index
    %c0_3 = arith.constant 0 : index
    %7 = vector.load %arg2[%c0_2, %c0_3] : memref<50x32xf32, #tpu.memory_space<vmem>>, vector<50x32xf32>
    %cst_4 = arith.constant dense<0.000000e+00> : vector<64x32xf32>
    %8 = tpu.matmul %6, %7, %cst_4 {dimension_numbers = #tpu.dot_dimension_numbers<[1], [0], [0], [1], [0, 0, 1, 1], [], []>} : vector<64x50xf32>, vector<50x32xf32>, vector<64x32xf32> -> vector<64x32xf32>
    %c0_5 = arith.constant 0 : index
    %c0_6 = arith.constant 0 : index
    %c0_7 = arith.constant 0 : index
    %9 = vector.load %arg3[%c0_5, %c0_6, %c0_7] : memref<3x32x32xf32, #tpu.memory_space<vmem>>, vector<1x32x32xf32>
    %10 = vector.shape_cast %9 : vector<1x32x32xf32> to vector<32x32xf32>
    %cst_8 = arith.constant dense<0.000000e+00> : vector<64x32xf32>
    %11 = tpu.matmul %8, %10, %cst_8 {dimension_numbers = #tpu.dot_dimension_numbers<[1], [0], [0], [1], [0, 0, 1, 1], [], []>} : vector<64x32xf32>, vector<32x32xf32>, vector<64x32xf32> -> vector<64x32xf32>
    %c0_9 = arith.constant 0 : index
    %c0_10 = arith.constant 0 : index
    %c0_11 = arith.constant 0 : index
    %12 = vector.load %arg5[%c0_9, %c0_10, %c0_11] : memref<3x1x32xf32, #tpu.memory_space<vmem>>, vector<1x1x32xf32>
    %13 = vector.shape_cast %12 : vector<1x1x32xf32> to vector<1x32xf32>
    %14 = vector.broadcast %13 : vector<1x32xf32> to vector<64x32xf32>
    %15 = arith.addf %11, %14 : vector<64x32xf32>
    %c1 = arith.constant 1 : index
    %c0_12 = arith.constant 0 : index
    %c0_13 = arith.constant 0 : index
    %16 = vector.load %arg3[%c1, %c0_12, %c0_13] : memref<3x32x32xf32, #tpu.memory_space<vmem>>, vector<1x32x32xf32>
    %17 = vector.shape_cast %16 : vector<1x32x32xf32> to vector<32x32xf32>
    %cst_14 = arith.constant dense<0.000000e+00> : vector<64x32xf32>
    %18 = tpu.matmul %8, %17, %cst_14 {dimension_numbers = #tpu.dot_dimension_numbers<[1], [0], [0], [1], [0, 0, 1, 1], [], []>} : vector<64x32xf32>, vector<32x32xf32>, vector<64x32xf32> -> vector<64x32xf32>
    %c1_15 = arith.constant 1 : index
    %c0_16 = arith.constant 0 : index
    %c0_17 = arith.constant 0 : index
    %19 = vector.load %arg5[%c1_15, %c0_16, %c0_17] : memref<3x1x32xf32, #tpu.memory_space<vmem>>, vector<1x1x32xf32>
    %20 = vector.shape_cast %19 : vector<1x1x32xf32> to vector<1x32xf32>
    %21 = vector.broadcast %20 : vector<1x32xf32> to vector<64x32xf32>
    %22 = arith.addf %18, %21 : vector<64x32xf32>
    %c2 = arith.constant 2 : index
    %c0_18 = arith.constant 0 : index
    %c0_19 = arith.constant 0 : index
    %23 = vector.load %arg3[%c2, %c0_18, %c0_19] : memref<3x32x32xf32, #tpu.memory_space<vmem>>, vector<1x32x32xf32>
    %24 = vector.shape_cast %23 : vector<1x32x32xf32> to vector<32x32xf32>
    %cst_20 = arith.constant dense<0.000000e+00> : vector<64x32xf32>
    %25 = tpu.matmul %8, %24, %cst_20 {dimension_numbers = #tpu.dot_dimension_numbers<[1], [0], [0], [1], [0, 0, 1, 1], [], []>} : vector<64x32xf32>, vector<32x32xf32>, vector<64x32xf32> -> vector<64x32xf32>
    %c2_21 = arith.constant 2 : index
    %c0_22 = arith.constant 0 : index
    %c0_23 = arith.constant 0 : index
    %26 = vector.load %arg5[%c2_21, %c0_22, %c0_23] : memref<3x1x32xf32, #tpu.memory_space<vmem>>, vector<1x1x32xf32>
    %27 = vector.shape_cast %26 : vector<1x1x32xf32> to vector<1x32xf32>
    %28 = vector.broadcast %27 : vector<1x32xf32> to vector<64x32xf32>
    %29 = arith.addf %25, %28 : vector<64x32xf32>
    %c0_24 = arith.constant 0 : index
    %c0_25 = arith.constant 0 : index
    %c0_26 = arith.constant 0 : index
    %30 = vector.load %arg4[%c0_24, %c0_25, %c0_26] : memref<3x32x32xf32, #tpu.memory_space<vmem>>, vector<1x32x32xf32>
    %31 = vector.shape_cast %30 : vector<1x32x32xf32> to vector<32x32xf32>
    %c1_27 = arith.constant 1 : index
    %c0_28 = arith.constant 0 : index
    %c0_29 = arith.constant 0 : index
    %32 = vector.load %arg4[%c1_27, %c0_28, %c0_29] : memref<3x32x32xf32, #tpu.memory_space<vmem>>, vector<1x32x32xf32>
    %33 = vector.shape_cast %32 : vector<1x32x32xf32> to vector<32x32xf32>
    %c2_30 = arith.constant 2 : index
    %c0_31 = arith.constant 0 : index
    %c0_32 = arith.constant 0 : index
    %34 = vector.load %arg4[%c2_30, %c0_31, %c0_32] : memref<3x32x32xf32, #tpu.memory_space<vmem>>, vector<1x32x32xf32>
    %35 = vector.shape_cast %34 : vector<1x32x32xf32> to vector<32x32xf32>
    %c0_33 = arith.constant 0 : index
    %c0_34 = arith.constant 0 : index
    %36 = vector.load %arg6[%c0_33, %c0_34] : memref<1x32xf32, #tpu.memory_space<vmem>>, vector<1x32xf32>
    %37 = vector.shape_cast %36 : vector<1x32xf32> to vector<1x32xf32>
    %38 = vector.broadcast %37 : vector<1x32xf32> to vector<8x32xf32>
    %cst_35 = arith.constant 0.000000e+00 : f32
    %39 = vector.broadcast %cst_35 : f32 to vector<8x32xf32>
    %cst_36 = arith.constant dense<0.000000e+00> : vector<8x32xf32>
    %40 = tpu.matmul %39, %31, %cst_36 {dimension_numbers = #tpu.dot_dimension_numbers<[1], [0], [0], [1], [0, 0, 1, 1], [], []>} : vector<8x32xf32>, vector<32x32xf32>, vector<8x32xf32> -> vector<8x32xf32>
    %cst_37 = arith.constant dense<0.000000e+00> : vector<8x32xf32>
    %41 = tpu.matmul %39, %33, %cst_37 {dimension_numbers = #tpu.dot_dimension_numbers<[1], [0], [0], [1], [0, 0, 1, 1], [], []>} : vector<8x32xf32>, vector<32x32xf32>, vector<8x32xf32> -> vector<8x32xf32>
    %cst_38 = arith.constant dense<0.000000e+00> : vector<8x32xf32>
    %42 = tpu.matmul %39, %35, %cst_38 {dimension_numbers = #tpu.dot_dimension_numbers<[1], [0], [0], [1], [0, 0, 1, 1], [], []>} : vector<8x32xf32>, vector<32x32xf32>, vector<8x32xf32> -> vector<8x32xf32>
    %43 = vector.extract_strided_slice %15 {offsets = [0, 0], sizes = [8, 32], strides = [1, 1]} : vector<64x32xf32> to vector<8x32xf32>
    %44 = arith.addf %43, %40 : vector<8x32xf32>
    %45 = arith.negf %44 : vector<8x32xf32>
    %46 = math.exp %45 : vector<8x32xf32>
    %cst_39 = arith.constant 1.000000e+00 : f32
    %47 = vector.broadcast %cst_39 : f32 to vector<8x32xf32>
    %48 = arith.addf %47, %46 : vector<8x32xf32>
    %49 = arith.divf %47, %48 : vector<8x32xf32>
    %50 = vector.extract_strided_slice %22 {offsets = [0, 0], sizes = [8, 32], strides = [1, 1]} : vector<64x32xf32> to vector<8x32xf32>
    %51 = arith.addf %50, %41 : vector<8x32xf32>
    %52 = arith.negf %51 : vector<8x32xf32>
    %53 = math.exp %52 : vector<8x32xf32>
    %cst_40 = arith.constant 1.000000e+00 : f32
    %54 = vector.broadcast %cst_40 : f32 to vector<8x32xf32>
    %55 = arith.addf %54, %53 : vector<8x32xf32>
    %56 = arith.divf %54, %55 : vector<8x32xf32>
    %57 = vector.extract_strided_slice %29 {offsets = [0, 0], sizes = [8, 32], strides = [1, 1]} : vector<64x32xf32> to vector<8x32xf32>
    %58 = arith.addf %42, %38 : vector<8x32xf32>
    %59 = arith.mulf %49, %58 : vector<8x32xf32>
    %60 = arith.addf %57, %59 : vector<8x32xf32>
    %61 = math.tanh %60 : vector<8x32xf32>
    %cst_41 = arith.constant 1.000000e+00 : f32
    %62 = vector.broadcast %cst_41 : f32 to vector<8x32xf32>
    %63 = arith.subf %62, %56 : vector<8x32xf32>
    %64 = arith.mulf %63, %61 : vector<8x32xf32>
    %65 = arith.mulf %56, %39 : vector<8x32xf32>
    %66 = arith.addf %64, %65 : vector<8x32xf32>
    %cst_42 = arith.constant dense<0.000000e+00> : vector<8x32xf32>
    %67 = tpu.matmul %66, %31, %cst_42 {dimension_numbers = #tpu.dot_dimension_numbers<[1], [0], [0], [1], [0, 0, 1, 1], [], []>} : vector<8x32xf32>, vector<32x32xf32>, vector<8x32xf32> -> vector<8x32xf32>
    %cst_43 = arith.constant dense<0.000000e+00> : vector<8x32xf32>
    %68 = tpu.matmul %66, %33, %cst_43 {dimension_numbers = #tpu.dot_dimension_numbers<[1], [0], [0], [1], [0, 0, 1, 1], [], []>} : vector<8x32xf32>, vector<32x32xf32>, vector<8x32xf32> -> vector<8x32xf32>
    %cst_44 = arith.constant dense<0.000000e+00> : vector<8x32xf32>
    %69 = tpu.matmul %66, %35, %cst_44 {dimension_numbers = #tpu.dot_dimension_numbers<[1], [0], [0], [1], [0, 0, 1, 1], [], []>} : vector<8x32xf32>, vector<32x32xf32>, vector<8x32xf32> -> vector<8x32xf32>
    %70 = vector.extract_strided_slice %15 {offsets = [8, 0], sizes = [8, 32], strides = [1, 1]} : vector<64x32xf32> to vector<8x32xf32>
    %71 = arith.addf %70, %67 : vector<8x32xf32>
    %72 = arith.negf %71 : vector<8x32xf32>
    %73 = math.exp %72 : vector<8x32xf32>
    %cst_45 = arith.constant 1.000000e+00 : f32
    %74 = vector.broadcast %cst_45 : f32 to vector<8x32xf32>
    %75 = arith.addf %74, %73 : vector<8x32xf32>
    %76 = arith.divf %74, %75 : vector<8x32xf32>
    %77 = vector.extract_strided_slice %22 {offsets = [8, 0], sizes = [8, 32], strides = [1, 1]} : vector<64x32xf32> to vector<8x32xf32>
    %78 = arith.addf %77, %68 : vector<8x32xf32>
    %79 = arith.negf %78 : vector<8x32xf32>
    %80 = math.exp %79 : vector<8x32xf32>
    %cst_46 = arith.constant 1.000000e+00 : f32
    %81 = vector.broadcast %cst_46 : f32 to vector<8x32xf32>
    %82 = arith.addf %81, %80 : vector<8x32xf32>
    %83 = arith.divf %81, %82 : vector<8x32xf32>
    %84 = vector.extract_strided_slice %29 {offsets = [8, 0], sizes = [8, 32], strides = [1, 1]} : vector<64x32xf32> to vector<8x32xf32>
    %85 = arith.addf %69, %38 : vector<8x32xf32>
    %86 = arith.mulf %76, %85 : vector<8x32xf32>
    %87 = arith.addf %84, %86 : vector<8x32xf32>
    %88 = math.tanh %87 : vector<8x32xf32>
    %cst_47 = arith.constant 1.000000e+00 : f32
    %89 = vector.broadcast %cst_47 : f32 to vector<8x32xf32>
    %90 = arith.subf %89, %83 : vector<8x32xf32>
    %91 = arith.mulf %90, %88 : vector<8x32xf32>
    %92 = arith.mulf %83, %66 : vector<8x32xf32>
    %93 = arith.addf %91, %92 : vector<8x32xf32>
    %cst_48 = arith.constant dense<0.000000e+00> : vector<8x32xf32>
    %94 = tpu.matmul %93, %31, %cst_48 {dimension_numbers = #tpu.dot_dimension_numbers<[1], [0], [0], [1], [0, 0, 1, 1], [], []>} : vector<8x32xf32>, vector<32x32xf32>, vector<8x32xf32> -> vector<8x32xf32>
    %cst_49 = arith.constant dense<0.000000e+00> : vector<8x32xf32>
    %95 = tpu.matmul %93, %33, %cst_49 {dimension_numbers = #tpu.dot_dimension_numbers<[1], [0], [0], [1], [0, 0, 1, 1], [], []>} : vector<8x32xf32>, vector<32x32xf32>, vector<8x32xf32> -> vector<8x32xf32>
    %cst_50 = arith.constant dense<0.000000e+00> : vector<8x32xf32>
    %96 = tpu.matmul %93, %35, %cst_50 {dimension_numbers = #tpu.dot_dimension_numbers<[1], [0], [0], [1], [0, 0, 1, 1], [], []>} : vector<8x32xf32>, vector<32x32xf32>, vector<8x32xf32> -> vector<8x32xf32>
    %97 = vector.extract_strided_slice %15 {offsets = [16, 0], sizes = [8, 32], strides = [1, 1]} : vector<64x32xf32> to vector<8x32xf32>
    %98 = arith.addf %97, %94 : vector<8x32xf32>
    %99 = arith.negf %98 : vector<8x32xf32>
    %100 = math.exp %99 : vector<8x32xf32>
    %cst_51 = arith.constant 1.000000e+00 : f32
    %101 = vector.broadcast %cst_51 : f32 to vector<8x32xf32>
    %102 = arith.addf %101, %100 : vector<8x32xf32>
    %103 = arith.divf %101, %102 : vector<8x32xf32>
    %104 = vector.extract_strided_slice %22 {offsets = [16, 0], sizes = [8, 32], strides = [1, 1]} : vector<64x32xf32> to vector<8x32xf32>
    %105 = arith.addf %104, %95 : vector<8x32xf32>
    %106 = arith.negf %105 : vector<8x32xf32>
    %107 = math.exp %106 : vector<8x32xf32>
    %cst_52 = arith.constant 1.000000e+00 : f32
    %108 = vector.broadcast %cst_52 : f32 to vector<8x32xf32>
    %109 = arith.addf %108, %107 : vector<8x32xf32>
    %110 = arith.divf %108, %109 : vector<8x32xf32>
    %111 = vector.extract_strided_slice %29 {offsets = [16, 0], sizes = [8, 32], strides = [1, 1]} : vector<64x32xf32> to vector<8x32xf32>
    %112 = arith.addf %96, %38 : vector<8x32xf32>
    %113 = arith.mulf %103, %112 : vector<8x32xf32>
    %114 = arith.addf %111, %113 : vector<8x32xf32>
    %115 = math.tanh %114 : vector<8x32xf32>
    %cst_53 = arith.constant 1.000000e+00 : f32
    %116 = vector.broadcast %cst_53 : f32 to vector<8x32xf32>
    %117 = arith.subf %116, %110 : vector<8x32xf32>
    %118 = arith.mulf %117, %115 : vector<8x32xf32>
    %119 = arith.mulf %110, %93 : vector<8x32xf32>
    %120 = arith.addf %118, %119 : vector<8x32xf32>
    %cst_54 = arith.constant dense<0.000000e+00> : vector<8x32xf32>
    %121 = tpu.matmul %120, %31, %cst_54 {dimension_numbers = #tpu.dot_dimension_numbers<[1], [0], [0], [1], [0, 0, 1, 1], [], []>} : vector<8x32xf32>, vector<32x32xf32>, vector<8x32xf32> -> vector<8x32xf32>
    %cst_55 = arith.constant dense<0.000000e+00> : vector<8x32xf32>
    %122 = tpu.matmul %120, %33, %cst_55 {dimension_numbers = #tpu.dot_dimension_numbers<[1], [0], [0], [1], [0, 0, 1, 1], [], []>} : vector<8x32xf32>, vector<32x32xf32>, vector<8x32xf32> -> vector<8x32xf32>
    %cst_56 = arith.constant dense<0.000000e+00> : vector<8x32xf32>
    %123 = tpu.matmul %120, %35, %cst_56 {dimension_numbers = #tpu.dot_dimension_numbers<[1], [0], [0], [1], [0, 0, 1, 1], [], []>} : vector<8x32xf32>, vector<32x32xf32>, vector<8x32xf32> -> vector<8x32xf32>
    %124 = vector.extract_strided_slice %15 {offsets = [24, 0], sizes = [8, 32], strides = [1, 1]} : vector<64x32xf32> to vector<8x32xf32>
    %125 = arith.addf %124, %121 : vector<8x32xf32>
    %126 = arith.negf %125 : vector<8x32xf32>
    %127 = math.exp %126 : vector<8x32xf32>
    %cst_57 = arith.constant 1.000000e+00 : f32
    %128 = vector.broadcast %cst_57 : f32 to vector<8x32xf32>
    %129 = arith.addf %128, %127 : vector<8x32xf32>
    %130 = arith.divf %128, %129 : vector<8x32xf32>
    %131 = vector.extract_strided_slice %22 {offsets = [24, 0], sizes = [8, 32], strides = [1, 1]} : vector<64x32xf32> to vector<8x32xf32>
    %132 = arith.addf %131, %122 : vector<8x32xf32>
    %133 = arith.negf %132 : vector<8x32xf32>
    %134 = math.exp %133 : vector<8x32xf32>
    %cst_58 = arith.constant 1.000000e+00 : f32
    %135 = vector.broadcast %cst_58 : f32 to vector<8x32xf32>
    %136 = arith.addf %135, %134 : vector<8x32xf32>
    %137 = arith.divf %135, %136 : vector<8x32xf32>
    %138 = vector.extract_strided_slice %29 {offsets = [24, 0], sizes = [8, 32], strides = [1, 1]} : vector<64x32xf32> to vector<8x32xf32>
    %139 = arith.addf %123, %38 : vector<8x32xf32>
    %140 = arith.mulf %130, %139 : vector<8x32xf32>
    %141 = arith.addf %138, %140 : vector<8x32xf32>
    %142 = math.tanh %141 : vector<8x32xf32>
    %cst_59 = arith.constant 1.000000e+00 : f32
    %143 = vector.broadcast %cst_59 : f32 to vector<8x32xf32>
    %144 = arith.subf %143, %137 : vector<8x32xf32>
    %145 = arith.mulf %144, %142 : vector<8x32xf32>
    %146 = arith.mulf %137, %120 : vector<8x32xf32>
    %147 = arith.addf %145, %146 : vector<8x32xf32>
    %cst_60 = arith.constant dense<0.000000e+00> : vector<8x32xf32>
    %148 = tpu.matmul %147, %31, %cst_60 {dimension_numbers = #tpu.dot_dimension_numbers<[1], [0], [0], [1], [0, 0, 1, 1], [], []>} : vector<8x32xf32>, vector<32x32xf32>, vector<8x32xf32> -> vector<8x32xf32>
    %cst_61 = arith.constant dense<0.000000e+00> : vector<8x32xf32>
    %149 = tpu.matmul %147, %33, %cst_61 {dimension_numbers = #tpu.dot_dimension_numbers<[1], [0], [0], [1], [0, 0, 1, 1], [], []>} : vector<8x32xf32>, vector<32x32xf32>, vector<8x32xf32> -> vector<8x32xf32>
    %cst_62 = arith.constant dense<0.000000e+00> : vector<8x32xf32>
    %150 = tpu.matmul %147, %35, %cst_62 {dimension_numbers = #tpu.dot_dimension_numbers<[1], [0], [0], [1], [0, 0, 1, 1], [], []>} : vector<8x32xf32>, vector<32x32xf32>, vector<8x32xf32> -> vector<8x32xf32>
    %151 = vector.extract_strided_slice %15 {offsets = [32, 0], sizes = [8, 32], strides = [1, 1]} : vector<64x32xf32> to vector<8x32xf32>
    %152 = arith.addf %151, %148 : vector<8x32xf32>
    %153 = arith.negf %152 : vector<8x32xf32>
    %154 = math.exp %153 : vector<8x32xf32>
    %cst_63 = arith.constant 1.000000e+00 : f32
    %155 = vector.broadcast %cst_63 : f32 to vector<8x32xf32>
    %156 = arith.addf %155, %154 : vector<8x32xf32>
    %157 = arith.divf %155, %156 : vector<8x32xf32>
    %158 = vector.extract_strided_slice %22 {offsets = [32, 0], sizes = [8, 32], strides = [1, 1]} : vector<64x32xf32> to vector<8x32xf32>
    %159 = arith.addf %158, %149 : vector<8x32xf32>
    %160 = arith.negf %159 : vector<8x32xf32>
    %161 = math.exp %160 : vector<8x32xf32>
    %cst_64 = arith.constant 1.000000e+00 : f32
    %162 = vector.broadcast %cst_64 : f32 to vector<8x32xf32>
    %163 = arith.addf %162, %161 : vector<8x32xf32>
    %164 = arith.divf %162, %163 : vector<8x32xf32>
    %165 = vector.extract_strided_slice %29 {offsets = [32, 0], sizes = [8, 32], strides = [1, 1]} : vector<64x32xf32> to vector<8x32xf32>
    %166 = arith.addf %150, %38 : vector<8x32xf32>
    %167 = arith.mulf %157, %166 : vector<8x32xf32>
    %168 = arith.addf %165, %167 : vector<8x32xf32>
    %169 = math.tanh %168 : vector<8x32xf32>
    %cst_65 = arith.constant 1.000000e+00 : f32
    %170 = vector.broadcast %cst_65 : f32 to vector<8x32xf32>
    %171 = arith.subf %170, %164 : vector<8x32xf32>
    %172 = arith.mulf %171, %169 : vector<8x32xf32>
    %173 = arith.mulf %164, %147 : vector<8x32xf32>
    %174 = arith.addf %172, %173 : vector<8x32xf32>
    %cst_66 = arith.constant dense<0.000000e+00> : vector<8x32xf32>
    %175 = tpu.matmul %174, %31, %cst_66 {dimension_numbers = #tpu.dot_dimension_numbers<[1], [0], [0], [1], [0, 0, 1, 1], [], []>} : vector<8x32xf32>, vector<32x32xf32>, vector<8x32xf32> -> vector<8x32xf32>
    %cst_67 = arith.constant dense<0.000000e+00> : vector<8x32xf32>
    %176 = tpu.matmul %174, %33, %cst_67 {dimension_numbers = #tpu.dot_dimension_numbers<[1], [0], [0], [1], [0, 0, 1, 1], [], []>} : vector<8x32xf32>, vector<32x32xf32>, vector<8x32xf32> -> vector<8x32xf32>
    %cst_68 = arith.constant dense<0.000000e+00> : vector<8x32xf32>
    %177 = tpu.matmul %174, %35, %cst_68 {dimension_numbers = #tpu.dot_dimension_numbers<[1], [0], [0], [1], [0, 0, 1, 1], [], []>} : vector<8x32xf32>, vector<32x32xf32>, vector<8x32xf32> -> vector<8x32xf32>
    %178 = vector.extract_strided_slice %15 {offsets = [40, 0], sizes = [8, 32], strides = [1, 1]} : vector<64x32xf32> to vector<8x32xf32>
    %179 = arith.addf %178, %175 : vector<8x32xf32>
    %180 = arith.negf %179 : vector<8x32xf32>
    %181 = math.exp %180 : vector<8x32xf32>
    %cst_69 = arith.constant 1.000000e+00 : f32
    %182 = vector.broadcast %cst_69 : f32 to vector<8x32xf32>
    %183 = arith.addf %182, %181 : vector<8x32xf32>
    %184 = arith.divf %182, %183 : vector<8x32xf32>
    %185 = vector.extract_strided_slice %22 {offsets = [40, 0], sizes = [8, 32], strides = [1, 1]} : vector<64x32xf32> to vector<8x32xf32>
    %186 = arith.addf %185, %176 : vector<8x32xf32>
    %187 = arith.negf %186 : vector<8x32xf32>
    %188 = math.exp %187 : vector<8x32xf32>
    %cst_70 = arith.constant 1.000000e+00 : f32
    %189 = vector.broadcast %cst_70 : f32 to vector<8x32xf32>
    %190 = arith.addf %189, %188 : vector<8x32xf32>
    %191 = arith.divf %189, %190 : vector<8x32xf32>
    %192 = vector.extract_strided_slice %29 {offsets = [40, 0], sizes = [8, 32], strides = [1, 1]} : vector<64x32xf32> to vector<8x32xf32>
    %193 = arith.addf %177, %38 : vector<8x32xf32>
    %194 = arith.mulf %184, %193 : vector<8x32xf32>
    %195 = arith.addf %192, %194 : vector<8x32xf32>
    %196 = math.tanh %195 : vector<8x32xf32>
    %cst_71 = arith.constant 1.000000e+00 : f32
    %197 = vector.broadcast %cst_71 : f32 to vector<8x32xf32>
    %198 = arith.subf %197, %191 : vector<8x32xf32>
    %199 = arith.mulf %198, %196 : vector<8x32xf32>
    %200 = arith.mulf %191, %174 : vector<8x32xf32>
    %201 = arith.addf %199, %200 : vector<8x32xf32>
    %cst_72 = arith.constant dense<0.000000e+00> : vector<8x32xf32>
    %202 = tpu.matmul %201, %31, %cst_72 {dimension_numbers = #tpu.dot_dimension_numbers<[1], [0], [0], [1], [0, 0, 1, 1], [], []>} : vector<8x32xf32>, vector<32x32xf32>, vector<8x32xf32> -> vector<8x32xf32>
    %cst_73 = arith.constant dense<0.000000e+00> : vector<8x32xf32>
    %203 = tpu.matmul %201, %33, %cst_73 {dimension_numbers = #tpu.dot_dimension_numbers<[1], [0], [0], [1], [0, 0, 1, 1], [], []>} : vector<8x32xf32>, vector<32x32xf32>, vector<8x32xf32> -> vector<8x32xf32>
    %cst_74 = arith.constant dense<0.000000e+00> : vector<8x32xf32>
    %204 = tpu.matmul %201, %35, %cst_74 {dimension_numbers = #tpu.dot_dimension_numbers<[1], [0], [0], [1], [0, 0, 1, 1], [], []>} : vector<8x32xf32>, vector<32x32xf32>, vector<8x32xf32> -> vector<8x32xf32>
    %205 = vector.extract_strided_slice %15 {offsets = [48, 0], sizes = [8, 32], strides = [1, 1]} : vector<64x32xf32> to vector<8x32xf32>
    %206 = arith.addf %205, %202 : vector<8x32xf32>
    %207 = arith.negf %206 : vector<8x32xf32>
    %208 = math.exp %207 : vector<8x32xf32>
    %cst_75 = arith.constant 1.000000e+00 : f32
    %209 = vector.broadcast %cst_75 : f32 to vector<8x32xf32>
    %210 = arith.addf %209, %208 : vector<8x32xf32>
    %211 = arith.divf %209, %210 : vector<8x32xf32>
    %212 = vector.extract_strided_slice %22 {offsets = [48, 0], sizes = [8, 32], strides = [1, 1]} : vector<64x32xf32> to vector<8x32xf32>
    %213 = arith.addf %212, %203 : vector<8x32xf32>
    %214 = arith.negf %213 : vector<8x32xf32>
    %215 = math.exp %214 : vector<8x32xf32>
    %cst_76 = arith.constant 1.000000e+00 : f32
    %216 = vector.broadcast %cst_76 : f32 to vector<8x32xf32>
    %217 = arith.addf %216, %215 : vector<8x32xf32>
    %218 = arith.divf %216, %217 : vector<8x32xf32>
    %219 = vector.extract_strided_slice %29 {offsets = [48, 0], sizes = [8, 32], strides = [1, 1]} : vector<64x32xf32> to vector<8x32xf32>
    %220 = arith.addf %204, %38 : vector<8x32xf32>
    %221 = arith.mulf %211, %220 : vector<8x32xf32>
    %222 = arith.addf %219, %221 : vector<8x32xf32>
    %223 = math.tanh %222 : vector<8x32xf32>
    %cst_77 = arith.constant 1.000000e+00 : f32
    %224 = vector.broadcast %cst_77 : f32 to vector<8x32xf32>
    %225 = arith.subf %224, %218 : vector<8x32xf32>
    %226 = arith.mulf %225, %223 : vector<8x32xf32>
    %227 = arith.mulf %218, %201 : vector<8x32xf32>
    %228 = arith.addf %226, %227 : vector<8x32xf32>
    %cst_78 = arith.constant dense<0.000000e+00> : vector<8x32xf32>
    %229 = tpu.matmul %228, %31, %cst_78 {dimension_numbers = #tpu.dot_dimension_numbers<[1], [0], [0], [1], [0, 0, 1, 1], [], []>} : vector<8x32xf32>, vector<32x32xf32>, vector<8x32xf32> -> vector<8x32xf32>
    %cst_79 = arith.constant dense<0.000000e+00> : vector<8x32xf32>
    %230 = tpu.matmul %228, %33, %cst_79 {dimension_numbers = #tpu.dot_dimension_numbers<[1], [0], [0], [1], [0, 0, 1, 1], [], []>} : vector<8x32xf32>, vector<32x32xf32>, vector<8x32xf32> -> vector<8x32xf32>
    %cst_80 = arith.constant dense<0.000000e+00> : vector<8x32xf32>
    %231 = tpu.matmul %228, %35, %cst_80 {dimension_numbers = #tpu.dot_dimension_numbers<[1], [0], [0], [1], [0, 0, 1, 1], [], []>} : vector<8x32xf32>, vector<32x32xf32>, vector<8x32xf32> -> vector<8x32xf32>
    %232 = vector.extract_strided_slice %15 {offsets = [56, 0], sizes = [8, 32], strides = [1, 1]} : vector<64x32xf32> to vector<8x32xf32>
    %233 = arith.addf %232, %229 : vector<8x32xf32>
    %234 = arith.negf %233 : vector<8x32xf32>
    %235 = math.exp %234 : vector<8x32xf32>
    %cst_81 = arith.constant 1.000000e+00 : f32
    %236 = vector.broadcast %cst_81 : f32 to vector<8x32xf32>
    %237 = arith.addf %236, %235 : vector<8x32xf32>
    %238 = arith.divf %236, %237 : vector<8x32xf32>
    %239 = vector.extract_strided_slice %22 {offsets = [56, 0], sizes = [8, 32], strides = [1, 1]} : vector<64x32xf32> to vector<8x32xf32>
    %240 = arith.addf %239, %230 : vector<8x32xf32>
    %241 = arith.negf %240 : vector<8x32xf32>
    %242 = math.exp %241 : vector<8x32xf32>
    %cst_82 = arith.constant 1.000000e+00 : f32
    %243 = vector.broadcast %cst_82 : f32 to vector<8x32xf32>
    %244 = arith.addf %243, %242 : vector<8x32xf32>
    %245 = arith.divf %243, %244 : vector<8x32xf32>
    %246 = vector.extract_strided_slice %29 {offsets = [56, 0], sizes = [8, 32], strides = [1, 1]} : vector<64x32xf32> to vector<8x32xf32>
    %247 = arith.addf %231, %38 : vector<8x32xf32>
    %248 = arith.mulf %238, %247 : vector<8x32xf32>
    %249 = arith.addf %246, %248 : vector<8x32xf32>
    %250 = math.tanh %249 : vector<8x32xf32>
    %cst_83 = arith.constant 1.000000e+00 : f32
    %251 = vector.broadcast %cst_83 : f32 to vector<8x32xf32>
    %252 = arith.subf %251, %245 : vector<8x32xf32>
    %253 = arith.mulf %252, %250 : vector<8x32xf32>
    %254 = arith.mulf %245, %228 : vector<8x32xf32>
    %255 = arith.addf %253, %254 : vector<8x32xf32>
    %c0_84 = arith.constant 0 : index
    %c0_85 = arith.constant 0 : index
    %256 = vector.load %arg11[%c0_84, %c0_85] : memref<9x8xf32, #tpu.memory_space<vmem>>, vector<9x8xf32>
    %cst_86 = arith.constant dense<0.000000e+00> : vector<9x32xf32>
    %257 = tpu.matmul %256, %255, %cst_86 {dimension_numbers = #tpu.dot_dimension_numbers<[1], [0], [0], [1], [0, 0, 1, 1], [], []>} : vector<9x8xf32>, vector<8x32xf32>, vector<9x32xf32> -> vector<9x32xf32>
    %c0_87 = arith.constant 0 : index
    %c0_88 = arith.constant 0 : index
    %c0_89 = arith.constant 0 : index
    %258 = vector.load %arg7[%c0_87, %c0_88, %c0_89] : memref<3x32x32xf32, #tpu.memory_space<vmem>>, vector<1x32x32xf32>
    %259 = vector.shape_cast %258 : vector<1x32x32xf32> to vector<32x32xf32>
    %cst_90 = arith.constant dense<0.000000e+00> : vector<9x32xf32>
    %260 = tpu.matmul %257, %259, %cst_90 {dimension_numbers = #tpu.dot_dimension_numbers<[1], [0], [0], [1], [0, 0, 1, 1], [], []>} : vector<9x32xf32>, vector<32x32xf32>, vector<9x32xf32> -> vector<9x32xf32>
    %c0_91 = arith.constant 0 : index
    %c0_92 = arith.constant 0 : index
    %c0_93 = arith.constant 0 : index
    %261 = vector.load %arg9[%c0_91, %c0_92, %c0_93] : memref<3x1x32xf32, #tpu.memory_space<vmem>>, vector<1x1x32xf32>
    %262 = vector.shape_cast %261 : vector<1x1x32xf32> to vector<1x32xf32>
    %263 = vector.broadcast %262 : vector<1x32xf32> to vector<9x32xf32>
    %264 = arith.addf %260, %263 : vector<9x32xf32>
    %c1_94 = arith.constant 1 : index
    %c0_95 = arith.constant 0 : index
    %c0_96 = arith.constant 0 : index
    %265 = vector.load %arg7[%c1_94, %c0_95, %c0_96] : memref<3x32x32xf32, #tpu.memory_space<vmem>>, vector<1x32x32xf32>
    %266 = vector.shape_cast %265 : vector<1x32x32xf32> to vector<32x32xf32>
    %cst_97 = arith.constant dense<0.000000e+00> : vector<9x32xf32>
    %267 = tpu.matmul %257, %266, %cst_97 {dimension_numbers = #tpu.dot_dimension_numbers<[1], [0], [0], [1], [0, 0, 1, 1], [], []>} : vector<9x32xf32>, vector<32x32xf32>, vector<9x32xf32> -> vector<9x32xf32>
    %c1_98 = arith.constant 1 : index
    %c0_99 = arith.constant 0 : index
    %c0_100 = arith.constant 0 : index
    %268 = vector.load %arg9[%c1_98, %c0_99, %c0_100] : memref<3x1x32xf32, #tpu.memory_space<vmem>>, vector<1x1x32xf32>
    %269 = vector.shape_cast %268 : vector<1x1x32xf32> to vector<1x32xf32>
    %270 = vector.broadcast %269 : vector<1x32xf32> to vector<9x32xf32>
    %271 = arith.addf %267, %270 : vector<9x32xf32>
    %c2_101 = arith.constant 2 : index
    %c0_102 = arith.constant 0 : index
    %c0_103 = arith.constant 0 : index
    %272 = vector.load %arg7[%c2_101, %c0_102, %c0_103] : memref<3x32x32xf32, #tpu.memory_space<vmem>>, vector<1x32x32xf32>
    %273 = vector.shape_cast %272 : vector<1x32x32xf32> to vector<32x32xf32>
    %cst_104 = arith.constant dense<0.000000e+00> : vector<9x32xf32>
    %274 = tpu.matmul %257, %273, %cst_104 {dimension_numbers = #tpu.dot_dimension_numbers<[1], [0], [0], [1], [0, 0, 1, 1], [], []>} : vector<9x32xf32>, vector<32x32xf32>, vector<9x32xf32> -> vector<9x32xf32>
    %c2_105 = arith.constant 2 : index
    %c0_106 = arith.constant 0 : index
    %c0_107 = arith.constant 0 : index
    %275 = vector.load %arg9[%c2_105, %c0_106, %c0_107] : memref<3x1x32xf32, #tpu.memory_space<vmem>>, vector<1x1x32xf32>
    %276 = vector.shape_cast %275 : vector<1x1x32xf32> to vector<1x32xf32>
    %277 = vector.broadcast %276 : vector<1x32xf32> to vector<9x32xf32>
    %278 = arith.addf %274, %277 : vector<9x32xf32>
    %c0_108 = arith.constant 0 : index
    %c0_109 = arith.constant 0 : index
    %c0_110 = arith.constant 0 : index
    %279 = vector.load %arg8[%c0_108, %c0_109, %c0_110] : memref<3x32x32xf32, #tpu.memory_space<vmem>>, vector<1x32x32xf32>
    %280 = vector.shape_cast %279 : vector<1x32x32xf32> to vector<32x32xf32>
    %c1_111 = arith.constant 1 : index
    %c0_112 = arith.constant 0 : index
    %c0_113 = arith.constant 0 : index
    %281 = vector.load %arg8[%c1_111, %c0_112, %c0_113] : memref<3x32x32xf32, #tpu.memory_space<vmem>>, vector<1x32x32xf32>
    %282 = vector.shape_cast %281 : vector<1x32x32xf32> to vector<32x32xf32>
    %c2_114 = arith.constant 2 : index
    %c0_115 = arith.constant 0 : index
    %c0_116 = arith.constant 0 : index
    %283 = vector.load %arg8[%c2_114, %c0_115, %c0_116] : memref<3x32x32xf32, #tpu.memory_space<vmem>>, vector<1x32x32xf32>
    %284 = vector.shape_cast %283 : vector<1x32x32xf32> to vector<32x32xf32>
    %c0_117 = arith.constant 0 : index
    %c0_118 = arith.constant 0 : index
    %285 = vector.load %arg10[%c0_117, %c0_118] : memref<1x32xf32, #tpu.memory_space<vmem>>, vector<1x32xf32>
    %286 = vector.shape_cast %285 : vector<1x32xf32> to vector<1x32xf32>
    %287 = vector.broadcast %286 : vector<1x32xf32> to vector<3x32xf32>
    %cst_119 = arith.constant 0.000000e+00 : f32
    %288 = vector.broadcast %cst_119 : f32 to vector<3x32xf32>
    %cst_120 = arith.constant dense<0.000000e+00> : vector<3x32xf32>
    %289 = tpu.matmul %288, %280, %cst_120 {dimension_numbers = #tpu.dot_dimension_numbers<[1], [0], [0], [1], [0, 0, 1, 1], [], []>} : vector<3x32xf32>, vector<32x32xf32>, vector<3x32xf32> -> vector<3x32xf32>
    %cst_121 = arith.constant dense<0.000000e+00> : vector<3x32xf32>
    %290 = tpu.matmul %288, %282, %cst_121 {dimension_numbers = #tpu.dot_dimension_numbers<[1], [0], [0], [1], [0, 0, 1, 1], [], []>} : vector<3x32xf32>, vector<32x32xf32>, vector<3x32xf32> -> vector<3x32xf32>
    %cst_122 = arith.constant dense<0.000000e+00> : vector<3x32xf32>
    %291 = tpu.matmul %288, %284, %cst_122 {dimension_numbers = #tpu.dot_dimension_numbers<[1], [0], [0], [1], [0, 0, 1, 1], [], []>} : vector<3x32xf32>, vector<32x32xf32>, vector<3x32xf32> -> vector<3x32xf32>
    %292 = vector.extract_strided_slice %264 {offsets = [0, 0], sizes = [3, 32], strides = [1, 1]} : vector<9x32xf32> to vector<3x32xf32>
    %293 = arith.addf %292, %289 : vector<3x32xf32>
    %294 = arith.negf %293 : vector<3x32xf32>
    %295 = math.exp %294 : vector<3x32xf32>
    %cst_123 = arith.constant 1.000000e+00 : f32
    %296 = vector.broadcast %cst_123 : f32 to vector<3x32xf32>
    %297 = arith.addf %296, %295 : vector<3x32xf32>
    %298 = arith.divf %296, %297 : vector<3x32xf32>
    %299 = vector.extract_strided_slice %271 {offsets = [0, 0], sizes = [3, 32], strides = [1, 1]} : vector<9x32xf32> to vector<3x32xf32>
    %300 = arith.addf %299, %290 : vector<3x32xf32>
    %301 = arith.negf %300 : vector<3x32xf32>
    %302 = math.exp %301 : vector<3x32xf32>
    %cst_124 = arith.constant 1.000000e+00 : f32
    %303 = vector.broadcast %cst_124 : f32 to vector<3x32xf32>
    %304 = arith.addf %303, %302 : vector<3x32xf32>
    %305 = arith.divf %303, %304 : vector<3x32xf32>
    %306 = vector.extract_strided_slice %278 {offsets = [0, 0], sizes = [3, 32], strides = [1, 1]} : vector<9x32xf32> to vector<3x32xf32>
    %307 = arith.addf %291, %287 : vector<3x32xf32>
    %308 = arith.mulf %298, %307 : vector<3x32xf32>
    %309 = arith.addf %306, %308 : vector<3x32xf32>
    %310 = math.tanh %309 : vector<3x32xf32>
    %cst_125 = arith.constant 1.000000e+00 : f32
    %311 = vector.broadcast %cst_125 : f32 to vector<3x32xf32>
    %312 = arith.subf %311, %305 : vector<3x32xf32>
    %313 = arith.mulf %312, %310 : vector<3x32xf32>
    %314 = arith.mulf %305, %288 : vector<3x32xf32>
    %315 = arith.addf %313, %314 : vector<3x32xf32>
    %cst_126 = arith.constant dense<0.000000e+00> : vector<3x32xf32>
    %316 = tpu.matmul %315, %280, %cst_126 {dimension_numbers = #tpu.dot_dimension_numbers<[1], [0], [0], [1], [0, 0, 1, 1], [], []>} : vector<3x32xf32>, vector<32x32xf32>, vector<3x32xf32> -> vector<3x32xf32>
    %cst_127 = arith.constant dense<0.000000e+00> : vector<3x32xf32>
    %317 = tpu.matmul %315, %282, %cst_127 {dimension_numbers = #tpu.dot_dimension_numbers<[1], [0], [0], [1], [0, 0, 1, 1], [], []>} : vector<3x32xf32>, vector<32x32xf32>, vector<3x32xf32> -> vector<3x32xf32>
    %cst_128 = arith.constant dense<0.000000e+00> : vector<3x32xf32>
    %318 = tpu.matmul %315, %284, %cst_128 {dimension_numbers = #tpu.dot_dimension_numbers<[1], [0], [0], [1], [0, 0, 1, 1], [], []>} : vector<3x32xf32>, vector<32x32xf32>, vector<3x32xf32> -> vector<3x32xf32>
    %319 = vector.extract_strided_slice %264 {offsets = [3, 0], sizes = [3, 32], strides = [1, 1]} : vector<9x32xf32> to vector<3x32xf32>
    %320 = arith.addf %319, %316 : vector<3x32xf32>
    %321 = arith.negf %320 : vector<3x32xf32>
    %322 = math.exp %321 : vector<3x32xf32>
    %cst_129 = arith.constant 1.000000e+00 : f32
    %323 = vector.broadcast %cst_129 : f32 to vector<3x32xf32>
    %324 = arith.addf %323, %322 : vector<3x32xf32>
    %325 = arith.divf %323, %324 : vector<3x32xf32>
    %326 = vector.extract_strided_slice %271 {offsets = [3, 0], sizes = [3, 32], strides = [1, 1]} : vector<9x32xf32> to vector<3x32xf32>
    %327 = arith.addf %326, %317 : vector<3x32xf32>
    %328 = arith.negf %327 : vector<3x32xf32>
    %329 = math.exp %328 : vector<3x32xf32>
    %cst_130 = arith.constant 1.000000e+00 : f32
    %330 = vector.broadcast %cst_130 : f32 to vector<3x32xf32>
    %331 = arith.addf %330, %329 : vector<3x32xf32>
    %332 = arith.divf %330, %331 : vector<3x32xf32>
    %333 = vector.extract_strided_slice %278 {offsets = [3, 0], sizes = [3, 32], strides = [1, 1]} : vector<9x32xf32> to vector<3x32xf32>
    %334 = arith.addf %318, %287 : vector<3x32xf32>
    %335 = arith.mulf %325, %334 : vector<3x32xf32>
    %336 = arith.addf %333, %335 : vector<3x32xf32>
    %337 = math.tanh %336 : vector<3x32xf32>
    %cst_131 = arith.constant 1.000000e+00 : f32
    %338 = vector.broadcast %cst_131 : f32 to vector<3x32xf32>
    %339 = arith.subf %338, %332 : vector<3x32xf32>
    %340 = arith.mulf %339, %337 : vector<3x32xf32>
    %341 = arith.mulf %332, %315 : vector<3x32xf32>
    %342 = arith.addf %340, %341 : vector<3x32xf32>
    %cst_132 = arith.constant dense<0.000000e+00> : vector<3x32xf32>
    %343 = tpu.matmul %342, %280, %cst_132 {dimension_numbers = #tpu.dot_dimension_numbers<[1], [0], [0], [1], [0, 0, 1, 1], [], []>} : vector<3x32xf32>, vector<32x32xf32>, vector<3x32xf32> -> vector<3x32xf32>
    %cst_133 = arith.constant dense<0.000000e+00> : vector<3x32xf32>
    %344 = tpu.matmul %342, %282, %cst_133 {dimension_numbers = #tpu.dot_dimension_numbers<[1], [0], [0], [1], [0, 0, 1, 1], [], []>} : vector<3x32xf32>, vector<32x32xf32>, vector<3x32xf32> -> vector<3x32xf32>
    %cst_134 = arith.constant dense<0.000000e+00> : vector<3x32xf32>
    %345 = tpu.matmul %342, %284, %cst_134 {dimension_numbers = #tpu.dot_dimension_numbers<[1], [0], [0], [1], [0, 0, 1, 1], [], []>} : vector<3x32xf32>, vector<32x32xf32>, vector<3x32xf32> -> vector<3x32xf32>
    %346 = vector.extract_strided_slice %264 {offsets = [6, 0], sizes = [3, 32], strides = [1, 1]} : vector<9x32xf32> to vector<3x32xf32>
    %347 = arith.addf %346, %343 : vector<3x32xf32>
    %348 = arith.negf %347 : vector<3x32xf32>
    %349 = math.exp %348 : vector<3x32xf32>
    %cst_135 = arith.constant 1.000000e+00 : f32
    %350 = vector.broadcast %cst_135 : f32 to vector<3x32xf32>
    %351 = arith.addf %350, %349 : vector<3x32xf32>
    %352 = arith.divf %350, %351 : vector<3x32xf32>
    %353 = vector.extract_strided_slice %271 {offsets = [6, 0], sizes = [3, 32], strides = [1, 1]} : vector<9x32xf32> to vector<3x32xf32>
    %354 = arith.addf %353, %344 : vector<3x32xf32>
    %355 = arith.negf %354 : vector<3x32xf32>
    %356 = math.exp %355 : vector<3x32xf32>
    %cst_136 = arith.constant 1.000000e+00 : f32
    %357 = vector.broadcast %cst_136 : f32 to vector<3x32xf32>
    %358 = arith.addf %357, %356 : vector<3x32xf32>
    %359 = arith.divf %357, %358 : vector<3x32xf32>
    %360 = vector.extract_strided_slice %278 {offsets = [6, 0], sizes = [3, 32], strides = [1, 1]} : vector<9x32xf32> to vector<3x32xf32>
    %361 = arith.addf %345, %287 : vector<3x32xf32>
    %362 = arith.mulf %352, %361 : vector<3x32xf32>
    %363 = arith.addf %360, %362 : vector<3x32xf32>
    %364 = math.tanh %363 : vector<3x32xf32>
    %cst_137 = arith.constant 1.000000e+00 : f32
    %365 = vector.broadcast %cst_137 : f32 to vector<3x32xf32>
    %366 = arith.subf %365, %359 : vector<3x32xf32>
    %367 = arith.mulf %366, %364 : vector<3x32xf32>
    %368 = arith.mulf %359, %342 : vector<3x32xf32>
    %369 = arith.addf %367, %368 : vector<3x32xf32>
    %c0_138 = arith.constant 0 : index
    %c2_139 = arith.constant 2 : index
    %370 = vector.load %arg12[%c0_138, %c2_139] : memref<3x3xf32, #tpu.memory_space<vmem>>, vector<3x1xf32>
    %371 = vector.broadcast %370 : vector<3x1xf32> to vector<3x32xf32>
    %372 = arith.mulf %371, %369 : vector<3x32xf32>
    %cst_140 = arith.constant 1.000000e+00 : f32
    %373 = vector.broadcast %cst_140 : f32 to vector<3x1xf32>
    %374 = arith.subf %373, %370 : vector<3x1xf32>
    %375 = vector.broadcast %374 : vector<3x1xf32> to vector<3x32xf32>
    %376 = arith.mulf %375, %342 : vector<3x32xf32>
    %377 = arith.addf %372, %376 : vector<3x32xf32>
    %cst_141 = arith.constant dense<0.000000e+00> : vector<32xf32>
    %378 = vector.multi_reduction <add>, %377, %cst_141 [0] : vector<3x32xf32> to vector<32xf32>
    %379 = vector.shape_cast %378 : vector<32xf32> to vector<1x32xf32>
    %cst_142 = arith.constant 0.333333343 : f32
    %380 = vector.broadcast %cst_142 : f32 to vector<1x32xf32>
    %381 = arith.mulf %379, %380 : vector<1x32xf32>
    %c0_143 = arith.constant 0 : index
    %c0_144 = arith.constant 0 : index
    %382 = vector.load %arg13[%c0_143, %c0_144] : memref<32x32xf32, #tpu.memory_space<vmem>>, vector<32x32xf32>
    %cst_145 = arith.constant dense<0.000000e+00> : vector<1x32xf32>
    %383 = tpu.matmul %381, %382, %cst_145 {dimension_numbers = #tpu.dot_dimension_numbers<[1], [0], [0], [1], [0, 0, 1, 1], [], []>} : vector<1x32xf32>, vector<32x32xf32>, vector<1x32xf32> -> vector<1x32xf32>
    %c0_146 = arith.constant 0 : index
    %c0_147 = arith.constant 0 : index
    %384 = vector.load %arg14[%c0_146, %c0_147] : memref<32x32xf32, #tpu.memory_space<vmem>>, vector<32x32xf32>
    %cst_148 = arith.constant dense<0.000000e+00> : vector<8x32xf32>
    %385 = tpu.matmul %255, %384, %cst_148 {dimension_numbers = #tpu.dot_dimension_numbers<[1], [0], [0], [1], [0, 0, 1, 1], [], []>} : vector<8x32xf32>, vector<32x32xf32>, vector<8x32xf32> -> vector<8x32xf32>
    %386 = vector.broadcast %383 : vector<1x32xf32> to vector<8x32xf32>
    %387 = arith.addf %386, %385 : vector<8x32xf32>
    %388 = math.tanh %387 : vector<8x32xf32>
    %c0_149 = arith.constant 0 : index
    %c0_150 = arith.constant 0 : index
    %389 = vector.load %arg15[%c0_149, %c0_150] : memref<32x1xf32, #tpu.memory_space<vmem>>, vector<32x1xf32>
    %cst_151 = arith.constant dense<0.000000e+00> : vector<8x1xf32>
    %390 = tpu.matmul %388, %389, %cst_151 {dimension_numbers = #tpu.dot_dimension_numbers<[1], [0], [0], [1], [0, 0, 1, 1], [], []>} : vector<8x32xf32>, vector<32x1xf32>, vector<8x1xf32> -> vector<8x1xf32>
    %cst_152 = arith.constant dense<0xFF800000> : vector<1xf32>
    %391 = vector.multi_reduction <maximumf>, %390, %cst_152 [0] : vector<8x1xf32> to vector<1xf32>
    %392 = vector.shape_cast %391 : vector<1xf32> to vector<1x1xf32>
    %393 = vector.broadcast %392 : vector<1x1xf32> to vector<8x1xf32>
    %394 = arith.subf %390, %393 : vector<8x1xf32>
    %395 = math.exp %394 : vector<8x1xf32>
    %cst_153 = arith.constant dense<0.000000e+00> : vector<1xf32>
    %396 = vector.multi_reduction <add>, %395, %cst_153 [0] : vector<8x1xf32> to vector<1xf32>
    %397 = vector.shape_cast %396 : vector<1xf32> to vector<1x1xf32>
    %398 = vector.broadcast %397 : vector<1x1xf32> to vector<8x1xf32>
    %399 = arith.divf %395, %398 : vector<8x1xf32>
    %c0_154 = arith.constant 0 : index
    %c0_155 = arith.constant 0 : index
    %400 = vector.load %arg16[%c0_154, %c0_155] : memref<8x1xf32, #tpu.memory_space<vmem>>, vector<8x1xf32>
    tpu.vector_store %arg16[%c0_154, %c0_155], %399 {strides = array<i32>} : memref<8x1xf32, #tpu.memory_space<vmem>>, vector<8x1xf32>,
    return
  }
  func.func @transform_0(%arg0: i32) -> (i32, i32) {
    %c0_i32 = arith.constant 0 : i32
    %c0_i32_0 = arith.constant 0 : i32
    %c0_i32_1 = arith.constant 0 : i32
    return %c0_i32, %c0_i32_0 : i32, i32
  }
  func.func @transform_1(%arg0: i32) -> (i32, i32) {
    %c0_i32 = arith.constant 0 : i32
    %c0_i32_0 = arith.constant 0 : i32
    %c0_i32_1 = arith.constant 0 : i32
    return %c0_i32, %c0_i32_0 : i32, i32
  }
  func.func @transform_2(%arg0: i32) -> (i32, i32, i32) {
    %c0_i32 = arith.constant 0 : i32
    %c0_i32_0 = arith.constant 0 : i32
    %c0_i32_1 = arith.constant 0 : i32
    %c0_i32_2 = arith.constant 0 : i32
    return %c0_i32, %c0_i32_0, %c0_i32_1 : i32, i32, i32
  }
  func.func @transform_3(%arg0: i32) -> (i32, i32, i32) {
    %c0_i32 = arith.constant 0 : i32
    %c0_i32_0 = arith.constant 0 : i32
    %c0_i32_1 = arith.constant 0 : i32
    %c0_i32_2 = arith.constant 0 : i32
    return %c0_i32, %c0_i32_0, %c0_i32_1 : i32, i32, i32
  }
  func.func @transform_4(%arg0: i32) -> (i32, i32, i32) {
    %c0_i32 = arith.constant 0 : i32
    %c0_i32_0 = arith.constant 0 : i32
    %c0_i32_1 = arith.constant 0 : i32
    %c0_i32_2 = arith.constant 0 : i32
    return %c0_i32, %c0_i32_0, %c0_i32_1 : i32, i32, i32
  }
  func.func @transform_5(%arg0: i32) -> (i32, i32) {
    %c0_i32 = arith.constant 0 : i32
    %c0_i32_0 = arith.constant 0 : i32
    %c0_i32_1 = arith.constant 0 : i32
    return %c0_i32, %c0_i32_0 : i32, i32
  }
  func.func @transform_6(%arg0: i32) -> (i32, i32, i32) {
    %c0_i32 = arith.constant 0 : i32
    %c0_i32_0 = arith.constant 0 : i32
    %c0_i32_1 = arith.constant 0 : i32
    %c0_i32_2 = arith.constant 0 : i32
    return %c0_i32, %c0_i32_0, %c0_i32_1 : i32, i32, i32
  }
  func.func @transform_7(%arg0: i32) -> (i32, i32, i32) {
    %c0_i32 = arith.constant 0 : i32
    %c0_i32_0 = arith.constant 0 : i32
    %c0_i32_1 = arith.constant 0 : i32
    %c0_i32_2 = arith.constant 0 : i32
    return %c0_i32, %c0_i32_0, %c0_i32_1 : i32, i32, i32
  }
  func.func @transform_8(%arg0: i32) -> (i32, i32, i32) {
    %c0_i32 = arith.constant 0 : i32
    %c0_i32_0 = arith.constant 0 : i32
    %c0_i32_1 = arith.constant 0 : i32
    %c0_i32_2 = arith.constant 0 : i32
    return %c0_i32, %c0_i32_0, %c0_i32_1 : i32, i32, i32
  }
  func.func @transform_9(%arg0: i32) -> (i32, i32) {
    %c0_i32 = arith.constant 0 : i32
    %c0_i32_0 = arith.constant 0 : i32
    %c0_i32_1 = arith.constant 0 : i32
    return %c0_i32, %c0_i32_0 : i32, i32
  }
  func.func @transform_10(%arg0: i32) -> (i32, i32) {
    %c0_i32 = arith.constant 0 : i32
    %c0_i32_0 = arith.constant 0 : i32
    %c0_i32_1 = arith.constant 0 : i32
    return %c0_i32, %c0_i32_0 : i32, i32
  }
  func.func @transform_11(%arg0: i32) -> (i32, i32) {
    %c0_i32 = arith.constant 0 : i32
    %c0_i32_0 = arith.constant 0 : i32
    %c0_i32_1 = arith.constant 0 : i32
    return %c0_i32, %c0_i32_0 : i32, i32
  }
  func.func @transform_12(%arg0: i32) -> (i32, i32) {
    %c0_i32 = arith.constant 0 : i32
    %c0_i32_0 = arith.constant 0 : i32
    %c0_i32_1 = arith.constant 0 : i32
    return %c0_i32, %c0_i32_0 : i32, i32
  }
  func.func @transform_13(%arg0: i32) -> (i32, i32) {
    %c0_i32 = arith.constant 0 : i32
    %c0_i32_0 = arith.constant 0 : i32
    %c0_i32_1 = arith.constant 0 : i32
    return %c0_i32, %c0_i32_0 : i32, i32
  }
  func.func @transform_14(%arg0: i32) -> (i32, i32) {
    %c0_i32 = arith.constant 0 : i32
    %c0_i32_0 = arith.constant 0 : i32
    %c0_i32_1 = arith.constant 0 : i32
    return %c0_i32, %c0_i32_0 : i32, i32
  }
  func.func @transform_15(%arg0: i32) -> (i32, i32) {
    %c0_i32 = arith.constant 0 : i32
    %c0_i32_0 = arith.constant 0 : i32
    %c0_i32_1 = arith.constant 0 : i32
    return %c0_i32, %c0_i32_0 : i32, i32
  }
}

</mosaic_0001>

<llo_original>
// kernel: rnn_gcn_forward.1
$region0: #{rnn_gcn_forward.1}
  #allocation0 [shape = 'u32[]', space=smem, size = 0x4, offset = 0x4, fixed_abs, tag = 'smem constant byte address 0x4 - core index']
  #allocation1 [shape = 'u32[144,128]{1,0:T(1,128)}', space=vmem, size = 0x12000, scoped, tag = 'internal scratch']
  %s0 = inlined_call_operand.vmem [shape: s32[64,1], index: 0, kind: input, shape index: {}]
  %s1 = inlined_call_operand.vmem [shape: f32[50,32], index: 1, kind: input, shape index: {}]
  %s2 = inlined_call_operand.vmem [shape: f32[3,32,32], index: 2, kind: input, shape index: {}]
  %s3 = inlined_call_operand.vmem [shape: f32[3,32,32], index: 3, kind: input, shape index: {}]
  %s4 = inlined_call_operand.hbm [shape: f32[3,1,32], index: 4, kind: input, shape index: {}]
  %s5 = inlined_call_operand.vmem [shape: f32[1,32], index: 5, kind: input, shape index: {}]
  %s6 = inlined_call_operand.hbm [shape: f32[3,32,32], index: 6, kind: input, shape index: {}]
  %s7 = inlined_call_operand.hbm [shape: f32[3,32,32], index: 7, kind: input, shape index: {}]
  %s8 = inlined_call_operand.hbm [shape: f32[3,1,32], index: 8, kind: input, shape index: {}]
  %s9 = inlined_call_operand.hbm [shape: f32[1,32], index: 9, kind: input, shape index: {}]
  %s10 = inlined_call_operand.vmem [shape: f32[9,8], index: 10, kind: input, shape index: {}]
  %s11 = inlined_call_operand.vmem [shape: f32[3,3], index: 11, kind: input, shape index: {}]
  %s12 = inlined_call_operand.vmem [shape: f32[32,32], index: 12, kind: input, shape index: {}]
  %s13 = inlined_call_operand.hbm [shape: f32[32,32], index: 13, kind: input, shape index: {}]
  %s14 = inlined_call_operand.vmem [shape: f32[32,1], index: 14, kind: input, shape index: {}]
  %s15 = inlined_call_operand.vmem [shape: f32[8,1], index: 15, kind: output, shape index: {}]
  %s16 = sld [smem:[#allocation0]]
  $region94: #{rnn_gcn_forward.1} parent=0
    _
  %s18 = ssub.s32 1, %s16
  %s19 = scalar_select 0, %s18, %s16
  $region1: #{rnn_gcn_forward.1} parent=0
    #allocation2 [shape = 'u8[1536]{0}', space=vmem, size = 0x800, scoped, tag = 'input window, operand 4, single buffered']
    #allocation3 [shape = 's32[1]{0}', space=sflag, size = 0x4, scoped, tag = 'scoped memory for rnn_gcn_forward.1']
    #allocation4 [shape = 'u8[49152]{0}', space=vmem, size = 0xc000, scoped, tag = 'input window, operand 6, single buffered']
    #allocation5 [shape = 's32[1]{0}', space=sflag, size = 0x4, scoped, tag = 'scoped memory for rnn_gcn_forward.1']
    #allocation6 [shape = 'u8[49152]{0}', space=vmem, size = 0xc000, scoped, tag = 'input window, operand 7, single buffered']
    #allocation7 [shape = 'u8[1536]{0}', space=vmem, size = 0x800, scoped, tag = 'input window, operand 8, single buffered']
    #allocation8 [shape = 's32[1]{0}', space=sflag, size = 0x4, scoped, tag = 'scoped memory for rnn_gcn_forward.1']
    #allocation9 [shape = 'u8[512]{0}', space=vmem, size = 0x400, scoped, tag = 'input window, operand 9, single buffered']
    #allocation10 [shape = 'u8[16384]{0}', space=vmem, size = 0x4000, scoped, tag = 'input window, operand 13, single buffered']
    #allocation11 [shape = 's32[1]{0}', space=sflag, size = 0x4, scoped, tag = 'scoped memory for rnn_gcn_forward.1']
    %20 = vsyncpa [#allocation3], 0
    %21 = vsyncpa [#allocation5], 0
    %22 = vsyncpa [#allocation8], 0
    %23 = vsyncpa [#allocation11], 0
    // Predicated region
    $region2: #{rnn_gcn_forward.1} parent=1 // pred_check
      _
    $region3: #{rnn_gcn_forward.1} parent=1 // pred_check_branch
      %25 = sbr.rel (0) target = $region5
    $region4: #{rnn_gcn_forward.1} parent=1 // pred_region
      _
    $region5: #{rnn_gcn_forward.1} parent=1 // pred_fallthru
      _
    // Predicated region
    $region6: #{rnn_gcn_forward.1} parent=1 // pred_check
      _
    $region7: #{rnn_gcn_forward.1} parent=1 // pred_check_branch
      %27 = sbr.rel (0) target = $region9
    $region8: #{rnn_gcn_forward.1} parent=1 // pred_region
      _
    $region9: #{rnn_gcn_forward.1} parent=1 // pred_fallthru
      _
    // Predicated region
    $region10: #{rnn_gcn_forward.1} parent=1 // pred_check
      _
    $region11: #{rnn_gcn_forward.1} parent=1 // pred_check_branch
      %29 = sbr.rel (0) target = $region13
    $region12: #{rnn_gcn_forward.1} parent=1 // pred_region
      _
    $region13: #{rnn_gcn_forward.1} parent=1 // pred_fallthru
      _
    // Predicated region
    $region14: #{rnn_gcn_forward.1} parent=1 // pred_check
      _
    $region15: #{rnn_gcn_forward.1} parent=1 // pred_check_branch
      %31 = sbr.rel (0) target = $region17
    $region16: #{rnn_gcn_forward.1} parent=1 // pred_region
      _
    $region17: #{rnn_gcn_forward.1} parent=1 // pred_fallthru
      _
    // Predicated region
    $region18: #{rnn_gcn_forward.1} parent=1 // pred_check
      _
    $region19: #{rnn_gcn_forward.1} parent=1 // pred_check_branch
      %33 = sbr.rel (0) target = $region21
    $region20: #{rnn_gcn_forward.1} parent=1 // pred_region
      %s35 = ssub.s32 48, 48
      %36 = vsyncadd [#allocation3], %s35
      %s37 = sshll.u32 [#allocation2], 4
      %s38 = int_to_ptr.vmem [resolvable:$true] %s37
      %43 = dma.hbm_to_vmem [thread:$0]  %s4, 48, %s38, [#allocation3], 16, 16, 1
    $region21: #{rnn_gcn_forward.1} parent=1 // pred_fallthru
      _
    // Predicated region
    $region22: #{rnn_gcn_forward.1} parent=1 // pred_check
      _
    $region23: #{rnn_gcn_forward.1} parent=1 // pred_check_branch
      %45 = sbr.rel (0) target = $region25
    $region24: #{rnn_gcn_forward.1} parent=1 // pred_region
      _
    $region25: #{rnn_gcn_forward.1} parent=1 // pred_fallthru
      _
    // Predicated region
    $region26: #{rnn_gcn_forward.1} parent=1 // pred_check
      _
    $region27: #{rnn_gcn_forward.1} parent=1 // pred_check_branch
      %47 = sbr.rel (0) target = $region29
    $region28: #{rnn_gcn_forward.1} parent=1 // pred_region
      %s49 = ssub.s32 1536, 1536
      %50 = vsyncadd [#allocation5], %s49
      %s51 = sshll.u32 [#allocation4], 4
      %s52 = int_to_ptr.vmem [resolvable:$true] %s51
      %57 = dma.hbm_to_vmem [thread:$0]  %s6, 1536, %s52, [#allocation5], 128, 128, 8
    $region29: #{rnn_gcn_forward.1} parent=1 // pred_fallthru
      _
    // Predicated region
    $region30: #{rnn_gcn_forward.1} parent=1 // pred_check
      _
    $region31: #{rnn_gcn_forward.1} parent=1 // pred_check_branch
      %59 = sbr.rel (0) target = $region33
    $region32: #{rnn_gcn_forward.1} parent=1 // pred_region
      %s61 = ssub.s32 1536, 1536
      %62 = vsyncadd [#allocation5], %s61
      %s63 = sshll.u32 [#allocation6], 4
      %s64 = int_to_ptr.vmem [resolvable:$true] %s63
      %69 = dma.hbm_to_vmem [thread:$0]  %s7, 1536, %s64, [#allocation5], 128, 128, 8
    $region33: #{rnn_gcn_forward.1} parent=1 // pred_fallthru
      _
    // Predicated region
    $region34: #{rnn_gcn_forward.1} parent=1 // pred_check
      _
    $region35: #{rnn_gcn_forward.1} parent=1 // pred_check_branch
      %71 = sbr.rel (0) target = $region37
    $region36: #{rnn_gcn_forward.1} parent=1 // pred_region
      %s73 = ssub.s32 48, 48
      %74 = vsyncadd [#allocation8], %s73
      %s75 = sshll.u32 [#allocation7], 4
      %s76 = int_to_ptr.vmem [resolvable:$true] %s75
      %81 = dma.hbm_to_vmem [thread:$0]  %s8, 48, %s76, [#allocation8], 16, 16, 1
    $region37: #{rnn_gcn_forward.1} parent=1 // pred_fallthru
      _
    // Predicated region
    $region38: #{rnn_gcn_forward.1} parent=1 // pred_check
      _
    $region39: #{rnn_gcn_forward.1} parent=1 // pred_check_branch
      %83 = sbr.rel (0) target = $region41
    $region40: #{rnn_gcn_forward.1} parent=1 // pred_region
      %s85 = ssub.s32 16, 16
      %86 = vsyncadd [#allocation8], %s85
      %s88 = sshll.u32 [#allocation9], 4
      %s89 = int_to_ptr.vmem [resolvable:$true] %s88
      %91 = dma.hbm_to_vmem [thread:$0]  %s9, 16, %s89, [#allocation8]
    $region41: #{rnn_gcn_forward.1} parent=1 // pred_fallthru
      _
    // Predicated region
    $region42: #{rnn_gcn_forward.1} parent=1 // pred_check
      _
    $region43: #{rnn_gcn_forward.1} parent=1 // pred_check_branch
      %93 = sbr.rel (0) target = $region45
    $region44: #{rnn_gcn_forward.1} parent=1 // pred_region
      _
    $region45: #{rnn_gcn_forward.1} parent=1 // pred_fallthru
      _
    // Predicated region
    $region46: #{rnn_gcn_forward.1} parent=1 // pred_check
      _
    $region47: #{rnn_gcn_forward.1} parent=1 // pred_check_branch
      %95 = sbr.rel (0) target = $region49
    $region48: #{rnn_gcn_forward.1} parent=1 // pred_region
      _
    $region49: #{rnn_gcn_forward.1} parent=1 // pred_fallthru
      _
    // Predicated region
    $region50: #{rnn_gcn_forward.1} parent=1 // pred_check
      _
    $region51: #{rnn_gcn_forward.1} parent=1 // pred_check_branch
      %97 = sbr.rel (0) target = $region53
    $region52: #{rnn_gcn_forward.1} parent=1 // pred_region
      _
    $region53: #{rnn_gcn_forward.1} parent=1 // pred_fallthru
      _
    // Predicated region
    $region54: #{rnn_gcn_forward.1} parent=1 // pred_check
      _
    $region55: #{rnn_gcn_forward.1} parent=1 // pred_check_branch
      %99 = sbr.rel (0) target = $region57
    $region56: #{rnn_gcn_forward.1} parent=1 // pred_region
      %s101 = ssub.s32 512, 512
      %102 = vsyncadd [#allocation11], %s101
      %s103 = sshll.u32 [#allocation10], 4
      %s104 = int_to_ptr.vmem [resolvable:$true] %s103
      %109 = dma.hbm_to_vmem [thread:$0]  %s13, 512, %s104, [#allocation11], 128, 128, 8
    $region57: #{rnn_gcn_forward.1} parent=1 // pred_fallthru
      _
    // Predicated region
    $region58: #{rnn_gcn_forward.1} parent=1 // pred_check
      _
    $region59: #{rnn_gcn_forward.1} parent=1 // pred_check_branch
      %111 = sbr.rel (0) target = $region61
    $region60: #{rnn_gcn_forward.1} parent=1 // pred_region
      _
    $region61: #{rnn_gcn_forward.1} parent=1 // pred_fallthru
      _
    // Predicated region
    $region62: #{rnn_gcn_forward.1} parent=1 // pred_check
      _
    $region63: #{rnn_gcn_forward.1} parent=1 // pred_check_branch
      %113 = sbr.rel (0) target = $region65
    $region64: #{rnn_gcn_forward.1} parent=1 // pred_region
      %114 = dma.done [#allocation3], 48
    $region65: #{rnn_gcn_forward.1} parent=1 // pred_fallthru
      _
    // Predicated region
    $region66: #{rnn_gcn_forward.1} parent=1 // pred_check
      _
    $region67: #{rnn_gcn_forward.1} parent=1 // pred_check_branch
      %116 = sbr.rel (0) target = $region69
    $region68: #{rnn_gcn_forward.1} parent=1 // pred_region
      %117 = dma.done [#allocation5], 1536
    $region69: #{rnn_gcn_forward.1} parent=1 // pred_fallthru
      _
    // Predicated region
    $region70: #{rnn_gcn_forward.1} parent=1 // pred_check
      _
    $region71: #{rnn_gcn_forward.1} parent=1 // pred_check_branch
      %119 = sbr.rel (0) target = $region73
    $region72: #{rnn_gcn_forward.1} parent=1 // pred_region
      %120 = dma.done [#allocation5], 1536
    $region73: #{rnn_gcn_forward.1} parent=1 // pred_fallthru
      _
    // Predicated region
    $region74: #{rnn_gcn_forward.1} parent=1 // pred_check
      _
    $region75: #{rnn_gcn_forward.1} parent=1 // pred_check_branch
      %122 = sbr.rel (0) target = $region77
    $region76: #{rnn_gcn_forward.1} parent=1 // pred_region
      %123 = dma.done [#allocation8], 48
    $region77: #{rnn_gcn_forward.1} parent=1 // pred_fallthru
      _
    // Predicated region
    $region78: #{rnn_gcn_forward.1} parent=1 // pred_check
      _
    $region79: #{rnn_gcn_forward.1} parent=1 // pred_check_branch
      %125 = sbr.rel (0) target = $region81
    $region80: #{rnn_gcn_forward.1} parent=1 // pred_region
      %126 = dma.done [#allocation8], 16
    $region81: #{rnn_gcn_forward.1} parent=1 // pred_fallthru
      _
    // Predicated region
    $region82: #{rnn_gcn_forward.1} parent=1 // pred_check
      _
    $region83: #{rnn_gcn_forward.1} parent=1 // pred_check_branch
      %128 = sbr.rel (0) target = $region85
    $region84: #{rnn_gcn_forward.1} parent=1 // pred_region
      %129 = dma.done [#allocation11], 512
    $region85: #{rnn_gcn_forward.1} parent=1 // pred_fallthru
      _
    %v130 = vld [vmem:[%s0] sm:$0xff]
    %v131 = vld [vmem:[%s0 + $0x8] sm:$0xff]
    %v132 = vld [vmem:[%s0 + $0x10] sm:$0xff]
    %v133 = vld [vmem:[%s0 + $0x18] sm:$0xff]
    %v134 = vld [vmem:[%s0 + $0x20] sm:$0xff]
    %v135 = vld [vmem:[%s0 + $0x28] sm:$0xff]
    %v136 = vld [vmem:[%s0 + $0x30] sm:$0xff]
    %v137 = vld [vmem:[%s0 + $0x38] sm:$0xff]
    %v138 = vlaneseq
    %v139 = vand.u32 %v138, 127
    %140 = vset.pattern.permute.xlu0 0
    %141 = vperm.xlu0 %140, %v130
    %v142 = vpop.permute.xlu0 %141
    %143 = vset.pattern.permute.xlu0 0
    %144 = vperm.xlu0 %143, %v131
    %v145 = vpop.permute.xlu0 %144
    %146 = vset.pattern.permute.xlu0 0
    %147 = vperm.xlu0 %146, %v132
    %v148 = vpop.permute.xlu0 %147
    %149 = vset.pattern.permute.xlu0 0
    %150 = vperm.xlu0 %149, %v133
    %v151 = vpop.permute.xlu0 %150
    %152 = vset.pattern.permute.xlu0 0
    %153 = vperm.xlu0 %152, %v134
    %v154 = vpop.permute.xlu0 %153
    %155 = vset.pattern.permute.xlu0 0
    %156 = vperm.xlu0 %155, %v135
    %v157 = vpop.permute.xlu0 %156
    %158 = vset.pattern.permute.xlu0 0
    %159 = vperm.xlu0 %158, %v136
    %v160 = vpop.permute.xlu0 %159
    %161 = vset.pattern.permute.xlu0 0
    %162 = vperm.xlu0 %161, %v137
    %v163 = vpop.permute.xlu0 %162
    %vm164 = vcmp.eq.s32.totalorder %v139, %v142
    %vm165 = vcmp.eq.s32.totalorder %v139, %v145
    %vm166 = vcmp.eq.s32.totalorder %v139, %v148
    %vm167 = vcmp.eq.s32.totalorder %v139, %v151
    %vm168 = vcmp.eq.s32.totalorder %v139, %v154
    %vm169 = vcmp.eq.s32.totalorder %v139, %v157
    %vm170 = vcmp.eq.s32.totalorder %v139, %v160
    %vm171 = vcmp.eq.s32.totalorder %v139, %v163
    %v172 = vsel %vm164, 1.0, 0.0
    %v173 = vsel %vm165, 1.0, 0.0
    %v174 = vsel %vm166, 1.0, 0.0
    %v175 = vsel %vm167, 1.0, 0.0
    %v176 = vsel %vm168, 1.0, 0.0
    %v177 = vsel %vm169, 1.0, 0.0
    %v178 = vsel %vm170, 1.0, 0.0
    %v179 = vsel %vm171, 1.0, 0.0
    %v180 = vld [vmem:[%s1] sm:$0xff]
    %v181 = vld [vmem:[%s1 + $0x8] sm:$0xff]
    %v182 = vld [vmem:[%s1 + $0x10] sm:$0xff]
    %v183 = vld [vmem:[%s1 + $0x18] sm:$0xff]
    %v184 = vld [vmem:[%s1 + $0x20] sm:$0xff]
    %v185 = vld [vmem:[%s1 + $0x28] sm:$0xff]
    %v186 = vld [vmem:[%s1 + $0x30] sm:$0x3]
    %vm187 = vcmask 408576
    %v189 = vsel %vm187, %v172, 0
    %v192 = vsel %vm187, %v173, 0
    %v195 = vsel %vm187, %v174, 0
    %v198 = vsel %vm187, %v175, 0
    %v201 = vsel %vm187, %v176, 0
    %v204 = vsel %vm187, %v177, 0
    %v207 = vsel %vm187, %v178, 0
    %v210 = vsel %vm187, %v179, 0
    %vm212 = vcmask 1041408
    %v214 = vsel %vm212, %v186, 0
    %216 = vmatprep.subr.mxu0 0.0
    %217 = vmatpush1.msra.mxu0 %v180
    %218 = vmatprep.subr.mxu0 0.0
    %219 = vmatpush1.msra.mxu0 %v181
    %220 = vmatprep.subr.mxu0 0.0
    %221 = vmatpush1.msra.mxu0 %v182
    %222 = vmatprep.subr.mxu0 0.0
    %223 = vmatpush1.msra.mxu0 %v183
    %224 = vmatprep.subr.mxu0 0.0
    %225 = vmatpush1.msra.mxu0 %v184
    %226 = vmatprep.subr.mxu0 0.0
    %227 = vmatpush1.msra.mxu0 %v185
    %228 = vmatprep.subr.mxu0 0.0
    %229 = vmatpush1.msra.mxu0 %v214
    %230 = vmatprep.subr.mxu0 0.0
    %231 = vmatpush1.msra.mxu0 0.0
    %232 = vmatprep.subr.mxu0 0.0
    %233 = vmatpush1.msra.mxu0 0.0
    %234 = vmatprep.subr.mxu0 0.0
    %235 = vmatpush1.msra.mxu0 0.0
    %236 = vmatprep.subr.mxu0 0.0
    %237 = vmatpush1.msra.mxu0 0.0
    %238 = vmatprep.subr.mxu0 0.0
    %239 = vmatpush1.msra.mxu0 0.0
    %240 = vmatprep.subr.mxu0 0.0
    %241 = vmatpush1.msra.mxu0 0.0
    %242 = vmatprep.subr.mxu0 0.0
    %243 = vmatpush1.msra.mxu0 0.0
    %244 = vmatprep.subr.mxu0 0.0
    %245 = vmatpush1.msra.mxu0 0.0
    %246 = vmatprep.subr.mxu0 0.0
    %247 = vmatpush1.msra.mxu0 0.0
    %248 = vmatprep.subr.mxu0 0.0
    %249 = vmatpush1.msra.mxu0 0.0
    %250 = vmatprep.subr.mxu0 0.0
    %251 = vmatpush1.msra.mxu0 0.0
    %252 = vmatprep.subr.mxu0 0.0
    %253 = vmatpush1.msra.mxu0 0.0
    %254 = vmatprep.subr.mxu0 0.0
    %255 = vmatpush1.msra.mxu0 0.0
    %256 = vmatprep.subr.mxu0 0.0
    %257 = vmatpush1.msra.mxu0 0.0
    %258 = vmatprep.subr.mxu0 0.0
    %259 = vmatpush1.msra.mxu0 0.0
    %260 = vmatprep.subr.mxu0 0.0
    %261 = vmatpush1.msra.mxu0 0.0
    %262 = vmatprep.subr.mxu0 0.0
    %263 = vmatpush1.msra.mxu0 0.0
    %264 = vmatprep.subr.mxu0 0.0
    %265 = vmatpush1.msra.mxu0 0.0
    %266 = vmatprep.subr.mxu0 0.0
    %267 = vmatpush1.msra.mxu0 0.0
    %268 = vmatprep.subr.mxu0 0.0
    %269 = vmatpush1.msra.mxu0 0.0
    %270 = vmatprep.subr.mxu0 0.0
    %271 = vmatpush1.msra.mxu0 0.0
    %272 = vmatprep.subr.mxu0 0.0
    %273 = vmatpush1.msra.mxu0 0.0
    %274 = vmatprep.subr.mxu0 0.0
    %275 = vmatpush1.msra.mxu0 0.0
    %276 = vmatprep.subr.mxu0 0.0
    %277 = vmatpush1.msra.mxu0 0.0
    %278 = vmatprep.subr.mxu0 0.0
    %279 = vmatpush1.msra.mxu0 0.0
    %280 = vmatprep.mubr.f32.mxu0 0.0
    %281 = vmatmul.mubr.f32.gmra.mrb[0].mxu0 %v189
    %v282 = vpop.f32.mrb[0].mxu0
    %v283 = vadd.f32 0.0, %v282
    %v284 = vpop.f32.mrb[0].mxu0
    %285 = vmatprep.mubr.f32.mxu0 0.0
    %286 = vmatmul.mubr.f32.gmra.mrb[0].mxu0 %v192
    %v287 = vpop.f32.mrb[0].mxu0
    %v288 = vadd.f32 0.0, %v287
    %v289 = vpop.f32.mrb[0].mxu0
    %290 = vmatprep.mubr.f32.mxu0 0.0
    %291 = vmatmul.mubr.f32.gmra.mrb[0].mxu0 %v195
    %v292 = vpop.f32.mrb[0].mxu0
    %v293 = vadd.f32 0.0, %v292
    %v294 = vpop.f32.mrb[0].mxu0
    %295 = vmatprep.mubr.f32.mxu0 0.0
    %296 = vmatmul.mubr.f32.gmra.mrb[0].mxu0 %v198
    %v297 = vpop.f32.mrb[0].mxu0
    %v298 = vadd.f32 0.0, %v297
    %v299 = vpop.f32.mrb[0].mxu0
    %300 = vmatprep.mubr.f32.mxu0 0.0
    %301 = vmatmul.mubr.f32.gmra.mrb[0].mxu0 %v201
    %v302 = vpop.f32.mrb[0].mxu0
    %v303 = vadd.f32 0.0, %v302
    %v304 = vpop.f32.mrb[0].mxu0
    %305 = vmatprep.mubr.f32.mxu0 0.0
    %306 = vmatmul.mubr.f32.gmra.mrb[0].mxu0 %v204
    %v307 = vpop.f32.mrb[0].mxu0
    %v308 = vadd.f32 0.0, %v307
    %v309 = vpop.f32.mrb[0].mxu0
    %310 = vmatprep.mubr.f32.mxu0 0.0
    %311 = vmatmul.mubr.f32.gmra.mrb[0].mxu0 %v207
    %v312 = vpop.f32.mrb[0].mxu0
    %v313 = vadd.f32 0.0, %v312
    %v314 = vpop.f32.mrb[0].mxu0
    %315 = vmatprep.mubr.f32.mxu0 0.0
    %316 = vmatmul.mubr.f32.gmra.mrb[0].mxu0 %v210
    %v317 = vpop.f32.mrb[0].mxu0
    %v318 = vadd.f32 0.0, %v317
    %v319 = vpop.f32.mrb[0].mxu0
    %320 = vdwg.mxu0
    %v321 = vld [vmem:[%s2] sm:$0xff]
    %v322 = vld [vmem:[%s2 + $0x8] sm:$0xff]
    %v323 = vld [vmem:[%s2 + $0x10] sm:$0xff]
    %v324 = vld [vmem:[%s2 + $0x18] sm:$0xff]
    %v325 = vld [vmem:[#allocation2] sm:$0x1]
    %v327 = vlaneseq
    %v328 = vshrl.u32 %v327, 7
    %v329 = vsub.s32 0, %v328
    %v330 = vrot.slane %v325, %v329
    %vm332 = vcmask 261120
    %v334 = vsel %vm332, %v283, 0
    %v337 = vsel %vm332, %v288, 0
    %v340 = vsel %vm332, %v293, 0
    %v343 = vsel %vm332, %v298, 0
    %v346 = vsel %vm332, %v303, 0
    %v349 = vsel %vm332, %v308, 0
    %v352 = vsel %vm332, %v313, 0
    %v355 = vsel %vm332, %v318, 0
    %357 = vmatprep.subr.mxu0 0.0
    %358 = vmatpush1.msra.mxu0 %v321
    %359 = vmatprep.subr.mxu0 0.0
    %360 = vmatpush1.msra.mxu0 %v322
    %361 = vmatprep.subr.mxu0 0.0
    %362 = vmatpush1.msra.mxu0 %v323
    %363 = vmatprep.subr.mxu0 0.0
    %364 = vmatpush1.msra.mxu0 %v324
    %365 = vmatprep.subr.mxu0 0.0
    %366 = vmatpush1.msra.mxu0 0.0
    %367 = vmatprep.subr.mxu0 0.0
    %368 = vmatpush1.msra.mxu0 0.0
    %369 = vmatprep.subr.mxu0 0.0
    %370 = vmatpush1.msra.mxu0 0.0
    %371 = vmatprep.subr.mxu0 0.0
    %372 = vmatpush1.msra.mxu0 0.0
    %373 = vmatprep.subr.mxu0 0.0
    %374 = vmatpush1.msra.mxu0 0.0
    %375 = vmatprep.subr.mxu0 0.0
    %376 = vmatpush1.msra.mxu0 0.0
    %377 = vmatprep.subr.mxu0 0.0
    %378 = vmatpush1.msra.mxu0 0.0
    %379 = vmatprep.subr.mxu0 0.0
    %380 = vmatpush1.msra.mxu0 0.0
    %381 = vmatprep.subr.mxu0 0.0
    %382 = vmatpush1.msra.mxu0 0.0
    %383 = vmatprep.subr.mxu0 0.0
    %384 = vmatpush1.msra.mxu0 0.0
    %385 = vmatprep.subr.mxu0 0.0
    %386 = vmatpush1.msra.mxu0 0.0
    %387 = vmatprep.subr.mxu0 0.0
    %388 = vmatpush1.msra.mxu0 0.0
    %389 = vmatprep.subr.mxu0 0.0
    %390 = vmatpush1.msra.mxu0 0.0
    %391 = vmatprep.subr.mxu0 0.0
    %392 = vmatpush1.msra.mxu0 0.0
    %393 = vmatprep.subr.mxu0 0.0
    %394 = vmatpush1.msra.mxu0 0.0
    %395 = vmatprep.subr.mxu0 0.0
    %396 = vmatpush1.msra.mxu0 0.0
    %397 = vmatprep.subr.mxu0 0.0
    %398 = vmatpush1.msra.mxu0 0.0
    %399 = vmatprep.subr.mxu0 0.0
    %400 = vmatpush1.msra.mxu0 0.0
    %401 = vmatprep.subr.mxu0 0.0
    %402 = vmatpush1.msra.mxu0 0.0
    %403 = vmatprep.subr.mxu0 0.0
    %404 = vmatpush1.msra.mxu0 0.0
    %405 = vmatprep.subr.mxu0 0.0
    %406 = vmatpush1.msra.mxu0 0.0
    %407 = vmatprep.subr.mxu0 0.0
    %408 = vmatpush1.msra.mxu0 0.0
    %409 = vmatprep.subr.mxu0 0.0
    %410 = vmatpush1.msra.mxu0 0.0
    %411 = vmatprep.subr.mxu0 0.0
    %412 = vmatpush1.msra.mxu0 0.0
    %413 = vmatprep.subr.mxu0 0.0
    %414 = vmatpush1.msra.mxu0 0.0
    %415 = vmatprep.subr.mxu0 0.0
    %416 = vmatpush1.msra.mxu0 0.0
    %417 = vmatprep.subr.mxu0 0.0
    %418 = vmatpush1.msra.mxu0 0.0
    %419 = vmatprep.subr.mxu0 0.0
    %420 = vmatpush1.msra.mxu0 0.0
    %421 = vmatprep.mubr.f32.mxu0 0.0
    %422 = vmatmul.mubr.f32.gmra.mrb[0].mxu0 %v334
    %v423 = vpop.f32.mrb[0].mxu0
    %v424 = vadd.f32 %v330, %v423
    %v425 = vpop.f32.mrb[0].mxu0
    %426 = vmatprep.mubr.f32.mxu0 0.0
    %427 = vmatmul.mubr.f32.gmra.mrb[0].mxu0 %v337
    %v428 = vpop.f32.mrb[0].mxu0
    %v429 = vadd.f32 %v330, %v428
    %v430 = vpop.f32.mrb[0].mxu0
    %431 = vmatprep.mubr.f32.mxu0 0.0
    %432 = vmatmul.mubr.f32.gmra.mrb[0].mxu0 %v340
    %v433 = vpop.f32.mrb[0].mxu0
    %v434 = vadd.f32 %v330, %v433
    %v435 = vpop.f32.mrb[0].mxu0
    %436 = vmatprep.mubr.f32.mxu0 0.0
    %437 = vmatmul.mubr.f32.gmra.mrb[0].mxu0 %v343
    %v438 = vpop.f32.mrb[0].mxu0
    %v439 = vadd.f32 %v330, %v438
    %v440 = vpop.f32.mrb[0].mxu0
    %441 = vmatprep.mubr.f32.mxu0 0.0
    %442 = vmatmul.mubr.f32.gmra.mrb[0].mxu0 %v346
    %v443 = vpop.f32.mrb[0].mxu0
    %v444 = vadd.f32 %v330, %v443
    %v445 = vpop.f32.mrb[0].mxu0
    %446 = vmatprep.mubr.f32.mxu0 0.0
    %447 = vmatmul.mubr.f32.gmra.mrb[0].mxu0 %v349
    %v448 = vpop.f32.mrb[0].mxu0
    %v449 = vadd.f32 %v330, %v448
    %v450 = vpop.f32.mrb[0].mxu0
    %451 = vmatprep.mubr.f32.mxu0 0.0
    %452 = vmatmul.mubr.f32.gmra.mrb[0].mxu0 %v352
    %v453 = vpop.f32.mrb[0].mxu0
    %v454 = vadd.f32 %v330, %v453
    %v455 = vpop.f32.mrb[0].mxu0
    %456 = vmatprep.mubr.f32.mxu0 0.0
    %457 = vmatmul.mubr.f32.gmra.mrb[0].mxu0 %v355
    %v458 = vpop.f32.mrb[0].mxu0
    %v459 = vadd.f32 %v330, %v458
    %v460 = vpop.f32.mrb[0].mxu0
    %461 = vdwg.mxu0
    %s462 = scalar_lea.vmem %s2, 32
    %v463 = vld [vmem:[%s462] sm:$0xff]
    %v464 = vld [vmem:[%s462 + $0x8] sm:$0xff]
    %v465 = vld [vmem:[%s462 + $0x10] sm:$0xff]
    %v466 = vld [vmem:[%s462 + $0x18] sm:$0xff]
    %s467 = scalar_lea.vmem [#allocation2], 1
    %v468 = vld [vmem:[%s467] sm:$0x1]
    %v470 = vlaneseq
    %v471 = vshrl.u32 %v470, 7
    %v472 = vsub.s32 0, %v471
    %v473 = vrot.slane %v468, %v472
    %475 = vmatprep.subr.mxu0 0.0
    %476 = vmatpush1.msra.mxu0 %v463
    %477 = vmatprep.subr.mxu0 0.0
    %478 = vmatpush1.msra.mxu0 %v464
    %479 = vmatprep.subr.mxu0 0.0
    %480 = vmatpush1.msra.mxu0 %v465
    %481 = vmatprep.subr.mxu0 0.0
    %482 = vmatpush1.msra.mxu0 %v466
    %483 = vmatprep.subr.mxu0 0.0
    %484 = vmatpush1.msra.mxu0 0.0
    %485 = vmatprep.subr.mxu0 0.0
    %486 = vmatpush1.msra.mxu0 0.0
    %487 = vmatprep.subr.mxu0 0.0
    %488 = vmatpush1.msra.mxu0 0.0
    %489 = vmatprep.subr.mxu0 0.0
    %490 = vmatpush1.msra.mxu0 0.0
    %491 = vmatprep.subr.mxu0 0.0
    %492 = vmatpush1.msra.mxu0 0.0
    %493 = vmatprep.subr.mxu0 0.0
    %494 = vmatpush1.msra.mxu0 0.0
    %495 = vmatprep.subr.mxu0 0.0
    %496 = vmatpush1.msra.mxu0 0.0
    %497 = vmatprep.subr.mxu0 0.0
    %498 = vmatpush1.msra.mxu0 0.0
    %499 = vmatprep.subr.mxu0 0.0
    %500 = vmatpush1.msra.mxu0 0.0
    %501 = vmatprep.subr.mxu0 0.0
    %502 = vmatpush1.msra.mxu0 0.0
    %503 = vmatprep.subr.mxu0 0.0
    %504 = vmatpush1.msra.mxu0 0.0
    %505 = vmatprep.subr.mxu0 0.0
    %506 = vmatpush1.msra.mxu0 0.0
    %507 = vmatprep.subr.mxu0 0.0
    %508 = vmatpush1.msra.mxu0 0.0
    %509 = vmatprep.subr.mxu0 0.0
    %510 = vmatpush1.msra.mxu0 0.0
    %511 = vmatprep.subr.mxu0 0.0
    %512 = vmatpush1.msra.mxu0 0.0
    %513 = vmatprep.subr.mxu0 0.0
    %514 = vmatpush1.msra.mxu0 0.0
    %515 = vmatprep.subr.mxu0 0.0
    %516 = vmatpush1.msra.mxu0 0.0
    %517 = vmatprep.subr.mxu0 0.0
    %518 = vmatpush1.msra.mxu0 0.0
    %519 = vmatprep.subr.mxu0 0.0
    %520 = vmatpush1.msra.mxu0 0.0
    %521 = vmatprep.subr.mxu0 0.0
    %522 = vmatpush1.msra.mxu0 0.0
    %523 = vmatprep.subr.mxu0 0.0
    %524 = vmatpush1.msra.mxu0 0.0
    %525 = vmatprep.subr.mxu0 0.0
    %526 = vmatpush1.msra.mxu0 0.0
    %527 = vmatprep.subr.mxu0 0.0
    %528 = vmatpush1.msra.mxu0 0.0
    %529 = vmatprep.subr.mxu0 0.0
    %530 = vmatpush1.msra.mxu0 0.0
    %531 = vmatprep.subr.mxu0 0.0
    %532 = vmatpush1.msra.mxu0 0.0
    %533 = vmatprep.subr.mxu0 0.0
    %534 = vmatpush1.msra.mxu0 0.0
    %535 = vmatprep.subr.mxu0 0.0
    %536 = vmatpush1.msra.mxu0 0.0
    %537 = vmatprep.subr.mxu0 0.0
    %538 = vmatpush1.msra.mxu0 0.0
    %539 = vmatprep.mubr.f32.mxu0 0.0
    %540 = vmatmul.mubr.f32.gmra.mrb[0].mxu0 %v334
    %v541 = vpop.f32.mrb[0].mxu0
    %v542 = vadd.f32 %v473, %v541
    %v543 = vpop.f32.mrb[0].mxu0
    %544 = vmatprep.mubr.f32.mxu0 0.0
    %545 = vmatmul.mubr.f32.gmra.mrb[0].mxu0 %v337
    %v546 = vpop.f32.mrb[0].mxu0
    %v547 = vadd.f32 %v473, %v546
    %v548 = vpop.f32.mrb[0].mxu0
    %549 = vmatprep.mubr.f32.mxu0 0.0
    %550 = vmatmul.mubr.f32.gmra.mrb[0].mxu0 %v340
    %v551 = vpop.f32.mrb[0].mxu0
    %v552 = vadd.f32 %v473, %v551
    %v553 = vpop.f32.mrb[0].mxu0
    %554 = vmatprep.mubr.f32.mxu0 0.0
    %555 = vmatmul.mubr.f32.gmra.mrb[0].mxu0 %v343
    %v556 = vpop.f32.mrb[0].mxu0
    %v557 = vadd.f32 %v473, %v556
    %v558 = vpop.f32.mrb[0].mxu0
    %559 = vmatprep.mubr.f32.mxu0 0.0
    %560 = vmatmul.mubr.f32.gmra.mrb[0].mxu0 %v346
    %v561 = vpop.f32.mrb[0].mxu0
    %v562 = vadd.f32 %v473, %v561
    %v563 = vpop.f32.mrb[0].mxu0
    %564 = vmatprep.mubr.f32.mxu0 0.0
    %565 = vmatmul.mubr.f32.gmra.mrb[0].mxu0 %v349
    %v566 = vpop.f32.mrb[0].mxu0
    %v567 = vadd.f32 %v473, %v566
    %v568 = vpop.f32.mrb[0].mxu0
    %569 = vmatprep.mubr.f32.mxu0 0.0
    %570 = vmatmul.mubr.f32.gmra.mrb[0].mxu0 %v352
    %v571 = vpop.f32.mrb[0].mxu0
    %v572 = vadd.f32 %v473, %v571
    %v573 = vpop.f32.mrb[0].mxu0
    %574 = vmatprep.mubr.f32.mxu0 0.0
    %575 = vmatmul.mubr.f32.gmra.mrb[0].mxu0 %v355
    %v576 = vpop.f32.mrb[0].mxu0
    %v577 = vadd.f32 %v473, %v576
    %v578 = vpop.f32.mrb[0].mxu0
    %579 = vdwg.mxu0
    %s580 = scalar_lea.vmem %s2, 64
    %v581 = vld [vmem:[%s580] sm:$0xff]
    %v582 = vld [vmem:[%s580 + $0x8] sm:$0xff]
    %v583 = vld [vmem:[%s580 + $0x10] sm:$0xff]
    %v584 = vld [vmem:[%s580 + $0x18] sm:$0xff]
    %s585 = scalar_lea.vmem [#allocation2], 2
    %v586 = vld [vmem:[%s585] sm:$0x1]
    %v588 = vlaneseq
    %v589 = vshrl.u32 %v588, 7
    %v590 = vsub.s32 0, %v589
    %v591 = vrot.slane %v586, %v590
    %593 = vmatprep.subr.mxu0 0.0
    %594 = vmatpush1.msra.mxu0 %v581
    %595 = vmatprep.subr.mxu0 0.0
    %596 = vmatpush1.msra.mxu0 %v582
    %597 = vmatprep.subr.mxu0 0.0
    %598 = vmatpush1.msra.mxu0 %v583
    %599 = vmatprep.subr.mxu0 0.0
    %600 = vmatpush1.msra.mxu0 %v584
    %601 = vmatprep.subr.mxu0 0.0
    %602 = vmatpush1.msra.mxu0 0.0
    %603 = vmatprep.subr.mxu0 0.0
    %604 = vmatpush1.msra.mxu0 0.0
    %605 = vmatprep.subr.mxu0 0.0
    %606 = vmatpush1.msra.mxu0 0.0
    %607 = vmatprep.subr.mxu0 0.0
    %608 = vmatpush1.msra.mxu0 0.0
    %609 = vmatprep.subr.mxu0 0.0
    %610 = vmatpush1.msra.mxu0 0.0
    %611 = vmatprep.subr.mxu0 0.0
    %612 = vmatpush1.msra.mxu0 0.0
    %613 = vmatprep.subr.mxu0 0.0
    %614 = vmatpush1.msra.mxu0 0.0
    %615 = vmatprep.subr.mxu0 0.0
    %616 = vmatpush1.msra.mxu0 0.0
    %617 = vmatprep.subr.mxu0 0.0
    %618 = vmatpush1.msra.mxu0 0.0
    %619 = vmatprep.subr.mxu0 0.0
    %620 = vmatpush1.msra.mxu0 0.0
    %621 = vmatprep.subr.mxu0 0.0
    %622 = vmatpush1.msra.mxu0 0.0
    %623 = vmatprep.subr.mxu0 0.0
    %624 = vmatpush1.msra.mxu0 0.0
    %625 = vmatprep.subr.mxu0 0.0
    %626 = vmatpush1.msra.mxu0 0.0
    %627 = vmatprep.subr.mxu0 0.0
    %628 = vmatpush1.msra.mxu0 0.0
    %629 = vmatprep.subr.mxu0 0.0
    %630 = vmatpush1.msra.mxu0 0.0
    %631 = vmatprep.subr.mxu0 0.0
    %632 = vmatpush1.msra.mxu0 0.0
    %633 = vmatprep.subr.mxu0 0.0
    %634 = vmatpush1.msra.mxu0 0.0
    %635 = vmatprep.subr.mxu0 0.0
    %636 = vmatpush1.msra.mxu0 0.0
    %637 = vmatprep.subr.mxu0 0.0
    %638 = vmatpush1.msra.mxu0 0.0
    %639 = vmatprep.subr.mxu0 0.0
    %640 = vmatpush1.msra.mxu0 0.0
    %641 = vmatprep.subr.mxu0 0.0
    %642 = vmatpush1.msra.mxu0 0.0
    %643 = vmatprep.subr.mxu0 0.0
    %644 = vmatpush1.msra.mxu0 0.0
    %645 = vmatprep.subr.mxu0 0.0
    %646 = vmatpush1.msra.mxu0 0.0
    %647 = vmatprep.subr.mxu0 0.0
    %648 = vmatpush1.msra.mxu0 0.0
    %649 = vmatprep.subr.mxu0 0.0
    %650 = vmatpush1.msra.mxu0 0.0
    %651 = vmatprep.subr.mxu0 0.0
    %652 = vmatpush1.msra.mxu0 0.0
    %653 = vmatprep.subr.mxu0 0.0
    %654 = vmatpush1.msra.mxu0 0.0
    %655 = vmatprep.subr.mxu0 0.0
    %656 = vmatpush1.msra.mxu0 0.0
    %657 = vmatprep.mubr.f32.mxu0 0.0
    %658 = vmatmul.mubr.f32.gmra.mrb[0].mxu0 %v334
    %v659 = vpop.f32.mrb[0].mxu0
    %v660 = vadd.f32 %v591, %v659
    %v661 = vpop.f32.mrb[0].mxu0
    %662 = vmatprep.mubr.f32.mxu0 0.0
    %663 = vmatmul.mubr.f32.gmra.mrb[0].mxu0 %v337
    %v664 = vpop.f32.mrb[0].mxu0
    %v665 = vadd.f32 %v591, %v664
    %v666 = vpop.f32.mrb[0].mxu0
    %667 = vmatprep.mubr.f32.mxu0 0.0
    %668 = vmatmul.mubr.f32.gmra.mrb[0].mxu0 %v340
    %v669 = vpop.f32.mrb[0].mxu0
    %v670 = vadd.f32 %v591, %v669
    %v671 = vpop.f32.mrb[0].mxu0
    %672 = vmatprep.mubr.f32.mxu0 0.0
    %673 = vmatmul.mubr.f32.gmra.mrb[0].mxu0 %v343
    %v674 = vpop.f32.mrb[0].mxu0
    %v675 = vadd.f32 %v591, %v674
    %v676 = vpop.f32.mrb[0].mxu0
    %677 = vmatprep.mubr.f32.mxu0 0.0
    %678 = vmatmul.mubr.f32.gmra.mrb[0].mxu0 %v346
    %v679 = vpop.f32.mrb[0].mxu0
    %v680 = vadd.f32 %v591, %v679
    %v681 = vpop.f32.mrb[0].mxu0
    %682 = vmatprep.mubr.f32.mxu0 0.0
    %683 = vmatmul.mubr.f32.gmra.mrb[0].mxu0 %v349
    %v684 = vpop.f32.mrb[0].mxu0
    %v685 = vadd.f32 %v591, %v684
    %v686 = vpop.f32.mrb[0].mxu0
    %687 = vmatprep.mubr.f32.mxu0 0.0
    %688 = vmatmul.mubr.f32.gmra.mrb[0].mxu0 %v352
    %v689 = vpop.f32.mrb[0].mxu0
    %v690 = vadd.f32 %v591, %v689
    %v691 = vpop.f32.mrb[0].mxu0
    %692 = vmatprep.mubr.f32.mxu0 0.0
    %693 = vmatmul.mubr.f32.gmra.mrb[0].mxu0 %v355
    %v694 = vpop.f32.mrb[0].mxu0
    %v695 = vadd.f32 %v591, %v694
    %v696 = vpop.f32.mrb[0].mxu0
    %697 = vdwg.mxu0
    %v698 = vld [vmem:[%s3] sm:$0xff]
    %v699 = vld [vmem:[%s3 + $0x8] sm:$0xff]
    %v700 = vld [vmem:[%s3 + $0x10] sm:$0xff]
    %v701 = vld [vmem:[%s3 + $0x18] sm:$0xff]
    %s702 = scalar_lea.vmem %s3, 32
    %v703 = vld [vmem:[%s702] sm:$0xff]
    %v704 = vld [vmem:[%s702 + $0x8] sm:$0xff]
    %v705 = vld [vmem:[%s702 + $0x10] sm:$0xff]
    %v706 = vld [vmem:[%s702 + $0x18] sm:$0xff]
    %s707 = scalar_lea.vmem %s3, 64
    %v708 = vld [vmem:[%s707] sm:$0xff]
    %v709 = vld [vmem:[%s707 + $0x8] sm:$0xff]
    %v710 = vld [vmem:[%s707 + $0x10] sm:$0xff]
    %v711 = vld [vmem:[%s707 + $0x18] sm:$0xff]
    %v712 = vld [vmem:[%s5] sm:$0x1]
    %v714 = vlaneseq
    %v715 = vshrl.u32 %v714, 7
    %v716 = vsub.s32 0, %v715
    %v717 = vrot.slane %v712, %v716
    %v720 = vsel %vm332, 0.0, 0
    %722 = vmatprep.subr.mxu0 0.0
    %723 = vmatpush1.msra.mxu0 %v698
    %724 = vmatprep.subr.mxu0 0.0
    %725 = vmatpush1.msra.mxu0 %v699
    %726 = vmatprep.subr.mxu0 0.0
    %727 = vmatpush1.msra.mxu0 %v700
    %728 = vmatprep.subr.mxu0 0.0
    %729 = vmatpush1.msra.mxu0 %v701
    %730 = vmatprep.subr.mxu0 0.0
    %731 = vmatpush1.msra.mxu0 0.0
    %732 = vmatprep.subr.mxu0 0.0
    %733 = vmatpush1.msra.mxu0 0.0
    %734 = vmatprep.subr.mxu0 0.0
    %735 = vmatpush1.msra.mxu0 0.0
    %736 = vmatprep.subr.mxu0 0.0
    %737 = vmatpush1.msra.mxu0 0.0
    %738 = vmatprep.subr.mxu0 0.0
    %739 = vmatpush1.msra.mxu0 0.0
    %740 = vmatprep.subr.mxu0 0.0
    %741 = vmatpush1.msra.mxu0 0.0
    %742 = vmatprep.subr.mxu0 0.0
    %743 = vmatpush1.msra.mxu0 0.0
    %744 = vmatprep.subr.mxu0 0.0
    %745 = vmatpush1.msra.mxu0 0.0
    %746 = vmatprep.subr.mxu0 0.0
    %747 = vmatpush1.msra.mxu0 0.0
    %748 = vmatprep.subr.mxu0 0.0
    %749 = vmatpush1.msra.mxu0 0.0
    %750 = vmatprep.subr.mxu0 0.0
    %751 = vmatpush1.msra.mxu0 0.0
    %752 = vmatprep.subr.mxu0 0.0
    %753 = vmatpush1.msra.mxu0 0.0
    %754 = vmatprep.subr.mxu0 0.0
    %755 = vmatpush1.msra.mxu0 0.0
    %756 = vmatprep.subr.mxu0 0.0
    %757 = vmatpush1.msra.mxu0 0.0
    %758 = vmatprep.subr.mxu0 0.0
    %759 = vmatpush1.msra.mxu0 0.0
    %760 = vmatprep.subr.mxu0 0.0
    %761 = vmatpush1.msra.mxu0 0.0
    %762 = vmatprep.subr.mxu0 0.0
    %763 = vmatpush1.msra.mxu0 0.0
    %764 = vmatprep.subr.mxu0 0.0
    %765 = vmatpush1.msra.mxu0 0.0
    %766 = vmatprep.subr.mxu0 0.0
    %767 = vmatpush1.msra.mxu0 0.0
    %768 = vmatprep.subr.mxu0 0.0
    %769 = vmatpush1.msra.mxu0 0.0
    %770 = vmatprep.subr.mxu0 0.0
    %771 = vmatpush1.msra.mxu0 0.0
    %772 = vmatprep.subr.mxu0 0.0
    %773 = vmatpush1.msra.mxu0 0.0
    %774 = vmatprep.subr.mxu0 0.0
    %775 = vmatpush1.msra.mxu0 0.0
    %776 = vmatprep.subr.mxu0 0.0
    %777 = vmatpush1.msra.mxu0 0.0
    %778 = vmatprep.subr.mxu0 0.0
    %779 = vmatpush1.msra.mxu0 0.0
    %780 = vmatprep.subr.mxu0 0.0
    %781 = vmatpush1.msra.mxu0 0.0
    %782 = vmatprep.subr.mxu0 0.0
    %783 = vmatpush1.msra.mxu0 0.0
    %784 = vmatprep.subr.mxu0 0.0
    %785 = vmatpush1.msra.mxu0 0.0
    %786 = vmatprep.mubr.f32.mxu0 0.0
    %787 = vmatmul.mubr.f32.gmra.mrb[0].mxu0 %v720
    %v788 = vpop.f32.mrb[0].mxu0
    %v789 = vadd.f32 0.0, %v788
    %v790 = vpop.f32.mrb[0].mxu0
    %791 = vdwg.mxu0
    %792 = vmatprep.subr.mxu0 0.0
    %793 = vmatpush1.msra.mxu0 %v703
    %794 = vmatprep.subr.mxu0 0.0
    %795 = vmatpush1.msra.mxu0 %v704
    %796 = vmatprep.subr.mxu0 0.0
    %797 = vmatpush1.msra.mxu0 %v705
    %798 = vmatprep.subr.mxu0 0.0
    %799 = vmatpush1.msra.mxu0 %v706
    %800 = vmatprep.subr.mxu0 0.0
    %801 = vmatpush1.msra.mxu0 0.0
    %802 = vmatprep.subr.mxu0 0.0
    %803 = vmatpush1.msra.mxu0 0.0
    %804 = vmatprep.subr.mxu0 0.0
    %805 = vmatpush1.msra.mxu0 0.0
    %806 = vmatprep.subr.mxu0 0.0
    %807 = vmatpush1.msra.mxu0 0.0
    %808 = vmatprep.subr.mxu0 0.0
    %809 = vmatpush1.msra.mxu0 0.0
    %810 = vmatprep.subr.mxu0 0.0
    %811 = vmatpush1.msra.mxu0 0.0
    %812 = vmatprep.subr.mxu0 0.0
    %813 = vmatpush1.msra.mxu0 0.0
    %814 = vmatprep.subr.mxu0 0.0
    %815 = vmatpush1.msra.mxu0 0.0
    %816 = vmatprep.subr.mxu0 0.0
    %817 = vmatpush1.msra.mxu0 0.0
    %818 = vmatprep.subr.mxu0 0.0
    %819 = vmatpush1.msra.mxu0 0.0
    %820 = vmatprep.subr.mxu0 0.0
    %821 = vmatpush1.msra.mxu0 0.0
    %822 = vmatprep.subr.mxu0 0.0
    %823 = vmatpush1.msra.mxu0 0.0
    %824 = vmatprep.subr.mxu0 0.0
    %825 = vmatpush1.msra.mxu0 0.0
    %826 = vmatprep.subr.mxu0 0.0
    %827 = vmatpush1.msra.mxu0 0.0
    %828 = vmatprep.subr.mxu0 0.0
    %829 = vmatpush1.msra.mxu0 0.0
    %830 = vmatprep.subr.mxu0 0.0
    %831 = vmatpush1.msra.mxu0 0.0
    %832 = vmatprep.subr.mxu0 0.0
    %833 = vmatpush1.msra.mxu0 0.0
    %834 = vmatprep.subr.mxu0 0.0
    %835 = vmatpush1.msra.mxu0 0.0
    %836 = vmatprep.subr.mxu0 0.0
    %837 = vmatpush1.msra.mxu0 0.0
    %838 = vmatprep.subr.mxu0 0.0
    %839 = vmatpush1.msra.mxu0 0.0
    %840 = vmatprep.subr.mxu0 0.0
    %841 = vmatpush1.msra.mxu0 0.0
    %842 = vmatprep.subr.mxu0 0.0
    %843 = vmatpush1.msra.mxu0 0.0
    %844 = vmatprep.subr.mxu0 0.0
    %845 = vmatpush1.msra.mxu0 0.0
    %846 = vmatprep.subr.mxu0 0.0
    %847 = vmatpush1.msra.mxu0 0.0
    %848 = vmatprep.subr.mxu0 0.0
    %849 = vmatpush1.msra.mxu0 0.0
    %850 = vmatprep.subr.mxu0 0.0
    %851 = vmatpush1.msra.mxu0 0.0
    %852 = vmatprep.subr.mxu0 0.0
    %853 = vmatpush1.msra.mxu0 0.0
    %854 = vmatprep.subr.mxu0 0.0
    %855 = vmatpush1.msra.mxu0 0.0
    %856 = vmatprep.mubr.f32.mxu0 0.0
    %857 = vmatmul.mubr.f32.gmra.mrb[0].mxu0 %v720
    %v858 = vpop.f32.mrb[0].mxu0
    %v859 = vadd.f32 0.0, %v858
    %v860 = vpop.f32.mrb[0].mxu0
    %861 = vdwg.mxu0
    %v862 = vadd.f32 %v424, %v789
    %v863 = vxor.u32 %v862, 2147483648
    %v864 = vmul.f32 %v863, 1.442695
    %v865 = vpow.pop %v864
    %v866 = vadd.f32 %v865, 1.0
    %v867 = vrcp.pop %v866
    %v868 = vmul.f32 1.0, %v867
    %v869 = vadd.f32 %v542, %v859
    %v870 = vxor.u32 %v869, 2147483648
    %v871 = vmul.f32 %v870, 1.442695
    %v872 = vpow.pop %v871
    %v873 = vadd.f32 %v872, 1.0
    %v874 = vrcp.pop %v873
    %v875 = vmul.f32 1.0, %v874
    %876 = vmatprep.subr.mxu0 0.0
    %877 = vmatpush1.msra.mxu0 %v708
    %878 = vmatprep.subr.mxu0 0.0
    %879 = vmatpush1.msra.mxu0 %v709
    %880 = vmatprep.subr.mxu0 0.0
    %881 = vmatpush1.msra.mxu0 %v710
    %882 = vmatprep.subr.mxu0 0.0
    %883 = vmatpush1.msra.mxu0 %v711
    %884 = vmatprep.subr.mxu0 0.0
    %885 = vmatpush1.msra.mxu0 0.0
    %886 = vmatprep.subr.mxu0 0.0
    %887 = vmatpush1.msra.mxu0 0.0
    %888 = vmatprep.subr.mxu0 0.0
    %889 = vmatpush1.msra.mxu0 0.0
    %890 = vmatprep.subr.mxu0 0.0
    %891 = vmatpush1.msra.mxu0 0.0
    %892 = vmatprep.subr.mxu0 0.0
    %893 = vmatpush1.msra.mxu0 0.0
    %894 = vmatprep.subr.mxu0 0.0
    %895 = vmatpush1.msra.mxu0 0.0
    %896 = vmatprep.subr.mxu0 0.0
    %897 = vmatpush1.msra.mxu0 0.0
    %898 = vmatprep.subr.mxu0 0.0
    %899 = vmatpush1.msra.mxu0 0.0
    %900 = vmatprep.subr.mxu0 0.0
    %901 = vmatpush1.msra.mxu0 0.0
    %902 = vmatprep.subr.mxu0 0.0
    %903 = vmatpush1.msra.mxu0 0.0
    %904 = vmatprep.subr.mxu0 0.0
    %905 = vmatpush1.msra.mxu0 0.0
    %906 = vmatprep.subr.mxu0 0.0
    %907 = vmatpush1.msra.mxu0 0.0
    %908 = vmatprep.subr.mxu0 0.0
    %909 = vmatpush1.msra.mxu0 0.0
    %910 = vmatprep.subr.mxu0 0.0
    %911 = vmatpush1.msra.mxu0 0.0
    %912 = vmatprep.subr.mxu0 0.0
    %913 = vmatpush1.msra.mxu0 0.0
    %914 = vmatprep.subr.mxu0 0.0
    %915 = vmatpush1.msra.mxu0 0.0
    %916 = vmatprep.subr.mxu0 0.0
    %917 = vmatpush1.msra.mxu0 0.0
    %918 = vmatprep.subr.mxu0 0.0
    %919 = vmatpush1.msra.mxu0 0.0
    %920 = vmatprep.subr.mxu0 0.0
    %921 = vmatpush1.msra.mxu0 0.0
    %922 = vmatprep.subr.mxu0 0.0
    %923 = vmatpush1.msra.mxu0 0.0
    %924 = vmatprep.subr.mxu0 0.0
    %925 = vmatpush1.msra.mxu0 0.0
    %926 = vmatprep.subr.mxu0 0.0
    %927 = vmatpush1.msra.mxu0 0.0
    %928 = vmatprep.subr.mxu0 0.0
    %929 = vmatpush1.msra.mxu0 0.0
    %930 = vmatprep.subr.mxu0 0.0
    %931 = vmatpush1.msra.mxu0 0.0
    %932 = vmatprep.subr.mxu0 0.0
    %933 = vmatpush1.msra.mxu0 0.0
    %934 = vmatprep.subr.mxu0 0.0
    %935 = vmatpush1.msra.mxu0 0.0
    %936 = vmatprep.subr.mxu0 0.0
    %937 = vmatpush1.msra.mxu0 0.0
    %938 = vmatprep.subr.mxu0 0.0
    %939 = vmatpush1.msra.mxu0 0.0
    %940 = vmatprep.mubr.f32.mxu0 0.0
    %941 = vmatmul.mubr.f32.gmra.mrb[0].mxu0 %v720
    %v942 = vpop.f32.mrb[0].mxu0
    %v943 = vadd.f32 %v717, %v942
    %v944 = vpop.f32.mrb[0].mxu0
    %945 = vdwg.mxu0
    %v946 = vmul.f32 %v868, %v943
    %v947 = vadd.f32 %v660, %v946
    %v948 = vtanh.pop %v947
    %v949 = vsub.f32 1.0, %v875
    %v950 = vmul.f32 %v949, %v948
    %v951 = vmul.f32 %v875, 0.0
    %v952 = vadd.f32 %v950, %v951
    %v954 = vsel %vm332, %v952, 0
    %956 = vmatprep.subr.mxu0 0.0
    %957 = vmatpush1.msra.mxu0 %v698
    %958 = vmatprep.subr.mxu0 0.0
    %959 = vmatpush1.msra.mxu0 %v699
    %960 = vmatprep.subr.mxu0 0.0
    %961 = vmatpush1.msra.mxu0 %v700
    %962 = vmatprep.subr.mxu0 0.0
    %963 = vmatpush1.msra.mxu0 %v701
    %964 = vmatprep.subr.mxu0 0.0
    %965 = vmatpush1.msra.mxu0 0.0
    %966 = vmatprep.subr.mxu0 0.0
    %967 = vmatpush1.msra.mxu0 0.0
    %968 = vmatprep.subr.mxu0 0.0
    %969 = vmatpush1.msra.mxu0 0.0
    %970 = vmatprep.subr.mxu0 0.0
    %971 = vmatpush1.msra.mxu0 0.0
    %972 = vmatprep.subr.mxu0 0.0
    %973 = vmatpush1.msra.mxu0 0.0
    %974 = vmatprep.subr.mxu0 0.0
    %975 = vmatpush1.msra.mxu0 0.0
    %976 = vmatprep.subr.mxu0 0.0
    %977 = vmatpush1.msra.mxu0 0.0
    %978 = vmatprep.subr.mxu0 0.0
    %979 = vmatpush1.msra.mxu0 0.0
    %980 = vmatprep.subr.mxu0 0.0
    %981 = vmatpush1.msra.mxu0 0.0
    %982 = vmatprep.subr.mxu0 0.0
    %983 = vmatpush1.msra.mxu0 0.0
    %984 = vmatprep.subr.mxu0 0.0
    %985 = vmatpush1.msra.mxu0 0.0
    %986 = vmatprep.subr.mxu0 0.0
    %987 = vmatpush1.msra.mxu0 0.0
    %988 = vmatprep.subr.mxu0 0.0
    %989 = vmatpush1.msra.mxu0 0.0
    %990 = vmatprep.subr.mxu0 0.0
    %991 = vmatpush1.msra.mxu0 0.0
    %992 = vmatprep.subr.mxu0 0.0
    %993 = vmatpush1.msra.mxu0 0.0
    %994 = vmatprep.subr.mxu0 0.0
    %995 = vmatpush1.msra.mxu0 0.0
    %996 = vmatprep.subr.mxu0 0.0
    %997 = vmatpush1.msra.mxu0 0.0
    %998 = vmatprep.subr.mxu0 0.0
    %999 = vmatpush1.msra.mxu0 0.0
    %1000 = vmatprep.subr.mxu0 0.0
    %1001 = vmatpush1.msra.mxu0 0.0
    %1002 = vmatprep.subr.mxu0 0.0
    %1003 = vmatpush1.msra.mxu0 0.0
    %1004 = vmatprep.subr.mxu0 0.0
    %1005 = vmatpush1.msra.mxu0 0.0
    %1006 = vmatprep.subr.mxu0 0.0
    %1007 = vmatpush1.msra.mxu0 0.0
    %1008 = vmatprep.subr.mxu0 0.0
    %1009 = vmatpush1.msra.mxu0 0.0
    %1010 = vmatprep.subr.mxu0 0.0
    %1011 = vmatpush1.msra.mxu0 0.0
    %1012 = vmatprep.subr.mxu0 0.0
    %1013 = vmatpush1.msra.mxu0 0.0
    %1014 = vmatprep.subr.mxu0 0.0
    %1015 = vmatpush1.msra.mxu0 0.0
    %1016 = vmatprep.subr.mxu0 0.0
    %1017 = vmatpush1.msra.mxu0 0.0
    %1018 = vmatprep.subr.mxu0 0.0
    %1019 = vmatpush1.msra.mxu0 0.0
    %1020 = vmatprep.mubr.f32.mxu0 0.0
    %1021 = vmatmul.mubr.f32.gmra.mrb[0].mxu0 %v954
    %v1022 = vpop.f32.mrb[0].mxu0
    %v1023 = vadd.f32 0.0, %v1022
    %v1024 = vpop.f32.mrb[0].mxu0
    %1025 = vdwg.mxu0
    %1026 = vmatprep.subr.mxu0 0.0
    %1027 = vmatpush1.msra.mxu0 %v703
    %1028 = vmatprep.subr.mxu0 0.0
    %1029 = vmatpush1.msra.mxu0 %v704
    %1030 = vmatprep.subr.mxu0 0.0
    %1031 = vmatpush1.msra.mxu0 %v705
    %1032 = vmatprep.subr.mxu0 0.0
    %1033 = vmatpush1.msra.mxu0 %v706
    %1034 = vmatprep.subr.mxu0 0.0
    %1035 = vmatpush1.msra.mxu0 0.0
    %1036 = vmatprep.subr.mxu0 0.0
    %1037 = vmatpush1.msra.mxu0 0.0
    %1038 = vmatprep.subr.mxu0 0.0
    %1039 = vmatpush1.msra.mxu0 0.0
    %1040 = vmatprep.subr.mxu0 0.0
    %1041 = vmatpush1.msra.mxu0 0.0
    %1042 = vmatprep.subr.mxu0 0.0
    %1043 = vmatpush1.msra.mxu0 0.0
    %1044 = vmatprep.subr.mxu0 0.0
    %1045 = vmatpush1.msra.mxu0 0.0
    %1046 = vmatprep.subr.mxu0 0.0
    %1047 = vmatpush1.msra.mxu0 0.0
    %1048 = vmatprep.subr.mxu0 0.0
    %1049 = vmatpush1.msra.mxu0 0.0
    %1050 = vmatprep.subr.mxu0 0.0
    %1051 = vmatpush1.msra.mxu0 0.0
    %1052 = vmatprep.subr.mxu0 0.0
    %1053 = vmatpush1.msra.mxu0 0.0
    %1054 = vmatprep.subr.mxu0 0.0
    %1055 = vmatpush1.msra.mxu0 0.0
    %1056 = vmatprep.subr.mxu0 0.0
    %1057 = vmatpush1.msra.mxu0 0.0
    %1058 = vmatprep.subr.mxu0 0.0
    %1059 = vmatpush1.msra.mxu0 0.0
    %1060 = vmatprep.subr.mxu0 0.0
    %1061 = vmatpush1.msra.mxu0 0.0
    %1062 = vmatprep.subr.mxu0 0.0
    %1063 = vmatpush1.msra.mxu0 0.0
    %1064 = vmatprep.subr.mxu0 0.0
    %1065 = vmatpush1.msra.mxu0 0.0
    %1066 = vmatprep.subr.mxu0 0.0
    %1067 = vmatpush1.msra.mxu0 0.0
    %1068 = vmatprep.subr.mxu0 0.0
    %1069 = vmatpush1.msra.mxu0 0.0
    %1070 = vmatprep.subr.mxu0 0.0
    %1071 = vmatpush1.msra.mxu0 0.0
    %1072 = vmatprep.subr.mxu0 0.0
    %1073 = vmatpush1.msra.mxu0 0.0
    %1074 = vmatprep.subr.mxu0 0.0
    %1075 = vmatpush1.msra.mxu0 0.0
    %1076 = vmatprep.subr.mxu0 0.0
    %1077 = vmatpush1.msra.mxu0 0.0
    %1078 = vmatprep.subr.mxu0 0.0
    %1079 = vmatpush1.msra.mxu0 0.0
    %1080 = vmatprep.subr.mxu0 0.0
    %1081 = vmatpush1.msra.mxu0 0.0
    %1082 = vmatprep.subr.mxu0 0.0
    %1083 = vmatpush1.msra.mxu0 0.0
    %1084 = vmatprep.subr.mxu0 0.0
    %1085 = vmatpush1.msra.mxu0 0.0
    %1086 = vmatprep.subr.mxu0 0.0
    %1087 = vmatpush1.msra.mxu0 0.0
    %1088 = vmatprep.subr.mxu0 0.0
    %1089 = vmatpush1.msra.mxu0 0.0
    %1090 = vmatprep.mubr.f32.mxu0 0.0
    %1091 = vmatmul.mubr.f32.gmra.mrb[0].mxu0 %v954
    %v1092 = vpop.f32.mrb[0].mxu0
    %v1093 = vadd.f32 0.0, %v1092
    %v1094 = vpop.f32.mrb[0].mxu0
    %1095 = vdwg.mxu0
    %v1096 = vadd.f32 %v429, %v1023
    %v1097 = vxor.u32 %v1096, 2147483648
    %v1098 = vmul.f32 %v1097, 1.442695
    %v1099 = vpow.pop %v1098
    %v1100 = vadd.f32 %v1099, 1.0
    %v1101 = vrcp.pop %v1100
    %v1102 = vmul.f32 1.0, %v1101
    %v1103 = vadd.f32 %v547, %v1093
    %v1104 = vxor.u32 %v1103, 2147483648
    %v1105 = vmul.f32 %v1104, 1.442695
    %v1106 = vpow.pop %v1105
    %v1107 = vadd.f32 %v1106, 1.0
    %v1108 = vrcp.pop %v1107
    %v1109 = vmul.f32 1.0, %v1108
    %1110 = vmatprep.subr.mxu0 0.0
    %1111 = vmatpush1.msra.mxu0 %v708
    %1112 = vmatprep.subr.mxu0 0.0
    %1113 = vmatpush1.msra.mxu0 %v709
    %1114 = vmatprep.subr.mxu0 0.0
    %1115 = vmatpush1.msra.mxu0 %v710
    %1116 = vmatprep.subr.mxu0 0.0
    %1117 = vmatpush1.msra.mxu0 %v711
    %1118 = vmatprep.subr.mxu0 0.0
    %1119 = vmatpush1.msra.mxu0 0.0
    %1120 = vmatprep.subr.mxu0 0.0
    %1121 = vmatpush1.msra.mxu0 0.0
    %1122 = vmatprep.subr.mxu0 0.0
    %1123 = vmatpush1.msra.mxu0 0.0
    %1124 = vmatprep.subr.mxu0 0.0
    %1125 = vmatpush1.msra.mxu0 0.0
    %1126 = vmatprep.subr.mxu0 0.0
    %1127 = vmatpush1.msra.mxu0 0.0
    %1128 = vmatprep.subr.mxu0 0.0
    %1129 = vmatpush1.msra.mxu0 0.0
    %1130 = vmatprep.subr.mxu0 0.0
    %1131 = vmatpush1.msra.mxu0 0.0
    %1132 = vmatprep.subr.mxu0 0.0
    %1133 = vmatpush1.msra.mxu0 0.0
    %1134 = vmatprep.subr.mxu0 0.0
    %1135 = vmatpush1.msra.mxu0 0.0
    %1136 = vmatprep.subr.mxu0 0.0
    %1137 = vmatpush1.msra.mxu0 0.0
    %1138 = vmatprep.subr.mxu0 0.0
    %1139 = vmatpush1.msra.mxu0 0.0
    %1140 = vmatprep.subr.mxu0 0.0
    %1141 = vmatpush1.msra.mxu0 0.0
    %1142 = vmatprep.subr.mxu0 0.0
    %1143 = vmatpush1.msra.mxu0 0.0
    %1144 = vmatprep.subr.mxu0 0.0
    %1145 = vmatpush1.msra.mxu0 0.0
    %1146 = vmatprep.subr.mxu0 0.0
    %1147 = vmatpush1.msra.mxu0 0.0
    %1148 = vmatprep.subr.mxu0 0.0
    %1149 = vmatpush1.msra.mxu0 0.0
    %1150 = vmatprep.subr.mxu0 0.0
    %1151 = vmatpush1.msra.mxu0 0.0
    %1152 = vmatprep.subr.mxu0 0.0
    %1153 = vmatpush1.msra.mxu0 0.0
    %1154 = vmatprep.subr.mxu0 0.0
    %1155 = vmatpush1.msra.mxu0 0.0
    %1156 = vmatprep.subr.mxu0 0.0
    %1157 = vmatpush1.msra.mxu0 0.0
    %1158 = vmatprep.subr.mxu0 0.0
    %1159 = vmatpush1.msra.mxu0 0.0
    %1160 = vmatprep.subr.mxu0 0.0
    %1161 = vmatpush1.msra.mxu0 0.0
    %1162 = vmatprep.subr.mxu0 0.0
    %1163 = vmatpush1.msra.mxu0 0.0
    %1164 = vmatprep.subr.mxu0 0.0
    %1165 = vmatpush1.msra.mxu0 0.0
    %1166 = vmatprep.subr.mxu0 0.0
    %1167 = vmatpush1.msra.mxu0 0.0
    %1168 = vmatprep.subr.mxu0 0.0
    %1169 = vmatpush1.msra.mxu0 0.0
    %1170 = vmatprep.subr.mxu0 0.0
    %1171 = vmatpush1.msra.mxu0 0.0
    %1172 = vmatprep.subr.mxu0 0.0
    %1173 = vmatpush1.msra.mxu0 0.0
    %1174 = vmatprep.mubr.f32.mxu0 0.0
    %1175 = vmatmul.mubr.f32.gmra.mrb[0].mxu0 %v954
    %v1176 = vpop.f32.mrb[0].mxu0
    %v1177 = vadd.f32 %v717, %v1176
    %v1178 = vpop.f32.mrb[0].mxu0
    %1179 = vdwg.mxu0
    %v1180 = vmul.f32 %v1102, %v1177
    %v1181 = vadd.f32 %v665, %v1180
    %v1182 = vtanh.pop %v1181
    %v1183 = vsub.f32 1.0, %v1109
    %v1184 = vmul.f32 %v1183, %v1182
    %v1185 = vmul.f32 %v1109, %v952
    %v1186 = vadd.f32 %v1184, %v1185
    %v1188 = vsel %vm332, %v1186, 0
    %1190 = vmatprep.subr.mxu0 0.0
    %1191 = vmatpush1.msra.mxu0 %v698
    %1192 = vmatprep.subr.mxu0 0.0
    %1193 = vmatpush1.msra.mxu0 %v699
    %1194 = vmatprep.subr.mxu0 0.0
    %1195 = vmatpush1.msra.mxu0 %v700
    %1196 = vmatprep.subr.mxu0 0.0
    %1197 = vmatpush1.msra.mxu0 %v701
    %1198 = vmatprep.subr.mxu0 0.0
    %1199 = vmatpush1.msra.mxu0 0.0
    %1200 = vmatprep.subr.mxu0 0.0
    %1201 = vmatpush1.msra.mxu0 0.0
    %1202 = vmatprep.subr.mxu0 0.0
    %1203 = vmatpush1.msra.mxu0 0.0
    %1204 = vmatprep.subr.mxu0 0.0
    %1205 = vmatpush1.msra.mxu0 0.0
    %1206 = vmatprep.subr.mxu0 0.0
    %1207 = vmatpush1.msra.mxu0 0.0
    %1208 = vmatprep.subr.mxu0 0.0
    %1209 = vmatpush1.msra.mxu0 0.0
    %1210 = vmatprep.subr.mxu0 0.0
    %1211 = vmatpush1.msra.mxu0 0.0
    %1212 = vmatprep.subr.mxu0 0.0
    %1213 = vmatpush1.msra.mxu0 0.0
    %1214 = vmatprep.subr.mxu0 0.0
    %1215 = vmatpush1.msra.mxu0 0.0
    %1216 = vmatprep.subr.mxu0 0.0
    %1217 = vmatpush1.msra.mxu0 0.0
    %1218 = vmatprep.subr.mxu0 0.0
    %1219 = vmatpush1.msra.mxu0 0.0
    %1220 = vmatprep.subr.mxu0 0.0
    %1221 = vmatpush1.msra.mxu0 0.0
    %1222 = vmatprep.subr.mxu0 0.0
    %1223 = vmatpush1.msra.mxu0 0.0
    %1224 = vmatprep.subr.mxu0 0.0
    %1225 = vmatpush1.msra.mxu0 0.0
    %1226 = vmatprep.subr.mxu0 0.0
    %1227 = vmatpush1.msra.mxu0 0.0
    %1228 = vmatprep.subr.mxu0 0.0
    %1229 = vmatpush1.msra.mxu0 0.0
    %1230 = vmatprep.subr.mxu0 0.0
    %1231 = vmatpush1.msra.mxu0 0.0
    %1232 = vmatprep.subr.mxu0 0.0
    %1233 = vmatpush1.msra.mxu0 0.0
    %1234 = vmatprep.subr.mxu0 0.0
    %1235 = vmatpush1.msra.mxu0 0.0
    %1236 = vmatprep.subr.mxu0 0.0
    %1237 = vmatpush1.msra.mxu0 0.0
    %1238 = vmatprep.subr.mxu0 0.0
    %1239 = vmatpush1.msra.mxu0 0.0
    %1240 = vmatprep.subr.mxu0 0.0
    %1241 = vmatpush1.msra.mxu0 0.0
    %1242 = vmatprep.subr.mxu0 0.0
    %1243 = vmatpush1.msra.mxu0 0.0
    %1244 = vmatprep.subr.mxu0 0.0
    %1245 = vmatpush1.msra.mxu0 0.0
    %1246 = vmatprep.subr.mxu0 0.0
    %1247 = vmatpush1.msra.mxu0 0.0
    %1248 = vmatprep.subr.mxu0 0.0
    %1249 = vmatpush1.msra.mxu0 0.0
    %1250 = vmatprep.subr.mxu0 0.0
    %1251 = vmatpush1.msra.mxu0 0.0
    %1252 = vmatprep.subr.mxu0 0.0
    %1253 = vmatpush1.msra.mxu0 0.0
    %1254 = vmatprep.mubr.f32.mxu0 0.0
    %1255 = vmatmul.mubr.f32.gmra.mrb[0].mxu0 %v1188
    %v1256 = vpop.f32.mrb[0].mxu0
    %v1257 = vadd.f32 0.0, %v1256
    %v1258 = vpop.f32.mrb[0].mxu0
    %1259 = vdwg.mxu0
    %1260 = vmatprep.subr.mxu0 0.0
    %1261 = vmatpush1.msra.mxu0 %v703
    %1262 = vmatprep.subr.mxu0 0.0
    %1263 = vmatpush1.msra.mxu0 %v704
    %1264 = vmatprep.subr.mxu0 0.0
    %1265 = vmatpush1.msra.mxu0 %v705
    %1266 = vmatprep.subr.mxu0 0.0
    %1267 = vmatpush1.msra.mxu0 %v706
    %1268 = vmatprep.subr.mxu0 0.0
    %1269 = vmatpush1.msra.mxu0 0.0
    %1270 = vmatprep.subr.mxu0 0.0
    %1271 = vmatpush1.msra.mxu0 0.0
    %1272 = vmatprep.subr.mxu0 0.0
    %1273 = vmatpush1.msra.mxu0 0.0
    %1274 = vmatprep.subr.mxu0 0.0
    %1275 = vmatpush1.msra.mxu0 0.0
    %1276 = vmatprep.subr.mxu0 0.0
    %1277 = vmatpush1.msra.mxu0 0.0
    %1278 = vmatprep.subr.mxu0 0.0
    %1279 = vmatpush1.msra.mxu0 0.0
    %1280 = vmatprep.subr.mxu0 0.0
    %1281 = vmatpush1.msra.mxu0 0.0
    %1282 = vmatprep.subr.mxu0 0.0
    %1283 = vmatpush1.msra.mxu0 0.0
    %1284 = vmatprep.subr.mxu0 0.0
    %1285 = vmatpush1.msra.mxu0 0.0
    %1286 = vmatprep.subr.mxu0 0.0
    %1287 = vmatpush1.msra.mxu0 0.0
    %1288 = vmatprep.subr.mxu0 0.0
    %1289 = vmatpush1.msra.mxu0 0.0
    %1290 = vmatprep.subr.mxu0 0.0
    %1291 = vmatpush1.msra.mxu0 0.0
    %1292 = vmatprep.subr.mxu0 0.0
    %1293 = vmatpush1.msra.mxu0 0.0
    %1294 = vmatprep.subr.mxu0 0.0
    %1295 = vmatpush1.msra.mxu0 0.0
    %1296 = vmatprep.subr.mxu0 0.0
    %1297 = vmatpush1.msra.mxu0 0.0
    %1298 = vmatprep.subr.mxu0 0.0
    %1299 = vmatpush1.msra.mxu0 0.0
    %1300 = vmatprep.subr.mxu0 0.0
    %1301 = vmatpush1.msra.mxu0 0.0
    %1302 = vmatprep.subr.mxu0 0.0
    %1303 = vmatpush1.msra.mxu0 0.0
    %1304 = vmatprep.subr.mxu0 0.0
    %1305 = vmatpush1.msra.mxu0 0.0
    %1306 = vmatprep.subr.mxu0 0.0
    %1307 = vmatpush1.msra.mxu0 0.0
    %1308 = vmatprep.subr.mxu0 0.0
    %1309 = vmatpush1.msra.mxu0 0.0
    %1310 = vmatprep.subr.mxu0 0.0
    %1311 = vmatpush1.msra.mxu0 0.0
    %1312 = vmatprep.subr.mxu0 0.0
    %1313 = vmatpush1.msra.mxu0 0.0
    %1314 = vmatprep.subr.mxu0 0.0
    %1315 = vmatpush1.msra.mxu0 0.0
    %1316 = vmatprep.subr.mxu0 0.0
    %1317 = vmatpush1.msra.mxu0 0.0
    %1318 = vmatprep.subr.mxu0 0.0
    %1319 = vmatpush1.msra.mxu0 0.0
    %1320 = vmatprep.subr.mxu0 0.0
    %1321 = vmatpush1.msra.mxu0 0.0
    %1322 = vmatprep.subr.mxu0 0.0
    %1323 = vmatpush1.msra.mxu0 0.0
    %1324 = vmatprep.mubr.f32.mxu0 0.0
    %1325 = vmatmul.mubr.f32.gmra.mrb[0].mxu0 %v1188
    %v1326 = vpop.f32.mrb[0].mxu0
    %v1327 = vadd.f32 0.0, %v1326
    %v1328 = vpop.f32.mrb[0].mxu0
    %1329 = vdwg.mxu0
    %v1330 = vadd.f32 %v434, %v1257
    %v1331 = vxor.u32 %v1330, 2147483648
    %v1332 = vmul.f32 %v1331, 1.442695
    %v1333 = vpow.pop %v1332
    %v1334 = vadd.f32 %v1333, 1.0
    %v1335 = vrcp.pop %v1334
    %v1336 = vmul.f32 1.0, %v1335
    %v1337 = vadd.f32 %v552, %v1327
    %v1338 = vxor.u32 %v1337, 2147483648
    %v1339 = vmul.f32 %v1338, 1.442695
    %v1340 = vpow.pop %v1339
    %v1341 = vadd.f32 %v1340, 1.0
    %v1342 = vrcp.pop %v1341
    %v1343 = vmul.f32 1.0, %v1342
    %1344 = vmatprep.subr.mxu0 0.0
    %1345 = vmatpush1.msra.mxu0 %v708
    %1346 = vmatprep.subr.mxu0 0.0
    %1347 = vmatpush1.msra.mxu0 %v709
    %1348 = vmatprep.subr.mxu0 0.0
    %1349 = vmatpush1.msra.mxu0 %v710
    %1350 = vmatprep.subr.mxu0 0.0
    %1351 = vmatpush1.msra.mxu0 %v711
    %1352 = vmatprep.subr.mxu0 0.0
    %1353 = vmatpush1.msra.mxu0 0.0
    %1354 = vmatprep.subr.mxu0 0.0
    %1355 = vmatpush1.msra.mxu0 0.0
    %1356 = vmatprep.subr.mxu0 0.0
    %1357 = vmatpush1.msra.mxu0 0.0
    %1358 = vmatprep.subr.mxu0 0.0
    %1359 = vmatpush1.msra.mxu0 0.0
    %1360 = vmatprep.subr.mxu0 0.0
    %1361 = vmatpush1.msra.mxu0 0.0
    %1362 = vmatprep.subr.mxu0 0.0
    %1363 = vmatpush1.msra.mxu0 0.0
    %1364 = vmatprep.subr.mxu0 0.0
    %1365 = vmatpush1.msra.mxu0 0.0
    %1366 = vmatprep.subr.mxu0 0.0
    %1367 = vmatpush1.msra.mxu0 0.0
    %1368 = vmatprep.subr.mxu0 0.0
    %1369 = vmatpush1.msra.mxu0 0.0
    %1370 = vmatprep.subr.mxu0 0.0
    %1371 = vmatpush1.msra.mxu0 0.0
    %1372 = vmatprep.subr.mxu0 0.0
    %1373 = vmatpush1.msra.mxu0 0.0
    %1374 = vmatprep.subr.mxu0 0.0
    %1375 = vmatpush1.msra.mxu0 0.0
    %1376 = vmatprep.subr.mxu0 0.0
    %1377 = vmatpush1.msra.mxu0 0.0
    %1378 = vmatprep.subr.mxu0 0.0
    %1379 = vmatpush1.msra.mxu0 0.0
    %1380 = vmatprep.subr.mxu0 0.0
    %1381 = vmatpush1.msra.mxu0 0.0
    %1382 = vmatprep.subr.mxu0 0.0
    %1383 = vmatpush1.msra.mxu0 0.0
    %1384 = vmatprep.subr.mxu0 0.0
    %1385 = vmatpush1.msra.mxu0 0.0
    %1386 = vmatprep.subr.mxu0 0.0
    %1387 = vmatpush1.msra.mxu0 0.0
    %1388 = vmatprep.subr.mxu0 0.0
    %1389 = vmatpush1.msra.mxu0 0.0
    %1390 = vmatprep.subr.mxu0 0.0
    %1391 = vmatpush1.msra.mxu0 0.0
    %1392 = vmatprep.subr.mxu0 0.0
    %1393 = vmatpush1.msra.mxu0 0.0
    %1394 = vmatprep.subr.mxu0 0.0
    %1395 = vmatpush1.msra.mxu0 0.0
    %1396 = vmatprep.subr.mxu0 0.0
    %1397 = vmatpush1.msra.mxu0 0.0
    %1398 = vmatprep.subr.mxu0 0.0
    %1399 = vmatpush1.msra.mxu0 0.0
    %1400 = vmatprep.subr.mxu0 0.0
    %1401 = vmatpush1.msra.mxu0 0.0
    %1402 = vmatprep.subr.mxu0 0.0
    %1403 = vmatpush1.msra.mxu0 0.0
    %1404 = vmatprep.subr.mxu0 0.0
    %1405 = vmatpush1.msra.mxu0 0.0
    %1406 = vmatprep.subr.mxu0 0.0
    %1407 = vmatpush1.msra.mxu0 0.0
    %1408 = vmatprep.mubr.f32.mxu0 0.0
    %1409 = vmatmul.mubr.f32.gmra.mrb[0].mxu0 %v1188
    %v1410 = vpop.f32.mrb[0].mxu0
    %v1411 = vadd.f32 %v717, %v1410
    %v1412 = vpop.f32.mrb[0].mxu0
    %1413 = vdwg.mxu0
    %v1414 = vmul.f32 %v1336, %v1411
    %v1415 = vadd.f32 %v670, %v1414
    %v1416 = vtanh.pop %v1415
    %v1417 = vsub.f32 1.0, %v1343
    %v1418 = vmul.f32 %v1417, %v1416
    %v1419 = vmul.f32 %v1343, %v1186
    %v1420 = vadd.f32 %v1418, %v1419
    %v1422 = vsel %vm332, %v1420, 0
    %1424 = vmatprep.subr.mxu0 0.0
    %1425 = vmatpush1.msra.mxu0 %v698
    %1426 = vmatprep.subr.mxu0 0.0
    %1427 = vmatpush1.msra.mxu0 %v699
    %1428 = vmatprep.subr.mxu0 0.0
    %1429 = vmatpush1.msra.mxu0 %v700
    %1430 = vmatprep.subr.mxu0 0.0
    %1431 = vmatpush1.msra.mxu0 %v701
    %1432 = vmatprep.subr.mxu0 0.0
    %1433 = vmatpush1.msra.mxu0 0.0
    %1434 = vmatprep.subr.mxu0 0.0
    %1435 = vmatpush1.msra.mxu0 0.0
    %1436 = vmatprep.subr.mxu0 0.0
    %1437 = vmatpush1.msra.mxu0 0.0
    %1438 = vmatprep.subr.mxu0 0.0
    %1439 = vmatpush1.msra.mxu0 0.0
    %1440 = vmatprep.subr.mxu0 0.0
    %1441 = vmatpush1.msra.mxu0 0.0
    %1442 = vmatprep.subr.mxu0 0.0
    %1443 = vmatpush1.msra.mxu0 0.0
    %1444 = vmatprep.subr.mxu0 0.0
    %1445 = vmatpush1.msra.mxu0 0.0
    %1446 = vmatprep.subr.mxu0 0.0
    %1447 = vmatpush1.msra.mxu0 0.0
    %1448 = vmatprep.subr.mxu0 0.0
    %1449 = vmatpush1.msra.mxu0 0.0
    %1450 = vmatprep.subr.mxu0 0.0
    %1451 = vmatpush1.msra.mxu0 0.0
    %1452 = vmatprep.subr.mxu0 0.0
    %1453 = vmatpush1.msra.mxu0 0.0
    %1454 = vmatprep.subr.mxu0 0.0
    %1455 = vmatpush1.msra.mxu0 0.0
    %1456 = vmatprep.subr.mxu0 0.0
    %1457 = vmatpush1.msra.mxu0 0.0
    %1458 = vmatprep.subr.mxu0 0.0
    %1459 = vmatpush1.msra.mxu0 0.0
    %1460 = vmatprep.subr.mxu0 0.0
    %1461 = vmatpush1.msra.mxu0 0.0
    %1462 = vmatprep.subr.mxu0 0.0
    %1463 = vmatpush1.msra.mxu0 0.0
    %1464 = vmatprep.subr.mxu0 0.0
    %1465 = vmatpush1.msra.mxu0 0.0
    %1466 = vmatprep.subr.mxu0 0.0
    %1467 = vmatpush1.msra.mxu0 0.0
    %1468 = vmatprep.subr.mxu0 0.0
    %1469 = vmatpush1.msra.mxu0 0.0
    %1470 = vmatprep.subr.mxu0 0.0
    %1471 = vmatpush1.msra.mxu0 0.0
    %1472 = vmatprep.subr.mxu0 0.0
    %1473 = vmatpush1.msra.mxu0 0.0
    %1474 = vmatprep.subr.mxu0 0.0
    %1475 = vmatpush1.msra.mxu0 0.0
    %1476 = vmatprep.subr.mxu0 0.0
    %1477 = vmatpush1.msra.mxu0 0.0
    %1478 = vmatprep.subr.mxu0 0.0
    %1479 = vmatpush1.msra.mxu0 0.0
    %1480 = vmatprep.subr.mxu0 0.0
    %1481 = vmatpush1.msra.mxu0 0.0
    %1482 = vmatprep.subr.mxu0 0.0
    %1483 = vmatpush1.msra.mxu0 0.0
    %1484 = vmatprep.subr.mxu0 0.0
    %1485 = vmatpush1.msra.mxu0 0.0
    %1486 = vmatprep.subr.mxu0 0.0
    %1487 = vmatpush1.msra.mxu0 0.0
    %1488 = vmatprep.mubr.f32.mxu0 0.0
    %1489 = vmatmul.mubr.f32.gmra.mrb[0].mxu0 %v1422
    %v1490 = vpop.f32.mrb[0].mxu0
    %v1491 = vadd.f32 0.0, %v1490
    %v1492 = vpop.f32.mrb[0].mxu0
    %1493 = vdwg.mxu0
    %1494 = vmatprep.subr.mxu0 0.0
    %1495 = vmatpush1.msra.mxu0 %v703
    %1496 = vmatprep.subr.mxu0 0.0
    %1497 = vmatpush1.msra.mxu0 %v704
    %1498 = vmatprep.subr.mxu0 0.0
    %1499 = vmatpush1.msra.mxu0 %v705
    %1500 = vmatprep.subr.mxu0 0.0
    %1501 = vmatpush1.msra.mxu0 %v706
    %1502 = vmatprep.subr.mxu0 0.0
    %1503 = vmatpush1.msra.mxu0 0.0
    %1504 = vmatprep.subr.mxu0 0.0
    %1505 = vmatpush1.msra.mxu0 0.0
    %1506 = vmatprep.subr.mxu0 0.0
    %1507 = vmatpush1.msra.mxu0 0.0
    %1508 = vmatprep.subr.mxu0 0.0
    %1509 = vmatpush1.msra.mxu0 0.0
    %1510 = vmatprep.subr.mxu0 0.0
    %1511 = vmatpush1.msra.mxu0 0.0
    %1512 = vmatprep.subr.mxu0 0.0
    %1513 = vmatpush1.msra.mxu0 0.0
    %1514 = vmatprep.subr.mxu0 0.0
    %1515 = vmatpush1.msra.mxu0 0.0
    %1516 = vmatprep.subr.mxu0 0.0
    %1517 = vmatpush1.msra.mxu0 0.0
    %1518 = vmatprep.subr.mxu0 0.0
    %1519 = vmatpush1.msra.mxu0 0.0
    %1520 = vmatprep.subr.mxu0 0.0
    %1521 = vmatpush1.msra.mxu0 0.0
    %1522 = vmatprep.subr.mxu0 0.0
    %1523 = vmatpush1.msra.mxu0 0.0
    %1524 = vmatprep.subr.mxu0 0.0
    %1525 = vmatpush1.msra.mxu0 0.0
    %1526 = vmatprep.subr.mxu0 0.0
    %1527 = vmatpush1.msra.mxu0 0.0
    %1528 = vmatprep.subr.mxu0 0.0
    %1529 = vmatpush1.msra.mxu0 0.0
    %1530 = vmatprep.subr.mxu0 0.0
    %1531 = vmatpush1.msra.mxu0 0.0
    %1532 = vmatprep.subr.mxu0 0.0
    %1533 = vmatpush1.msra.mxu0 0.0
    %1534 = vmatprep.subr.mxu0 0.0
    %1535 = vmatpush1.msra.mxu0 0.0
    %1536 = vmatprep.subr.mxu0 0.0
    %1537 = vmatpush1.msra.mxu0 0.0
    %1538 = vmatprep.subr.mxu0 0.0
    %1539 = vmatpush1.msra.mxu0 0.0
    %1540 = vmatprep.subr.mxu0 0.0
    %1541 = vmatpush1.msra.mxu0 0.0
    %1542 = vmatprep.subr.mxu0 0.0
    %1543 = vmatpush1.msra.mxu0 0.0
    %1544 = vmatprep.subr.mxu0 0.0
    %1545 = vmatpush1.msra.mxu0 0.0
    %1546 = vmatprep.subr.mxu0 0.0
    %1547 = vmatpush1.msra.mxu0 0.0
    %1548 = vmatprep.subr.mxu0 0.0
    %1549 = vmatpush1.msra.mxu0 0.0
    %1550 = vmatprep.subr.mxu0 0.0
    %1551 = vmatpush1.msra.mxu0 0.0
    %1552 = vmatprep.subr.mxu0 0.0
    %1553 = vmatpush1.msra.mxu0 0.0
    %1554 = vmatprep.subr.mxu0 0.0
    %1555 = vmatpush1.msra.mxu0 0.0
    %1556 = vmatprep.subr.mxu0 0.0
    %1557 = vmatpush1.msra.mxu0 0.0
    %1558 = vmatprep.mubr.f32.mxu0 0.0
    %1559 = vmatmul.mubr.f32.gmra.mrb[0].mxu0 %v1422
    %v1560 = vpop.f32.mrb[0].mxu0
    %v1561 = vadd.f32 0.0, %v1560
    %v1562 = vpop.f32.mrb[0].mxu0
    %1563 = vdwg.mxu0
    %v1564 = vadd.f32 %v439, %v1491
    %v1565 = vxor.u32 %v1564, 2147483648
    %v1566 = vmul.f32 %v1565, 1.442695
    %v1567 = vpow.pop %v1566
    %v1568 = vadd.f32 %v1567, 1.0
    %v1569 = vrcp.pop %v1568
    %v1570 = vmul.f32 1.0, %v1569
    %v1571 = vadd.f32 %v557, %v1561
    %v1572 = vxor.u32 %v1571, 2147483648
    %v1573 = vmul.f32 %v1572, 1.442695
    %v1574 = vpow.pop %v1573
    %v1575 = vadd.f32 %v1574, 1.0
    %v1576 = vrcp.pop %v1575
    %v1577 = vmul.f32 1.0, %v1576
    %1578 = vmatprep.subr.mxu0 0.0
    %1579 = vmatpush1.msra.mxu0 %v708
    %1580 = vmatprep.subr.mxu0 0.0
    %1581 = vmatpush1.msra.mxu0 %v709
    %1582 = vmatprep.subr.mxu0 0.0
    %1583 = vmatpush1.msra.mxu0 %v710
    %1584 = vmatprep.subr.mxu0 0.0
    %1585 = vmatpush1.msra.mxu0 %v711
    %1586 = vmatprep.subr.mxu0 0.0
    %1587 = vmatpush1.msra.mxu0 0.0
    %1588 = vmatprep.subr.mxu0 0.0
    %1589 = vmatpush1.msra.mxu0 0.0
    %1590 = vmatprep.subr.mxu0 0.0
    %1591 = vmatpush1.msra.mxu0 0.0
    %1592 = vmatprep.subr.mxu0 0.0
    %1593 = vmatpush1.msra.mxu0 0.0
    %1594 = vmatprep.subr.mxu0 0.0
    %1595 = vmatpush1.msra.mxu0 0.0
    %1596 = vmatprep.subr.mxu0 0.0
    %1597 = vmatpush1.msra.mxu0 0.0
    %1598 = vmatprep.subr.mxu0 0.0
    %1599 = vmatpush1.msra.mxu0 0.0
    %1600 = vmatprep.subr.mxu0 0.0
    %1601 = vmatpush1.msra.mxu0 0.0
    %1602 = vmatprep.subr.mxu0 0.0
    %1603 = vmatpush1.msra.mxu0 0.0
    %1604 = vmatprep.subr.mxu0 0.0
    %1605 = vmatpush1.msra.mxu0 0.0
    %1606 = vmatprep.subr.mxu0 0.0
    %1607 = vmatpush1.msra.mxu0 0.0
    %1608 = vmatprep.subr.mxu0 0.0
    %1609 = vmatpush1.msra.mxu0 0.0
    %1610 = vmatprep.subr.mxu0 0.0
    %1611 = vmatpush1.msra.mxu0 0.0
    %1612 = vmatprep.subr.mxu0 0.0
    %1613 = vmatpush1.msra.mxu0 0.0
    %1614 = vmatprep.subr.mxu0 0.0
    %1615 = vmatpush1.msra.mxu0 0.0
    %1616 = vmatprep.subr.mxu0 0.0
    %1617 = vmatpush1.msra.mxu0 0.0
    %1618 = vmatprep.subr.mxu0 0.0
    %1619 = vmatpush1.msra.mxu0 0.0
    %1620 = vmatprep.subr.mxu0 0.0
    %1621 = vmatpush1.msra.mxu0 0.0
    %1622 = vmatprep.subr.mxu0 0.0
    %1623 = vmatpush1.msra.mxu0 0.0
    %1624 = vmatprep.subr.mxu0 0.0
    %1625 = vmatpush1.msra.mxu0 0.0
    %1626 = vmatprep.subr.mxu0 0.0
    %1627 = vmatpush1.msra.mxu0 0.0
    %1628 = vmatprep.subr.mxu0 0.0
    %1629 = vmatpush1.msra.mxu0 0.0
    %1630 = vmatprep.subr.mxu0 0.0
    %1631 = vmatpush1.msra.mxu0 0.0
    %1632 = vmatprep.subr.mxu0 0.0
    %1633 = vmatpush1.msra.mxu0 0.0
    %1634 = vmatprep.subr.mxu0 0.0
    %1635 = vmatpush1.msra.mxu0 0.0
    %1636 = vmatprep.subr.mxu0 0.0
    %1637 = vmatpush1.msra.mxu0 0.0
    %1638 = vmatprep.subr.mxu0 0.0
    %1639 = vmatpush1.msra.mxu0 0.0
    %1640 = vmatprep.subr.mxu0 0.0
    %1641 = vmatpush1.msra.mxu0 0.0
    %1642 = vmatprep.mubr.f32.mxu0 0.0
    %1643 = vmatmul.mubr.f32.gmra.mrb[0].mxu0 %v1422
    %v1644 = vpop.f32.mrb[0].mxu0
    %v1645 = vadd.f32 %v717, %v1644
    %v1646 = vpop.f32.mrb[0].mxu0
    %1647 = vdwg.mxu0
    %v1648 = vmul.f32 %v1570, %v1645
    %v1649 = vadd.f32 %v675, %v1648
    %v1650 = vtanh.pop %v1649
    %v1651 = vsub.f32 1.0, %v1577
    %v1652 = vmul.f32 %v1651, %v1650
    %v1653 = vmul.f32 %v1577, %v1420
    %v1654 = vadd.f32 %v1652, %v1653
    %v1656 = vsel %vm332, %v1654, 0
    %1658 = vmatprep.subr.mxu0 0.0
    %1659 = vmatpush1.msra.mxu0 %v698
    %1660 = vmatprep.subr.mxu0 0.0
    %1661 = vmatpush1.msra.mxu0 %v699
    %1662 = vmatprep.subr.mxu0 0.0
    %1663 = vmatpush1.msra.mxu0 %v700
    %1664 = vmatprep.subr.mxu0 0.0
    %1665 = vmatpush1.msra.mxu0 %v701
    %1666 = vmatprep.subr.mxu0 0.0
    %1667 = vmatpush1.msra.mxu0 0.0
    %1668 = vmatprep.subr.mxu0 0.0
    %1669 = vmatpush1.msra.mxu0 0.0
    %1670 = vmatprep.subr.mxu0 0.0
    %1671 = vmatpush1.msra.mxu0 0.0
    %1672 = vmatprep.subr.mxu0 0.0
    %1673 = vmatpush1.msra.mxu0 0.0
    %1674 = vmatprep.subr.mxu0 0.0
    %1675 = vmatpush1.msra.mxu0 0.0
    %1676 = vmatprep.subr.mxu0 0.0
    %1677 = vmatpush1.msra.mxu0 0.0
    %1678 = vmatprep.subr.mxu0 0.0
    %1679 = vmatpush1.msra.mxu0 0.0
    %1680 = vmatprep.subr.mxu0 0.0
    %1681 = vmatpush1.msra.mxu0 0.0
    %1682 = vmatprep.subr.mxu0 0.0
    %1683 = vmatpush1.msra.mxu0 0.0
    %1684 = vmatprep.subr.mxu0 0.0
    %1685 = vmatpush1.msra.mxu0 0.0
    %1686 = vmatprep.subr.mxu0 0.0
    %1687 = vmatpush1.msra.mxu0 0.0
    %1688 = vmatprep.subr.mxu0 0.0
    %1689 = vmatpush1.msra.mxu0 0.0
    %1690 = vmatprep.subr.mxu0 0.0
    %1691 = vmatpush1.msra.mxu0 0.0
    %1692 = vmatprep.subr.mxu0 0.0
    %1693 = vmatpush1.msra.mxu0 0.0
    %1694 = vmatprep.subr.mxu0 0.0
    %1695 = vmatpush1.msra.mxu0 0.0
    %1696 = vmatprep.subr.mxu0 0.0
    %1697 = vmatpush1.msra.mxu0 0.0
    %1698 = vmatprep.subr.mxu0 0.0
    %1699 = vmatpush1.msra.mxu0 0.0
    %1700 = vmatprep.subr.mxu0 0.0
    %1701 = vmatpush1.msra.mxu0 0.0
    %1702 = vmatprep.subr.mxu0 0.0
    %1703 = vmatpush1.msra.mxu0 0.0
    %1704 = vmatprep.subr.mxu0 0.0
    %1705 = vmatpush1.msra.mxu0 0.0
    %1706 = vmatprep.subr.mxu0 0.0
    %1707 = vmatpush1.msra.mxu0 0.0
    %1708 = vmatprep.subr.mxu0 0.0
    %1709 = vmatpush1.msra.mxu0 0.0
    %1710 = vmatprep.subr.mxu0 0.0
    %1711 = vmatpush1.msra.mxu0 0.0
    %1712 = vmatprep.subr.mxu0 0.0
    %1713 = vmatpush1.msra.mxu0 0.0
    %1714 = vmatprep.subr.mxu0 0.0
    %1715 = vmatpush1.msra.mxu0 0.0
    %1716 = vmatprep.subr.mxu0 0.0
    %1717 = vmatpush1.msra.mxu0 0.0
    %1718 = vmatprep.subr.mxu0 0.0
    %1719 = vmatpush1.msra.mxu0 0.0
    %1720 = vmatprep.subr.mxu0 0.0
    %1721 = vmatpush1.msra.mxu0 0.0
    %1722 = vmatprep.mubr.f32.mxu0 0.0
    %1723 = vmatmul.mubr.f32.gmra.mrb[0].mxu0 %v1656
    %v1724 = vpop.f32.mrb[0].mxu0
    %v1725 = vadd.f32 0.0, %v1724
    %v1726 = vpop.f32.mrb[0].mxu0
    %1727 = vdwg.mxu0
    %1728 = vmatprep.subr.mxu0 0.0
    %1729 = vmatpush1.msra.mxu0 %v703
    %1730 = vmatprep.subr.mxu0 0.0
    %1731 = vmatpush1.msra.mxu0 %v704
    %1732 = vmatprep.subr.mxu0 0.0
    %1733 = vmatpush1.msra.mxu0 %v705
    %1734 = vmatprep.subr.mxu0 0.0
    %1735 = vmatpush1.msra.mxu0 %v706
    %1736 = vmatprep.subr.mxu0 0.0
    %1737 = vmatpush1.msra.mxu0 0.0
    %1738 = vmatprep.subr.mxu0 0.0
    %1739 = vmatpush1.msra.mxu0 0.0
    %1740 = vmatprep.subr.mxu0 0.0
    %1741 = vmatpush1.msra.mxu0 0.0
    %1742 = vmatprep.subr.mxu0 0.0
    %1743 = vmatpush1.msra.mxu0 0.0
    %1744 = vmatprep.subr.mxu0 0.0
    %1745 = vmatpush1.msra.mxu0 0.0
    %1746 = vmatprep.subr.mxu0 0.0
    %1747 = vmatpush1.msra.mxu0 0.0
    %1748 = vmatprep.subr.mxu0 0.0
    %1749 = vmatpush1.msra.mxu0 0.0
    %1750 = vmatprep.subr.mxu0 0.0
    %1751 = vmatpush1.msra.mxu0 0.0
    %1752 = vmatprep.subr.mxu0 0.0
    %1753 = vmatpush1.msra.mxu0 0.0
    %1754 = vmatprep.subr.mxu0 0.0
    %1755 = vmatpush1.msra.mxu0 0.0
    %1756 = vmatprep.subr.mxu0 0.0
    %1757 = vmatpush1.msra.mxu0 0.0
    %1758 = vmatprep.subr.mxu0 0.0
    %1759 = vmatpush1.msra.mxu0 0.0
    %1760 = vmatprep.subr.mxu0 0.0
    %1761 = vmatpush1.msra.mxu0 0.0
    %1762 = vmatprep.subr.mxu0 0.0
    %1763 = vmatpush1.msra.mxu0 0.0
    %1764 = vmatprep.subr.mxu0 0.0
    %1765 = vmatpush1.msra.mxu0 0.0
    %1766 = vmatprep.subr.mxu0 0.0
    %1767 = vmatpush1.msra.mxu0 0.0
    %1768 = vmatprep.subr.mxu0 0.0
    %1769 = vmatpush1.msra.mxu0 0.0
    %1770 = vmatprep.subr.mxu0 0.0
    %1771 = vmatpush1.msra.mxu0 0.0
    %1772 = vmatprep.subr.mxu0 0.0
    %1773 = vmatpush1.msra.mxu0 0.0
    %1774 = vmatprep.subr.mxu0 0.0
    %1775 = vmatpush1.msra.mxu0 0.0
    %1776 = vmatprep.subr.mxu0 0.0
    %1777 = vmatpush1.msra.mxu0 0.0
    %1778 = vmatprep.subr.mxu0 0.0
    %1779 = vmatpush1.msra.mxu0 0.0
    %1780 = vmatprep.subr.mxu0 0.0
    %1781 = vmatpush1.msra.mxu0 0.0
    %1782 = vmatprep.subr.mxu0 0.0
    %1783 = vmatpush1.msra.mxu0 0.0
    %1784 = vmatprep.subr.mxu0 0.0
    %1785 = vmatpush1.msra.mxu0 0.0
    %1786 = vmatprep.subr.mxu0 0.0
    %1787 = vmatpush1.msra.mxu0 0.0
    %1788 = vmatprep.subr.mxu0 0.0
    %1789 = vmatpush1.msra.mxu0 0.0
    %1790 = vmatprep.subr.mxu0 0.0
    %1791 = vmatpush1.msra.mxu0 0.0
    %1792 = vmatprep.mubr.f32.mxu0 0.0
    %1793 = vmatmul.mubr.f32.gmra.mrb[0].mxu0 %v1656
    %v1794 = vpop.f32.mrb[0].mxu0
    %v1795 = vadd.f32 0.0, %v1794
    %v1796 = vpop.f32.mrb[0].mxu0
    %1797 = vdwg.mxu0
    %v1798 = vadd.f32 %v444, %v1725
    %v1799 = vxor.u32 %v1798, 2147483648
    %v1800 = vmul.f32 %v1799, 1.442695
    %v1801 = vpow.pop %v1800
    %v1802 = vadd.f32 %v1801, 1.0
    %v1803 = vrcp.pop %v1802
    %v1804 = vmul.f32 1.0, %v1803
    %v1805 = vadd.f32 %v562, %v1795
    %v1806 = vxor.u32 %v1805, 2147483648
    %v1807 = vmul.f32 %v1806, 1.442695
    %v1808 = vpow.pop %v1807
    %v1809 = vadd.f32 %v1808, 1.0
    %v1810 = vrcp.pop %v1809
    %v1811 = vmul.f32 1.0, %v1810
    %1812 = vmatprep.subr.mxu0 0.0
    %1813 = vmatpush1.msra.mxu0 %v708
    %1814 = vmatprep.subr.mxu0 0.0
    %1815 = vmatpush1.msra.mxu0 %v709
    %1816 = vmatprep.subr.mxu0 0.0
    %1817 = vmatpush1.msra.mxu0 %v710
    %1818 = vmatprep.subr.mxu0 0.0
    %1819 = vmatpush1.msra.mxu0 %v711
    %1820 = vmatprep.subr.mxu0 0.0
    %1821 = vmatpush1.msra.mxu0 0.0
    %1822 = vmatprep.subr.mxu0 0.0
    %1823 = vmatpush1.msra.mxu0 0.0
    %1824 = vmatprep.subr.mxu0 0.0
    %1825 = vmatpush1.msra.mxu0 0.0
    %1826 = vmatprep.subr.mxu0 0.0
    %1827 = vmatpush1.msra.mxu0 0.0
    %1828 = vmatprep.subr.mxu0 0.0
    %1829 = vmatpush1.msra.mxu0 0.0
    %1830 = vmatprep.subr.mxu0 0.0
    %1831 = vmatpush1.msra.mxu0 0.0
    %1832 = vmatprep.subr.mxu0 0.0
    %1833 = vmatpush1.msra.mxu0 0.0
    %1834 = vmatprep.subr.mxu0 0.0
    %1835 = vmatpush1.msra.mxu0 0.0
    %1836 = vmatprep.subr.mxu0 0.0
    %1837 = vmatpush1.msra.mxu0 0.0
    %1838 = vmatprep.subr.mxu0 0.0
    %1839 = vmatpush1.msra.mxu0 0.0
    %1840 = vmatprep.subr.mxu0 0.0
    %1841 = vmatpush1.msra.mxu0 0.0
    %1842 = vmatprep.subr.mxu0 0.0
    %1843 = vmatpush1.msra.mxu0 0.0
    %1844 = vmatprep.subr.mxu0 0.0
    %1845 = vmatpush1.msra.mxu0 0.0
    %1846 = vmatprep.subr.mxu0 0.0
    %1847 = vmatpush1.msra.mxu0 0.0
    %1848 = vmatprep.subr.mxu0 0.0
    %1849 = vmatpush1.msra.mxu0 0.0
    %1850 = vmatprep.subr.mxu0 0.0
    %1851 = vmatpush1.msra.mxu0 0.0
    %1852 = vmatprep.subr.mxu0 0.0
    %1853 = vmatpush1.msra.mxu0 0.0
    %1854 = vmatprep.subr.mxu0 0.0
    %1855 = vmatpush1.msra.mxu0 0.0
    %1856 = vmatprep.subr.mxu0 0.0
    %1857 = vmatpush1.msra.mxu0 0.0
    %1858 = vmatprep.subr.mxu0 0.0
    %1859 = vmatpush1.msra.mxu0 0.0
    %1860 = vmatprep.subr.mxu0 0.0
    %1861 = vmatpush1.msra.mxu0 0.0
    %1862 = vmatprep.subr.mxu0 0.0
    %1863 = vmatpush1.msra.mxu0 0.0
    %1864 = vmatprep.subr.mxu0 0.0
    %1865 = vmatpush1.msra.mxu0 0.0
    %1866 = vmatprep.subr.mxu0 0.0
    %1867 = vmatpush1.msra.mxu0 0.0
    %1868 = vmatprep.subr.mxu0 0.0
    %1869 = vmatpush1.msra.mxu0 0.0
    %1870 = vmatprep.subr.mxu0 0.0
    %1871 = vmatpush1.msra.mxu0 0.0
    %1872 = vmatprep.subr.mxu0 0.0
    %1873 = vmatpush1.msra.mxu0 0.0
    %1874 = vmatprep.subr.mxu0 0.0
    %1875 = vmatpush1.msra.mxu0 0.0
    %1876 = vmatprep.mubr.f32.mxu0 0.0
    %1877 = vmatmul.mubr.f32.gmra.mrb[0].mxu0 %v1656
    %v1878 = vpop.f32.mrb[0].mxu0
    %v1879 = vadd.f32 %v717, %v1878
    %v1880 = vpop.f32.mrb[0].mxu0
    %1881 = vdwg.mxu0
    %v1882 = vmul.f32 %v1804, %v1879
    %v1883 = vadd.f32 %v680, %v1882
    %v1884 = vtanh.pop %v1883
    %v1885 = vsub.f32 1.0, %v1811
    %v1886 = vmul.f32 %v1885, %v1884
    %v1887 = vmul.f32 %v1811, %v1654
    %v1888 = vadd.f32 %v1886, %v1887
    %v1890 = vsel %vm332, %v1888, 0
    %1892 = vmatprep.subr.mxu0 0.0
    %1893 = vmatpush1.msra.mxu0 %v698
    %1894 = vmatprep.subr.mxu0 0.0
    %1895 = vmatpush1.msra.mxu0 %v699
    %1896 = vmatprep.subr.mxu0 0.0
    %1897 = vmatpush1.msra.mxu0 %v700
    %1898 = vmatprep.subr.mxu0 0.0
    %1899 = vmatpush1.msra.mxu0 %v701
    %1900 = vmatprep.subr.mxu0 0.0
    %1901 = vmatpush1.msra.mxu0 0.0
    %1902 = vmatprep.subr.mxu0 0.0
    %1903 = vmatpush1.msra.mxu0 0.0
    %1904 = vmatprep.subr.mxu0 0.0
    %1905 = vmatpush1.msra.mxu0 0.0
    %1906 = vmatprep.subr.mxu0 0.0
    %1907 = vmatpush1.msra.mxu0 0.0
    %1908 = vmatprep.subr.mxu0 0.0
    %1909 = vmatpush1.msra.mxu0 0.0
    %1910 = vmatprep.subr.mxu0 0.0
    %1911 = vmatpush1.msra.mxu0 0.0
    %1912 = vmatprep.subr.mxu0 0.0
    %1913 = vmatpush1.msra.mxu0 0.0
    %1914 = vmatprep.subr.mxu0 0.0
    %1915 = vmatpush1.msra.mxu0 0.0
    %1916 = vmatprep.subr.mxu0 0.0
    %1917 = vmatpush1.msra.mxu0 0.0
    %1918 = vmatprep.subr.mxu0 0.0
    %1919 = vmatpush1.msra.mxu0 0.0
    %1920 = vmatprep.subr.mxu0 0.0
    %1921 = vmatpush1.msra.mxu0 0.0
    %1922 = vmatprep.subr.mxu0 0.0
    %1923 = vmatpush1.msra.mxu0 0.0
    %1924 = vmatprep.subr.mxu0 0.0
    %1925 = vmatpush1.msra.mxu0 0.0
    %1926 = vmatprep.subr.mxu0 0.0
    %1927 = vmatpush1.msra.mxu0 0.0
    %1928 = vmatprep.subr.mxu0 0.0
    %1929 = vmatpush1.msra.mxu0 0.0
    %1930 = vmatprep.subr.mxu0 0.0
    %1931 = vmatpush1.msra.mxu0 0.0
    %1932 = vmatprep.subr.mxu0 0.0
    %1933 = vmatpush1.msra.mxu0 0.0
    %1934 = vmatprep.subr.mxu0 0.0
    %1935 = vmatpush1.msra.mxu0 0.0
    %1936 = vmatprep.subr.mxu0 0.0
    %1937 = vmatpush1.msra.mxu0 0.0
    %1938 = vmatprep.subr.mxu0 0.0
    %1939 = vmatpush1.msra.mxu0 0.0
    %1940 = vmatprep.subr.mxu0 0.0
    %1941 = vmatpush1.msra.mxu0 0.0
    %1942 = vmatprep.subr.mxu0 0.0
    %1943 = vmatpush1.msra.mxu0 0.0
    %1944 = vmatprep.subr.mxu0 0.0
    %1945 = vmatpush1.msra.mxu0 0.0
    %1946 = vmatprep.subr.mxu0 0.0
    %1947 = vmatpush1.msra.mxu0 0.0
    %1948 = vmatprep.subr.mxu0 0.0
    %1949 = vmatpush1.msra.mxu0 0.0
    %1950 = vmatprep.subr.mxu0 0.0
    %1951 = vmatpush1.msra.mxu0 0.0
    %1952 = vmatprep.subr.mxu0 0.0
    %1953 = vmatpush1.msra.mxu0 0.0
    %1954 = vmatprep.subr.mxu0 0.0
    %1955 = vmatpush1.msra.mxu0 0.0
    %1956 = vmatprep.mubr.f32.mxu0 0.0
    %1957 = vmatmul.mubr.f32.gmra.mrb[0].mxu0 %v1890
    %v1958 = vpop.f32.mrb[0].mxu0
    %v1959 = vadd.f32 0.0, %v1958
    %v1960 = vpop.f32.mrb[0].mxu0
    %1961 = vdwg.mxu0
    %1962 = vmatprep.subr.mxu0 0.0
    %1963 = vmatpush1.msra.mxu0 %v703
    %1964 = vmatprep.subr.mxu0 0.0
    %1965 = vmatpush1.msra.mxu0 %v704
    %1966 = vmatprep.subr.mxu0 0.0
    %1967 = vmatpush1.msra.mxu0 %v705
    %1968 = vmatprep.subr.mxu0 0.0
    %1969 = vmatpush1.msra.mxu0 %v706
    %1970 = vmatprep.subr.mxu0 0.0
    %1971 = vmatpush1.msra.mxu0 0.0
    %1972 = vmatprep.subr.mxu0 0.0
    %1973 = vmatpush1.msra.mxu0 0.0
    %1974 = vmatprep.subr.mxu0 0.0
    %1975 = vmatpush1.msra.mxu0 0.0
    %1976 = vmatprep.subr.mxu0 0.0
    %1977 = vmatpush1.msra.mxu0 0.0
    %1978 = vmatprep.subr.mxu0 0.0
    %1979 = vmatpush1.msra.mxu0 0.0
    %1980 = vmatprep.subr.mxu0 0.0
    %1981 = vmatpush1.msra.mxu0 0.0
    %1982 = vmatprep.subr.mxu0 0.0
    %1983 = vmatpush1.msra.mxu0 0.0
    %1984 = vmatprep.subr.mxu0 0.0
    %1985 = vmatpush1.msra.mxu0 0.0
    %1986 = vmatprep.subr.mxu0 0.0
    %1987 = vmatpush1.msra.mxu0 0.0
    %1988 = vmatprep.subr.mxu0 0.0
    %1989 = vmatpush1.msra.mxu0 0.0
    %1990 = vmatprep.subr.mxu0 0.0
    %1991 = vmatpush1.msra.mxu0 0.0
    %1992 = vmatprep.subr.mxu0 0.0
    %1993 = vmatpush1.msra.mxu0 0.0
    %1994 = vmatprep.subr.mxu0 0.0
    %1995 = vmatpush1.msra.mxu0 0.0
    %1996 = vmatprep.subr.mxu0 0.0
    %1997 = vmatpush1.msra.mxu0 0.0
    %1998 = vmatprep.subr.mxu0 0.0
    %1999 = vmatpush1.msra.mxu0 0.0
    %2000 = vmatprep.subr.mxu0 0.0
    %2001 = vmatpush1.msra.mxu0 0.0
    %2002 = vmatprep.subr.mxu0 0.0
    %2003 = vmatpush1.msra.mxu0 0.0
    %2004 = vmatprep.subr.mxu0 0.0
    %2005 = vmatpush1.msra.mxu0 0.0
    %2006 = vmatprep.subr.mxu0 0.0
    %2007 = vmatpush1.msra.mxu0 0.0
    %2008 = vmatprep.subr.mxu0 0.0
    %2009 = vmatpush1.msra.mxu0 0.0
    %2010 = vmatprep.subr.mxu0 0.0
    %2011 = vmatpush1.msra.mxu0 0.0
    %2012 = vmatprep.subr.mxu0 0.0
    %2013 = vmatpush1.msra.mxu0 0.0
    %2014 = vmatprep.subr.mxu0 0.0
    %2015 = vmatpush1.msra.mxu0 0.0
    %2016 = vmatprep.subr.mxu0 0.0
    %2017 = vmatpush1.msra.mxu0 0.0
    %2018 = vmatprep.subr.mxu0 0.0
    %2019 = vmatpush1.msra.mxu0 0.0
    %2020 = vmatprep.subr.mxu0 0.0
    %2021 = vmatpush1.msra.mxu0 0.0
    %2022 = vmatprep.subr.mxu0 0.0
    %2023 = vmatpush1.msra.mxu0 0.0
    %2024 = vmatprep.subr.mxu0 0.0
    %2025 = vmatpush1.msra.mxu0 0.0
    %2026 = vmatprep.mubr.f32.mxu0 0.0
    %2027 = vmatmul.mubr.f32.gmra.mrb[0].mxu0 %v1890
    %v2028 = vpop.f32.mrb[0].mxu0
    %v2029 = vadd.f32 0.0, %v2028
    %v2030 = vpop.f32.mrb[0].mxu0
    %2031 = vdwg.mxu0
    %v2032 = vadd.f32 %v449, %v1959
    %v2033 = vxor.u32 %v2032, 2147483648
    %v2034 = vmul.f32 %v2033, 1.442695
    %v2035 = vpow.pop %v2034
    %v2036 = vadd.f32 %v2035, 1.0
    %v2037 = vrcp.pop %v2036
    %v2038 = vmul.f32 1.0, %v2037
    %v2039 = vadd.f32 %v567, %v2029
    %v2040 = vxor.u32 %v2039, 2147483648
    %v2041 = vmul.f32 %v2040, 1.442695
    %v2042 = vpow.pop %v2041
    %v2043 = vadd.f32 %v2042, 1.0
    %v2044 = vrcp.pop %v2043
    %v2045 = vmul.f32 1.0, %v2044
    %2046 = vmatprep.subr.mxu0 0.0
    %2047 = vmatpush1.msra.mxu0 %v708
    %2048 = vmatprep.subr.mxu0 0.0
    %2049 = vmatpush1.msra.mxu0 %v709
    %2050 = vmatprep.subr.mxu0 0.0
    %2051 = vmatpush1.msra.mxu0 %v710
    %2052 = vmatprep.subr.mxu0 0.0
    %2053 = vmatpush1.msra.mxu0 %v711
    %2054 = vmatprep.subr.mxu0 0.0
    %2055 = vmatpush1.msra.mxu0 0.0
    %2056 = vmatprep.subr.mxu0 0.0
    %2057 = vmatpush1.msra.mxu0 0.0
    %2058 = vmatprep.subr.mxu0 0.0
    %2059 = vmatpush1.msra.mxu0 0.0
    %2060 = vmatprep.subr.mxu0 0.0
    %2061 = vmatpush1.msra.mxu0 0.0
    %2062 = vmatprep.subr.mxu0 0.0
    %2063 = vmatpush1.msra.mxu0 0.0
    %2064 = vmatprep.subr.mxu0 0.0
    %2065 = vmatpush1.msra.mxu0 0.0
    %2066 = vmatprep.subr.mxu0 0.0
    %2067 = vmatpush1.msra.mxu0 0.0
    %2068 = vmatprep.subr.mxu0 0.0
    %2069 = vmatpush1.msra.mxu0 0.0
    %2070 = vmatprep.subr.mxu0 0.0
    %2071 = vmatpush1.msra.mxu0 0.0
    %2072 = vmatprep.subr.mxu0 0.0
    %2073 = vmatpush1.msra.mxu0 0.0
    %2074 = vmatprep.subr.mxu0 0.0
    %2075 = vmatpush1.msra.mxu0 0.0
    %2076 = vmatprep.subr.mxu0 0.0
    %2077 = vmatpush1.msra.mxu0 0.0
    %2078 = vmatprep.subr.mxu0 0.0
    %2079 = vmatpush1.msra.mxu0 0.0
    %2080 = vmatprep.subr.mxu0 0.0
    %2081 = vmatpush1.msra.mxu0 0.0
    %2082 = vmatprep.subr.mxu0 0.0
    %2083 = vmatpush1.msra.mxu0 0.0
    %2084 = vmatprep.subr.mxu0 0.0
    %2085 = vmatpush1.msra.mxu0 0.0
    %2086 = vmatprep.subr.mxu0 0.0
    %2087 = vmatpush1.msra.mxu0 0.0
    %2088 = vmatprep.subr.mxu0 0.0
    %2089 = vmatpush1.msra.mxu0 0.0
    %2090 = vmatprep.subr.mxu0 0.0
    %2091 = vmatpush1.msra.mxu0 0.0
    %2092 = vmatprep.subr.mxu0 0.0
    %2093 = vmatpush1.msra.mxu0 0.0
    %2094 = vmatprep.subr.mxu0 0.0
    %2095 = vmatpush1.msra.mxu0 0.0
    %2096 = vmatprep.subr.mxu0 0.0
    %2097 = vmatpush1.msra.mxu0 0.0
    %2098 = vmatprep.subr.mxu0 0.0
    %2099 = vmatpush1.msra.mxu0 0.0
    %2100 = vmatprep.subr.mxu0 0.0
    %2101 = vmatpush1.msra.mxu0 0.0
    %2102 = vmatprep.subr.mxu0 0.0
    %2103 = vmatpush1.msra.mxu0 0.0
    %2104 = vmatprep.subr.mxu0 0.0
    %2105 = vmatpush1.msra.mxu0 0.0
    %2106 = vmatprep.subr.mxu0 0.0
    %2107 = vmatpush1.msra.mxu0 0.0
    %2108 = vmatprep.subr.mxu0 0.0
    %2109 = vmatpush1.msra.mxu0 0.0
    %2110 = vmatprep.mubr.f32.mxu0 0.0
    %2111 = vmatmul.mubr.f32.gmra.mrb[0].mxu0 %v1890
    %v2112 = vpop.f32.mrb[0].mxu0
    %v2113 = vadd.f32 %v717, %v2112
    %v2114 = vpop.f32.mrb[0].mxu0
    %2115 = vdwg.mxu0
    %v2116 = vmul.f32 %v2038, %v2113
    %v2117 = vadd.f32 %v685, %v2116
    %v2118 = vtanh.pop %v2117
    %v2119 = vsub.f32 1.0, %v2045
    %v2120 = vmul.f32 %v2119, %v2118
    %v2121 = vmul.f32 %v2045, %v1888
    %v2122 = vadd.f32 %v2120, %v2121
    %v2124 = vsel %vm332, %v2122, 0
    %2126 = vmatprep.subr.mxu0 0.0
    %2127 = vmatpush1.msra.mxu0 %v698
    %2128 = vmatprep.subr.mxu0 0.0
    %2129 = vmatpush1.msra.mxu0 %v699
    %2130 = vmatprep.subr.mxu0 0.0
    %2131 = vmatpush1.msra.mxu0 %v700
    %2132 = vmatprep.subr.mxu0 0.0
    %2133 = vmatpush1.msra.mxu0 %v701
    %2134 = vmatprep.subr.mxu0 0.0
    %2135 = vmatpush1.msra.mxu0 0.0
    %2136 = vmatprep.subr.mxu0 0.0
    %2137 = vmatpush1.msra.mxu0 0.0
    %2138 = vmatprep.subr.mxu0 0.0
    %2139 = vmatpush1.msra.mxu0 0.0
    %2140 = vmatprep.subr.mxu0 0.0
    %2141 = vmatpush1.msra.mxu0 0.0
    %2142 = vmatprep.subr.mxu0 0.0
    %2143 = vmatpush1.msra.mxu0 0.0
    %2144 = vmatprep.subr.mxu0 0.0
    %2145 = vmatpush1.msra.mxu0 0.0
    %2146 = vmatprep.subr.mxu0 0.0
    %2147 = vmatpush1.msra.mxu0 0.0
    %2148 = vmatprep.subr.mxu0 0.0
    %2149 = vmatpush1.msra.mxu0 0.0
    %2150 = vmatprep.subr.mxu0 0.0
    %2151 = vmatpush1.msra.mxu0 0.0
    %2152 = vmatprep.subr.mxu0 0.0
    %2153 = vmatpush1.msra.mxu0 0.0
    %2154 = vmatprep.subr.mxu0 0.0
    %2155 = vmatpush1.msra.mxu0 0.0
    %2156 = vmatprep.subr.mxu0 0.0
    %2157 = vmatpush1.msra.mxu0 0.0
    %2158 = vmatprep.subr.mxu0 0.0
    %2159 = vmatpush1.msra.mxu0 0.0
    %2160 = vmatprep.subr.mxu0 0.0
    %2161 = vmatpush1.msra.mxu0 0.0
    %2162 = vmatprep.subr.mxu0 0.0
    %2163 = vmatpush1.msra.mxu0 0.0
    %2164 = vmatprep.subr.mxu0 0.0
    %2165 = vmatpush1.msra.mxu0 0.0
    %2166 = vmatprep.subr.mxu0 0.0
    %2167 = vmatpush1.msra.mxu0 0.0
    %2168 = vmatprep.subr.mxu0 0.0
    %2169 = vmatpush1.msra.mxu0 0.0
    %2170 = vmatprep.subr.mxu0 0.0
    %2171 = vmatpush1.msra.mxu0 0.0
    %2172 = vmatprep.subr.mxu0 0.0
    %2173 = vmatpush1.msra.mxu0 0.0
    %2174 = vmatprep.subr.mxu0 0.0
    %2175 = vmatpush1.msra.mxu0 0.0
    %2176 = vmatprep.subr.mxu0 0.0
    %2177 = vmatpush1.msra.mxu0 0.0
    %2178 = vmatprep.subr.mxu0 0.0
    %2179 = vmatpush1.msra.mxu0 0.0
    %2180 = vmatprep.subr.mxu0 0.0
    %2181 = vmatpush1.msra.mxu0 0.0
    %2182 = vmatprep.subr.mxu0 0.0
    %2183 = vmatpush1.msra.mxu0 0.0
    %2184 = vmatprep.subr.mxu0 0.0
    %2185 = vmatpush1.msra.mxu0 0.0
    %2186 = vmatprep.subr.mxu0 0.0
    %2187 = vmatpush1.msra.mxu0 0.0
    %2188 = vmatprep.subr.mxu0 0.0
    %2189 = vmatpush1.msra.mxu0 0.0
    %2190 = vmatprep.mubr.f32.mxu0 0.0
    %2191 = vmatmul.mubr.f32.gmra.mrb[0].mxu0 %v2124
    %v2192 = vpop.f32.mrb[0].mxu0
    %v2193 = vadd.f32 0.0, %v2192
    %v2194 = vpop.f32.mrb[0].mxu0
    %2195 = vdwg.mxu0
    %2196 = vmatprep.subr.mxu0 0.0
    %2197 = vmatpush1.msra.mxu0 %v703
    %2198 = vmatprep.subr.mxu0 0.0
    %2199 = vmatpush1.msra.mxu0 %v704
    %2200 = vmatprep.subr.mxu0 0.0
    %2201 = vmatpush1.msra.mxu0 %v705
    %2202 = vmatprep.subr.mxu0 0.0
    %2203 = vmatpush1.msra.mxu0 %v706
    %2204 = vmatprep.subr.mxu0 0.0
    %2205 = vmatpush1.msra.mxu0 0.0
    %2206 = vmatprep.subr.mxu0 0.0
    %2207 = vmatpush1.msra.mxu0 0.0
    %2208 = vmatprep.subr.mxu0 0.0
    %2209 = vmatpush1.msra.mxu0 0.0
    %2210 = vmatprep.subr.mxu0 0.0
    %2211 = vmatpush1.msra.mxu0 0.0
    %2212 = vmatprep.subr.mxu0 0.0
    %2213 = vmatpush1.msra.mxu0 0.0
    %2214 = vmatprep.subr.mxu0 0.0
    %2215 = vmatpush1.msra.mxu0 0.0
    %2216 = vmatprep.subr.mxu0 0.0
    %2217 = vmatpush1.msra.mxu0 0.0
    %2218 = vmatprep.subr.mxu0 0.0
    %2219 = vmatpush1.msra.mxu0 0.0
    %2220 = vmatprep.subr.mxu0 0.0
    %2221 = vmatpush1.msra.mxu0 0.0
    %2222 = vmatprep.subr.mxu0 0.0
    %2223 = vmatpush1.msra.mxu0 0.0
    %2224 = vmatprep.subr.mxu0 0.0
    %2225 = vmatpush1.msra.mxu0 0.0
    %2226 = vmatprep.subr.mxu0 0.0
    %2227 = vmatpush1.msra.mxu0 0.0
    %2228 = vmatprep.subr.mxu0 0.0
    %2229 = vmatpush1.msra.mxu0 0.0
    %2230 = vmatprep.subr.mxu0 0.0
    %2231 = vmatpush1.msra.mxu0 0.0
    %2232 = vmatprep.subr.mxu0 0.0
    %2233 = vmatpush1.msra.mxu0 0.0
    %2234 = vmatprep.subr.mxu0 0.0
    %2235 = vmatpush1.msra.mxu0 0.0
    %2236 = vmatprep.subr.mxu0 0.0
    %2237 = vmatpush1.msra.mxu0 0.0
    %2238 = vmatprep.subr.mxu0 0.0
    %2239 = vmatpush1.msra.mxu0 0.0
    %2240 = vmatprep.subr.mxu0 0.0
    %2241 = vmatpush1.msra.mxu0 0.0
    %2242 = vmatprep.subr.mxu0 0.0
    %2243 = vmatpush1.msra.mxu0 0.0
    %2244 = vmatprep.subr.mxu0 0.0
    %2245 = vmatpush1.msra.mxu0 0.0
    %2246 = vmatprep.subr.mxu0 0.0
    %2247 = vmatpush1.msra.mxu0 0.0
    %2248 = vmatprep.subr.mxu0 0.0
    %2249 = vmatpush1.msra.mxu0 0.0
    %2250 = vmatprep.subr.mxu0 0.0
    %2251 = vmatpush1.msra.mxu0 0.0
    %2252 = vmatprep.subr.mxu0 0.0
    %2253 = vmatpush1.msra.mxu0 0.0
    %2254 = vmatprep.subr.mxu0 0.0
    %2255 = vmatpush1.msra.mxu0 0.0
    %2256 = vmatprep.subr.mxu0 0.0
    %2257 = vmatpush1.msra.mxu0 0.0
    %2258 = vmatprep.subr.mxu0 0.0
    %2259 = vmatpush1.msra.mxu0 0.0
    %2260 = vmatprep.mubr.f32.mxu0 0.0
    %2261 = vmatmul.mubr.f32.gmra.mrb[0].mxu0 %v2124
    %v2262 = vpop.f32.mrb[0].mxu0
    %v2263 = vadd.f32 0.0, %v2262
    %v2264 = vpop.f32.mrb[0].mxu0
    %2265 = vdwg.mxu0
    %v2266 = vadd.f32 %v454, %v2193
    %v2267 = vxor.u32 %v2266, 2147483648
    %v2268 = vmul.f32 %v2267, 1.442695
    %v2269 = vpow.pop %v2268
    %v2270 = vadd.f32 %v2269, 1.0
    %v2271 = vrcp.pop %v2270
    %v2272 = vmul.f32 1.0, %v2271
    %v2273 = vadd.f32 %v572, %v2263
    %v2274 = vxor.u32 %v2273, 2147483648
    %v2275 = vmul.f32 %v2274, 1.442695
    %v2276 = vpow.pop %v2275
    %v2277 = vadd.f32 %v2276, 1.0
    %v2278 = vrcp.pop %v2277
    %v2279 = vmul.f32 1.0, %v2278
    %2280 = vmatprep.subr.mxu0 0.0
    %2281 = vmatpush1.msra.mxu0 %v708
    %2282 = vmatprep.subr.mxu0 0.0
    %2283 = vmatpush1.msra.mxu0 %v709
    %2284 = vmatprep.subr.mxu0 0.0
    %2285 = vmatpush1.msra.mxu0 %v710
    %2286 = vmatprep.subr.mxu0 0.0
    %2287 = vmatpush1.msra.mxu0 %v711
    %2288 = vmatprep.subr.mxu0 0.0
    %2289 = vmatpush1.msra.mxu0 0.0
    %2290 = vmatprep.subr.mxu0 0.0
    %2291 = vmatpush1.msra.mxu0 0.0
    %2292 = vmatprep.subr.mxu0 0.0
    %2293 = vmatpush1.msra.mxu0 0.0
    %2294 = vmatprep.subr.mxu0 0.0
    %2295 = vmatpush1.msra.mxu0 0.0
    %2296 = vmatprep.subr.mxu0 0.0
    %2297 = vmatpush1.msra.mxu0 0.0
    %2298 = vmatprep.subr.mxu0 0.0
    %2299 = vmatpush1.msra.mxu0 0.0
    %2300 = vmatprep.subr.mxu0 0.0
    %2301 = vmatpush1.msra.mxu0 0.0
    %2302 = vmatprep.subr.mxu0 0.0
    %2303 = vmatpush1.msra.mxu0 0.0
    %2304 = vmatprep.subr.mxu0 0.0
    %2305 = vmatpush1.msra.mxu0 0.0
    %2306 = vmatprep.subr.mxu0 0.0
    %2307 = vmatpush1.msra.mxu0 0.0
    %2308 = vmatprep.subr.mxu0 0.0
    %2309 = vmatpush1.msra.mxu0 0.0
    %2310 = vmatprep.subr.mxu0 0.0
    %2311 = vmatpush1.msra.mxu0 0.0
    %2312 = vmatprep.subr.mxu0 0.0
    %2313 = vmatpush1.msra.mxu0 0.0
    %2314 = vmatprep.subr.mxu0 0.0
    %2315 = vmatpush1.msra.mxu0 0.0
    %2316 = vmatprep.subr.mxu0 0.0
    %2317 = vmatpush1.msra.mxu0 0.0
    %2318 = vmatprep.subr.mxu0 0.0
    %2319 = vmatpush1.msra.mxu0 0.0
    %2320 = vmatprep.subr.mxu0 0.0
    %2321 = vmatpush1.msra.mxu0 0.0
    %2322 = vmatprep.subr.mxu0 0.0
    %2323 = vmatpush1.msra.mxu0 0.0
    %2324 = vmatprep.subr.mxu0 0.0
    %2325 = vmatpush1.msra.mxu0 0.0
    %2326 = vmatprep.subr.mxu0 0.0
    %2327 = vmatpush1.msra.mxu0 0.0
    %2328 = vmatprep.subr.mxu0 0.0
    %2329 = vmatpush1.msra.mxu0 0.0
    %2330 = vmatprep.subr.mxu0 0.0
    %2331 = vmatpush1.msra.mxu0 0.0
    %2332 = vmatprep.subr.mxu0 0.0
    %2333 = vmatpush1.msra.mxu0 0.0
    %2334 = vmatprep.subr.mxu0 0.0
    %2335 = vmatpush1.msra.mxu0 0.0
    %2336 = vmatprep.subr.mxu0 0.0
    %2337 = vmatpush1.msra.mxu0 0.0
    %2338 = vmatprep.subr.mxu0 0.0
    %2339 = vmatpush1.msra.mxu0 0.0
    %2340 = vmatprep.subr.mxu0 0.0
    %2341 = vmatpush1.msra.mxu0 0.0
    %2342 = vmatprep.subr.mxu0 0.0
    %2343 = vmatpush1.msra.mxu0 0.0
    %2344 = vmatprep.mubr.f32.mxu0 0.0
    %2345 = vmatmul.mubr.f32.gmra.mrb[0].mxu0 %v2124
    %v2346 = vpop.f32.mrb[0].mxu0
    %v2347 = vadd.f32 %v717, %v2346
    %v2348 = vpop.f32.mrb[0].mxu0
    %2349 = vdwg.mxu0
    %v2350 = vmul.f32 %v2272, %v2347
    %v2351 = vadd.f32 %v690, %v2350
    %v2352 = vtanh.pop %v2351
    %v2353 = vsub.f32 1.0, %v2279
    %v2354 = vmul.f32 %v2353, %v2352
    %v2355 = vmul.f32 %v2279, %v2122
    %v2356 = vadd.f32 %v2354, %v2355
    %v2358 = vsel %vm332, %v2356, 0
    %2360 = vmatprep.subr.mxu0 0.0
    %2361 = vmatpush1.msra.mxu0 %v698
    %2362 = vmatprep.subr.mxu0 0.0
    %2363 = vmatpush1.msra.mxu0 %v699
    %2364 = vmatprep.subr.mxu0 0.0
    %2365 = vmatpush1.msra.mxu0 %v700
    %2366 = vmatprep.subr.mxu0 0.0
    %2367 = vmatpush1.msra.mxu0 %v701
    %2368 = vmatprep.subr.mxu0 0.0
    %2369 = vmatpush1.msra.mxu0 0.0
    %2370 = vmatprep.subr.mxu0 0.0
    %2371 = vmatpush1.msra.mxu0 0.0
    %2372 = vmatprep.subr.mxu0 0.0
    %2373 = vmatpush1.msra.mxu0 0.0
    %2374 = vmatprep.subr.mxu0 0.0
    %2375 = vmatpush1.msra.mxu0 0.0
    %2376 = vmatprep.subr.mxu0 0.0
    %2377 = vmatpush1.msra.mxu0 0.0
    %2378 = vmatprep.subr.mxu0 0.0
    %2379 = vmatpush1.msra.mxu0 0.0
    %2380 = vmatprep.subr.mxu0 0.0
    %2381 = vmatpush1.msra.mxu0 0.0
    %2382 = vmatprep.subr.mxu0 0.0
    %2383 = vmatpush1.msra.mxu0 0.0
    %2384 = vmatprep.subr.mxu0 0.0
    %2385 = vmatpush1.msra.mxu0 0.0
    %2386 = vmatprep.subr.mxu0 0.0
    %2387 = vmatpush1.msra.mxu0 0.0
    %2388 = vmatprep.subr.mxu0 0.0
    %2389 = vmatpush1.msra.mxu0 0.0
    %2390 = vmatprep.subr.mxu0 0.0
    %2391 = vmatpush1.msra.mxu0 0.0
    %2392 = vmatprep.subr.mxu0 0.0
    %2393 = vmatpush1.msra.mxu0 0.0
    %2394 = vmatprep.subr.mxu0 0.0
    %2395 = vmatpush1.msra.mxu0 0.0
    %2396 = vmatprep.subr.mxu0 0.0
    %2397 = vmatpush1.msra.mxu0 0.0
    %2398 = vmatprep.subr.mxu0 0.0
    %2399 = vmatpush1.msra.mxu0 0.0
    %2400 = vmatprep.subr.mxu0 0.0
    %2401 = vmatpush1.msra.mxu0 0.0
    %2402 = vmatprep.subr.mxu0 0.0
    %2403 = vmatpush1.msra.mxu0 0.0
    %2404 = vmatprep.subr.mxu0 0.0
    %2405 = vmatpush1.msra.mxu0 0.0
    %2406 = vmatprep.subr.mxu0 0.0
    %2407 = vmatpush1.msra.mxu0 0.0
    %2408 = vmatprep.subr.mxu0 0.0
    %2409 = vmatpush1.msra.mxu0 0.0
    %2410 = vmatprep.subr.mxu0 0.0
    %2411 = vmatpush1.msra.mxu0 0.0
    %2412 = vmatprep.subr.mxu0 0.0
    %2413 = vmatpush1.msra.mxu0 0.0
    %2414 = vmatprep.subr.mxu0 0.0
    %2415 = vmatpush1.msra.mxu0 0.0
    %2416 = vmatprep.subr.mxu0 0.0
    %2417 = vmatpush1.msra.mxu0 0.0
    %2418 = vmatprep.subr.mxu0 0.0
    %2419 = vmatpush1.msra.mxu0 0.0
    %2420 = vmatprep.subr.mxu0 0.0
    %2421 = vmatpush1.msra.mxu0 0.0
    %2422 = vmatprep.subr.mxu0 0.0
    %2423 = vmatpush1.msra.mxu0 0.0
    %2424 = vmatprep.mubr.f32.mxu0 0.0
    %2425 = vmatmul.mubr.f32.gmra.mrb[0].mxu0 %v2358
    %v2426 = vpop.f32.mrb[0].mxu0
    %v2427 = vadd.f32 0.0, %v2426
    %v2428 = vpop.f32.mrb[0].mxu0
    %2429 = vdwg.mxu0
    %2430 = vmatprep.subr.mxu0 0.0
    %2431 = vmatpush1.msra.mxu0 %v703
    %2432 = vmatprep.subr.mxu0 0.0
    %2433 = vmatpush1.msra.mxu0 %v704
    %2434 = vmatprep.subr.mxu0 0.0
    %2435 = vmatpush1.msra.mxu0 %v705
    %2436 = vmatprep.subr.mxu0 0.0
    %2437 = vmatpush1.msra.mxu0 %v706
    %2438 = vmatprep.subr.mxu0 0.0
    %2439 = vmatpush1.msra.mxu0 0.0
    %2440 = vmatprep.subr.mxu0 0.0
    %2441 = vmatpush1.msra.mxu0 0.0
    %2442 = vmatprep.subr.mxu0 0.0
    %2443 = vmatpush1.msra.mxu0 0.0
    %2444 = vmatprep.subr.mxu0 0.0
    %2445 = vmatpush1.msra.mxu0 0.0
    %2446 = vmatprep.subr.mxu0 0.0
    %2447 = vmatpush1.msra.mxu0 0.0
    %2448 = vmatprep.subr.mxu0 0.0
    %2449 = vmatpush1.msra.mxu0 0.0
    %2450 = vmatprep.subr.mxu0 0.0
    %2451 = vmatpush1.msra.mxu0 0.0
    %2452 = vmatprep.subr.mxu0 0.0
    %2453 = vmatpush1.msra.mxu0 0.0
    %2454 = vmatprep.subr.mxu0 0.0
    %2455 = vmatpush1.msra.mxu0 0.0
    %2456 = vmatprep.subr.mxu0 0.0
    %2457 = vmatpush1.msra.mxu0 0.0
    %2458 = vmatprep.subr.mxu0 0.0
    %2459 = vmatpush1.msra.mxu0 0.0
    %2460 = vmatprep.subr.mxu0 0.0
    %2461 = vmatpush1.msra.mxu0 0.0
    %2462 = vmatprep.subr.mxu0 0.0
    %2463 = vmatpush1.msra.mxu0 0.0
    %2464 = vmatprep.subr.mxu0 0.0
    %2465 = vmatpush1.msra.mxu0 0.0
    %2466 = vmatprep.subr.mxu0 0.0
    %2467 = vmatpush1.msra.mxu0 0.0
    %2468 = vmatprep.subr.mxu0 0.0
    %2469 = vmatpush1.msra.mxu0 0.0
    %2470 = vmatprep.subr.mxu0 0.0
    %2471 = vmatpush1.msra.mxu0 0.0
    %2472 = vmatprep.subr.mxu0 0.0
    %2473 = vmatpush1.msra.mxu0 0.0
    %2474 = vmatprep.subr.mxu0 0.0
    %2475 = vmatpush1.msra.mxu0 0.0
    %2476 = vmatprep.subr.mxu0 0.0
    %2477 = vmatpush1.msra.mxu0 0.0
    %2478 = vmatprep.subr.mxu0 0.0
    %2479 = vmatpush1.msra.mxu0 0.0
    %2480 = vmatprep.subr.mxu0 0.0
    %2481 = vmatpush1.msra.mxu0 0.0
    %2482 = vmatprep.subr.mxu0 0.0
    %2483 = vmatpush1.msra.mxu0 0.0
    %2484 = vmatprep.subr.mxu0 0.0
    %2485 = vmatpush1.msra.mxu0 0.0
    %2486 = vmatprep.subr.mxu0 0.0
    %2487 = vmatpush1.msra.mxu0 0.0
    %2488 = vmatprep.subr.mxu0 0.0
    %2489 = vmatpush1.msra.mxu0 0.0
    %2490 = vmatprep.subr.mxu0 0.0
    %2491 = vmatpush1.msra.mxu0 0.0
    %2492 = vmatprep.subr.mxu0 0.0
    %2493 = vmatpush1.msra.mxu0 0.0
    %2494 = vmatprep.mubr.f32.mxu0 0.0
    %2495 = vmatmul.mubr.f32.gmra.mrb[0].mxu0 %v2358
    %v2496 = vpop.f32.mrb[0].mxu0
    %v2497 = vadd.f32 0.0, %v2496
    %v2498 = vpop.f32.mrb[0].mxu0
    %2499 = vdwg.mxu0
    %v2500 = vadd.f32 %v459, %v2427
    %v2501 = vxor.u32 %v2500, 2147483648
    %v2502 = vmul.f32 %v2501, 1.442695
    %v2503 = vpow.pop %v2502
    %v2504 = vadd.f32 %v2503, 1.0
    %v2505 = vrcp.pop %v2504
    %v2506 = vmul.f32 1.0, %v2505
    %v2507 = vadd.f32 %v577, %v2497
    %v2508 = vxor.u32 %v2507, 2147483648
    %v2509 = vmul.f32 %v2508, 1.442695
    %v2510 = vpow.pop %v2509
    %v2511 = vadd.f32 %v2510, 1.0
    %v2512 = vrcp.pop %v2511
    %v2513 = vmul.f32 1.0, %v2512
    %2514 = vmatprep.subr.mxu0 0.0
    %2515 = vmatpush1.msra.mxu0 %v708
    %2516 = vmatprep.subr.mxu0 0.0
    %2517 = vmatpush1.msra.mxu0 %v709
    %2518 = vmatprep.subr.mxu0 0.0
    %2519 = vmatpush1.msra.mxu0 %v710
    %2520 = vmatprep.subr.mxu0 0.0
    %2521 = vmatpush1.msra.mxu0 %v711
    %2522 = vmatprep.subr.mxu0 0.0
    %2523 = vmatpush1.msra.mxu0 0.0
    %2524 = vmatprep.subr.mxu0 0.0
    %2525 = vmatpush1.msra.mxu0 0.0
    %2526 = vmatprep.subr.mxu0 0.0
    %2527 = vmatpush1.msra.mxu0 0.0
    %2528 = vmatprep.subr.mxu0 0.0
    %2529 = vmatpush1.msra.mxu0 0.0
    %2530 = vmatprep.subr.mxu0 0.0
    %2531 = vmatpush1.msra.mxu0 0.0
    %2532 = vmatprep.subr.mxu0 0.0
    %2533 = vmatpush1.msra.mxu0 0.0
    %2534 = vmatprep.subr.mxu0 0.0
    %2535 = vmatpush1.msra.mxu0 0.0
    %2536 = vmatprep.subr.mxu0 0.0
    %2537 = vmatpush1.msra.mxu0 0.0
    %2538 = vmatprep.subr.mxu0 0.0
    %2539 = vmatpush1.msra.mxu0 0.0
    %2540 = vmatprep.subr.mxu0 0.0
    %2541 = vmatpush1.msra.mxu0 0.0
    %2542 = vmatprep.subr.mxu0 0.0
    %2543 = vmatpush1.msra.mxu0 0.0
    %2544 = vmatprep.subr.mxu0 0.0
    %2545 = vmatpush1.msra.mxu0 0.0
    %2546 = vmatprep.subr.mxu0 0.0
    %2547 = vmatpush1.msra.mxu0 0.0
    %2548 = vmatprep.subr.mxu0 0.0
    %2549 = vmatpush1.msra.mxu0 0.0
    %2550 = vmatprep.subr.mxu0 0.0
    %2551 = vmatpush1.msra.mxu0 0.0
    %2552 = vmatprep.subr.mxu0 0.0
    %2553 = vmatpush1.msra.mxu0 0.0
    %2554 = vmatprep.subr.mxu0 0.0
    %2555 = vmatpush1.msra.mxu0 0.0
    %2556 = vmatprep.subr.mxu0 0.0
    %2557 = vmatpush1.msra.mxu0 0.0
    %2558 = vmatprep.subr.mxu0 0.0
    %2559 = vmatpush1.msra.mxu0 0.0
    %2560 = vmatprep.subr.mxu0 0.0
    %2561 = vmatpush1.msra.mxu0 0.0
    %2562 = vmatprep.subr.mxu0 0.0
    %2563 = vmatpush1.msra.mxu0 0.0
    %2564 = vmatprep.subr.mxu0 0.0
    %2565 = vmatpush1.msra.mxu0 0.0
    %2566 = vmatprep.subr.mxu0 0.0
    %2567 = vmatpush1.msra.mxu0 0.0
    %2568 = vmatprep.subr.mxu0 0.0
    %2569 = vmatpush1.msra.mxu0 0.0
    %2570 = vmatprep.subr.mxu0 0.0
    %2571 = vmatpush1.msra.mxu0 0.0
    %2572 = vmatprep.subr.mxu0 0.0
    %2573 = vmatpush1.msra.mxu0 0.0
    %2574 = vmatprep.subr.mxu0 0.0
    %2575 = vmatpush1.msra.mxu0 0.0
    %2576 = vmatprep.subr.mxu0 0.0
    %2577 = vmatpush1.msra.mxu0 0.0
    %2578 = vmatprep.mubr.f32.mxu0 0.0
    %2579 = vmatmul.mubr.f32.gmra.mrb[0].mxu0 %v2358
    %v2580 = vpop.f32.mrb[0].mxu0
    %v2581 = vadd.f32 %v717, %v2580
    %v2582 = vpop.f32.mrb[0].mxu0
    %2583 = vdwg.mxu0
    %v2584 = vmul.f32 %v2506, %v2581
    %v2585 = vadd.f32 %v695, %v2584
    %v2586 = vtanh.pop %v2585
    %v2587 = vsub.f32 1.0, %v2513
    %v2588 = vmul.f32 %v2587, %v2586
    %v2589 = vmul.f32 %v2513, %v2356
    %v2590 = vadd.f32 %v2588, %v2589
    %v2591 = vld [vmem:[%s10] sm:$0xff]
    %v2592 = vld [vmem:[%s10 + $0x8] sm:$0x1]
    %vm2593 = vcmask 64512
    %v2595 = vsel %vm2593, %v2591, 0
    %v2598 = vsel %vm2593, %v2592, 0
    %2600 = vmatprep.subr.mxu0 0.0
    %2601 = vmatpush1.msra.mxu0 %v2590
    %2602 = vmatprep.subr.mxu0 0.0
    %2603 = vmatpush1.msra.mxu0 0.0
    %2604 = vmatprep.subr.mxu0 0.0
    %2605 = vmatpush1.msra.mxu0 0.0
    %2606 = vmatprep.subr.mxu0 0.0
    %2607 = vmatpush1.msra.mxu0 0.0
    %2608 = vmatprep.subr.mxu0 0.0
    %2609 = vmatpush1.msra.mxu0 0.0
    %2610 = vmatprep.subr.mxu0 0.0
    %2611 = vmatpush1.msra.mxu0 0.0
    %2612 = vmatprep.subr.mxu0 0.0
    %2613 = vmatpush1.msra.mxu0 0.0
    %2614 = vmatprep.subr.mxu0 0.0
    %2615 = vmatpush1.msra.mxu0 0.0
    %2616 = vmatprep.subr.mxu0 0.0
    %2617 = vmatpush1.msra.mxu0 0.0
    %2618 = vmatprep.subr.mxu0 0.0
    %2619 = vmatpush1.msra.mxu0 0.0
    %2620 = vmatprep.subr.mxu0 0.0
    %2621 = vmatpush1.msra.mxu0 0.0
    %2622 = vmatprep.subr.mxu0 0.0
    %2623 = vmatpush1.msra.mxu0 0.0
    %2624 = vmatprep.subr.mxu0 0.0
    %2625 = vmatpush1.msra.mxu0 0.0
    %2626 = vmatprep.subr.mxu0 0.0
    %2627 = vmatpush1.msra.mxu0 0.0
    %2628 = vmatprep.subr.mxu0 0.0
    %2629 = vmatpush1.msra.mxu0 0.0
    %2630 = vmatprep.subr.mxu0 0.0
    %2631 = vmatpush1.msra.mxu0 0.0
    %2632 = vmatprep.subr.mxu0 0.0
    %2633 = vmatpush1.msra.mxu0 0.0
    %2634 = vmatprep.subr.mxu0 0.0
    %2635 = vmatpush1.msra.mxu0 0.0
    %2636 = vmatprep.subr.mxu0 0.0
    %2637 = vmatpush1.msra.mxu0 0.0
    %2638 = vmatprep.subr.mxu0 0.0
    %2639 = vmatpush1.msra.mxu0 0.0
    %2640 = vmatprep.subr.mxu0 0.0
    %2641 = vmatpush1.msra.mxu0 0.0
    %2642 = vmatprep.subr.mxu0 0.0
    %2643 = vmatpush1.msra.mxu0 0.0
    %2644 = vmatprep.subr.mxu0 0.0
    %2645 = vmatpush1.msra.mxu0 0.0
    %2646 = vmatprep.subr.mxu0 0.0
    %2647 = vmatpush1.msra.mxu0 0.0
    %2648 = vmatprep.subr.mxu0 0.0
    %2649 = vmatpush1.msra.mxu0 0.0
    %2650 = vmatprep.subr.mxu0 0.0
    %2651 = vmatpush1.msra.mxu0 0.0
    %2652 = vmatprep.subr.mxu0 0.0
    %2653 = vmatpush1.msra.mxu0 0.0
    %2654 = vmatprep.subr.mxu0 0.0
    %2655 = vmatpush1.msra.mxu0 0.0
    %2656 = vmatprep.subr.mxu0 0.0
    %2657 = vmatpush1.msra.mxu0 0.0
    %2658 = vmatprep.subr.mxu0 0.0
    %2659 = vmatpush1.msra.mxu0 0.0
    %2660 = vmatprep.subr.mxu0 0.0
    %2661 = vmatpush1.msra.mxu0 0.0
    %2662 = vmatprep.subr.mxu0 0.0
    %2663 = vmatpush1.msra.mxu0 0.0
    %2664 = vmatprep.mubr.f32.mxu0 0.0
    %2665 = vmatmul.mubr.f32.gmra.mrb[0].mxu0 %v2595
    %v2666 = vpop.f32.mrb[0].mxu0
    %v2667 = vadd.f32 0.0, %v2666
    %v2668 = vpop.f32.mrb[0].mxu0
    %2669 = vmatprep.mubr.f32.mxu0 0.0
    %2670 = vmatmul.mubr.f32.gmra.mrb[0].mxu0 %v2598
    %v2671 = vpop.f32.mrb[0].mxu0
    %v2672 = vadd.f32 0.0, %v2671
    %v2673 = vpop.f32.mrb[0].mxu0
    %2674 = vdwg.mxu0
    %v2675 = vld [vmem:[#allocation4] sm:$0xff]
    %v2676 = vld [vmem:[#allocation4 + $0x8] sm:$0xff]
    %v2677 = vld [vmem:[#allocation4 + $0x10] sm:$0xff]
    %v2678 = vld [vmem:[#allocation4 + $0x18] sm:$0xff]
    %v2679 = vld [vmem:[#allocation7] sm:$0x1]
    %v2681 = vlaneseq
    %v2682 = vshrl.u32 %v2681, 7
    %v2683 = vsub.s32 0, %v2682
    %v2684 = vrot.slane %v2679, %v2683
    %v2687 = vsel %vm332, %v2667, 0
    %v2690 = vsel %vm332, %v2672, 0
    %2692 = vmatprep.subr.mxu0 0.0
    %2693 = vmatpush1.msra.mxu0 %v2675
    %2694 = vmatprep.subr.mxu0 0.0
    %2695 = vmatpush1.msra.mxu0 %v2676
    %2696 = vmatprep.subr.mxu0 0.0
    %2697 = vmatpush1.msra.mxu0 %v2677
    %2698 = vmatprep.subr.mxu0 0.0
    %2699 = vmatpush1.msra.mxu0 %v2678
    %2700 = vmatprep.subr.mxu0 0.0
    %2701 = vmatpush1.msra.mxu0 0.0
    %2702 = vmatprep.subr.mxu0 0.0
    %2703 = vmatpush1.msra.mxu0 0.0
    %2704 = vmatprep.subr.mxu0 0.0
    %2705 = vmatpush1.msra.mxu0 0.0
    %2706 = vmatprep.subr.mxu0 0.0
    %2707 = vmatpush1.msra.mxu0 0.0
    %2708 = vmatprep.subr.mxu0 0.0
    %2709 = vmatpush1.msra.mxu0 0.0
    %2710 = vmatprep.subr.mxu0 0.0
    %2711 = vmatpush1.msra.mxu0 0.0
    %2712 = vmatprep.subr.mxu0 0.0
    %2713 = vmatpush1.msra.mxu0 0.0
    %2714 = vmatprep.subr.mxu0 0.0
    %2715 = vmatpush1.msra.mxu0 0.0
    %2716 = vmatprep.subr.mxu0 0.0
    %2717 = vmatpush1.msra.mxu0 0.0
    %2718 = vmatprep.subr.mxu0 0.0
    %2719 = vmatpush1.msra.mxu0 0.0
    %2720 = vmatprep.subr.mxu0 0.0
    %2721 = vmatpush1.msra.mxu0 0.0
    %2722 = vmatprep.subr.mxu0 0.0
    %2723 = vmatpush1.msra.mxu0 0.0
    %2724 = vmatprep.subr.mxu0 0.0
    %2725 = vmatpush1.msra.mxu0 0.0
    %2726 = vmatprep.subr.mxu0 0.0
    %2727 = vmatpush1.msra.mxu0 0.0
    %2728 = vmatprep.subr.mxu0 0.0
    %2729 = vmatpush1.msra.mxu0 0.0
    %2730 = vmatprep.subr.mxu0 0.0
    %2731 = vmatpush1.msra.mxu0 0.0
    %2732 = vmatprep.subr.mxu0 0.0
    %2733 = vmatpush1.msra.mxu0 0.0
    %2734 = vmatprep.subr.mxu0 0.0
    %2735 = vmatpush1.msra.mxu0 0.0
    %2736 = vmatprep.subr.mxu0 0.0
    %2737 = vmatpush1.msra.mxu0 0.0
    %2738 = vmatprep.subr.mxu0 0.0
    %2739 = vmatpush1.msra.mxu0 0.0
    %2740 = vmatprep.subr.mxu0 0.0
    %2741 = vmatpush1.msra.mxu0 0.0
    %2742 = vmatprep.subr.mxu0 0.0
    %2743 = vmatpush1.msra.mxu0 0.0
    %2744 = vmatprep.subr.mxu0 0.0
    %2745 = vmatpush1.msra.mxu0 0.0
    %2746 = vmatprep.subr.mxu0 0.0
    %2747 = vmatpush1.msra.mxu0 0.0
    %2748 = vmatprep.subr.mxu0 0.0
    %2749 = vmatpush1.msra.mxu0 0.0
    %2750 = vmatprep.subr.mxu0 0.0
    %2751 = vmatpush1.msra.mxu0 0.0
    %2752 = vmatprep.subr.mxu0 0.0
    %2753 = vmatpush1.msra.mxu0 0.0
    %2754 = vmatprep.subr.mxu0 0.0
    %2755 = vmatpush1.msra.mxu0 0.0
    %2756 = vmatprep.mubr.f32.mxu0 0.0
    %2757 = vmatmul.mubr.f32.gmra.mrb[0].mxu0 %v2687
    %v2758 = vpop.f32.mrb[0].mxu0
    %v2759 = vadd.f32 %v2684, %v2758
    %v2760 = vpop.f32.mrb[0].mxu0
    %2761 = vmatprep.mubr.f32.mxu0 0.0
    %2762 = vmatmul.mubr.f32.gmra.mrb[0].mxu0 %v2690
    %v2763 = vpop.f32.mrb[0].mxu0
    %v2764 = vadd.f32 %v2684, %v2763
    %v2765 = vpop.f32.mrb[0].mxu0
    %2766 = vdwg.mxu0
    %s2767 = scalar_lea.vmem [#allocation4], 32
    %v2768 = vld [vmem:[%s2767] sm:$0xff]
    %v2769 = vld [vmem:[%s2767 + $0x8] sm:$0xff]
    %v2770 = vld [vmem:[%s2767 + $0x10] sm:$0xff]
    %v2771 = vld [vmem:[%s2767 + $0x18] sm:$0xff]
    %s2772 = scalar_lea.vmem [#allocation7], 1
    %v2773 = vld [vmem:[%s2772] sm:$0x1]
    %v2775 = vlaneseq
    %v2776 = vshrl.u32 %v2775, 7
    %v2777 = vsub.s32 0, %v2776
    %v2778 = vrot.slane %v2773, %v2777
    %2780 = vmatprep.subr.mxu0 0.0
    %2781 = vmatpush1.msra.mxu0 %v2768
    %2782 = vmatprep.subr.mxu0 0.0
    %2783 = vmatpush1.msra.mxu0 %v2769
    %2784 = vmatprep.subr.mxu0 0.0
    %2785 = vmatpush1.msra.mxu0 %v2770
    %2786 = vmatprep.subr.mxu0 0.0
    %2787 = vmatpush1.msra.mxu0 %v2771
    %2788 = vmatprep.subr.mxu0 0.0
    %2789 = vmatpush1.msra.mxu0 0.0
    %2790 = vmatprep.subr.mxu0 0.0
    %2791 = vmatpush1.msra.mxu0 0.0
    %2792 = vmatprep.subr.mxu0 0.0
    %2793 = vmatpush1.msra.mxu0 0.0
    %2794 = vmatprep.subr.mxu0 0.0
    %2795 = vmatpush1.msra.mxu0 0.0
    %2796 = vmatprep.subr.mxu0 0.0
    %2797 = vmatpush1.msra.mxu0 0.0
    %2798 = vmatprep.subr.mxu0 0.0
    %2799 = vmatpush1.msra.mxu0 0.0
    %2800 = vmatprep.subr.mxu0 0.0
    %2801 = vmatpush1.msra.mxu0 0.0
    %2802 = vmatprep.subr.mxu0 0.0
    %2803 = vmatpush1.msra.mxu0 0.0
    %2804 = vmatprep.subr.mxu0 0.0
    %2805 = vmatpush1.msra.mxu0 0.0
    %2806 = vmatprep.subr.mxu0 0.0
    %2807 = vmatpush1.msra.mxu0 0.0
    %2808 = vmatprep.subr.mxu0 0.0
    %2809 = vmatpush1.msra.mxu0 0.0
    %2810 = vmatprep.subr.mxu0 0.0
    %2811 = vmatpush1.msra.mxu0 0.0
    %2812 = vmatprep.subr.mxu0 0.0
    %2813 = vmatpush1.msra.mxu0 0.0
    %2814 = vmatprep.subr.mxu0 0.0
    %2815 = vmatpush1.msra.mxu0 0.0
    %2816 = vmatprep.subr.mxu0 0.0
    %2817 = vmatpush1.msra.mxu0 0.0
    %2818 = vmatprep.subr.mxu0 0.0
    %2819 = vmatpush1.msra.mxu0 0.0
    %2820 = vmatprep.subr.mxu0 0.0
    %2821 = vmatpush1.msra.mxu0 0.0
    %2822 = vmatprep.subr.mxu0 0.0
    %2823 = vmatpush1.msra.mxu0 0.0
    %2824 = vmatprep.subr.mxu0 0.0
    %2825 = vmatpush1.msra.mxu0 0.0
    %2826 = vmatprep.subr.mxu0 0.0
    %2827 = vmatpush1.msra.mxu0 0.0
    %2828 = vmatprep.subr.mxu0 0.0
    %2829 = vmatpush1.msra.mxu0 0.0
    %2830 = vmatprep.subr.mxu0 0.0
    %2831 = vmatpush1.msra.mxu0 0.0
    %2832 = vmatprep.subr.mxu0 0.0
    %2833 = vmatpush1.msra.mxu0 0.0
    %2834 = vmatprep.subr.mxu0 0.0
    %2835 = vmatpush1.msra.mxu0 0.0
    %2836 = vmatprep.subr.mxu0 0.0
    %2837 = vmatpush1.msra.mxu0 0.0
    %2838 = vmatprep.subr.mxu0 0.0
    %2839 = vmatpush1.msra.mxu0 0.0
    %2840 = vmatprep.subr.mxu0 0.0
    %2841 = vmatpush1.msra.mxu0 0.0
    %2842 = vmatprep.subr.mxu0 0.0
    %2843 = vmatpush1.msra.mxu0 0.0
    %2844 = vmatprep.mubr.f32.mxu0 0.0
    %2845 = vmatmul.mubr.f32.gmra.mrb[0].mxu0 %v2687
    %v2846 = vpop.f32.mrb[0].mxu0
    %v2847 = vadd.f32 %v2778, %v2846
    %v2848 = vpop.f32.mrb[0].mxu0
    %2849 = vmatprep.mubr.f32.mxu0 0.0
    %2850 = vmatmul.mubr.f32.gmra.mrb[0].mxu0 %v2690
    %v2851 = vpop.f32.mrb[0].mxu0
    %v2852 = vadd.f32 %v2778, %v2851
    %v2853 = vpop.f32.mrb[0].mxu0
    %2854 = vdwg.mxu0
    %s2855 = scalar_lea.vmem [#allocation4], 64
    %v2856 = vld [vmem:[%s2855] sm:$0xff]
    %v2857 = vld [vmem:[%s2855 + $0x8] sm:$0xff]
    %v2858 = vld [vmem:[%s2855 + $0x10] sm:$0xff]
    %v2859 = vld [vmem:[%s2855 + $0x18] sm:$0xff]
    %s2860 = scalar_lea.vmem [#allocation7], 2
    %v2861 = vld [vmem:[%s2860] sm:$0x1]
    %v2863 = vlaneseq
    %v2864 = vshrl.u32 %v2863, 7
    %v2865 = vsub.s32 0, %v2864
    %v2866 = vrot.slane %v2861, %v2865
    %2868 = vmatprep.subr.mxu0 0.0
    %2869 = vmatpush1.msra.mxu0 %v2856
    %2870 = vmatprep.subr.mxu0 0.0
    %2871 = vmatpush1.msra.mxu0 %v2857
    %2872 = vmatprep.subr.mxu0 0.0
    %2873 = vmatpush1.msra.mxu0 %v2858
    %2874 = vmatprep.subr.mxu0 0.0
    %2875 = vmatpush1.msra.mxu0 %v2859
    %2876 = vmatprep.subr.mxu0 0.0
    %2877 = vmatpush1.msra.mxu0 0.0
    %2878 = vmatprep.subr.mxu0 0.0
    %2879 = vmatpush1.msra.mxu0 0.0
    %2880 = vmatprep.subr.mxu0 0.0
    %2881 = vmatpush1.msra.mxu0 0.0
    %2882 = vmatprep.subr.mxu0 0.0
    %2883 = vmatpush1.msra.mxu0 0.0
    %2884 = vmatprep.subr.mxu0 0.0
    %2885 = vmatpush1.msra.mxu0 0.0
    %2886 = vmatprep.subr.mxu0 0.0
    %2887 = vmatpush1.msra.mxu0 0.0
    %2888 = vmatprep.subr.mxu0 0.0
    %2889 = vmatpush1.msra.mxu0 0.0
    %2890 = vmatprep.subr.mxu0 0.0
    %2891 = vmatpush1.msra.mxu0 0.0
    %2892 = vmatprep.subr.mxu0 0.0
    %2893 = vmatpush1.msra.mxu0 0.0
    %2894 = vmatprep.subr.mxu0 0.0
    %2895 = vmatpush1.msra.mxu0 0.0
    %2896 = vmatprep.subr.mxu0 0.0
    %2897 = vmatpush1.msra.mxu0 0.0
    %2898 = vmatprep.subr.mxu0 0.0
    %2899 = vmatpush1.msra.mxu0 0.0
    %2900 = vmatprep.subr.mxu0 0.0
    %2901 = vmatpush1.msra.mxu0 0.0
    %2902 = vmatprep.subr.mxu0 0.0
    %2903 = vmatpush1.msra.mxu0 0.0
    %2904 = vmatprep.subr.mxu0 0.0
    %2905 = vmatpush1.msra.mxu0 0.0
    %2906 = vmatprep.subr.mxu0 0.0
    %2907 = vmatpush1.msra.mxu0 0.0
    %2908 = vmatprep.subr.mxu0 0.0
    %2909 = vmatpush1.msra.mxu0 0.0
    %2910 = vmatprep.subr.mxu0 0.0
    %2911 = vmatpush1.msra.mxu0 0.0
    %2912 = vmatprep.subr.mxu0 0.0
    %2913 = vmatpush1.msra.mxu0 0.0
    %2914 = vmatprep.subr.mxu0 0.0
    %2915 = vmatpush1.msra.mxu0 0.0
    %2916 = vmatprep.subr.mxu0 0.0
    %2917 = vmatpush1.msra.mxu0 0.0
    %2918 = vmatprep.subr.mxu0 0.0
    %2919 = vmatpush1.msra.mxu0 0.0
    %2920 = vmatprep.subr.mxu0 0.0
    %2921 = vmatpush1.msra.mxu0 0.0
    %2922 = vmatprep.subr.mxu0 0.0
    %2923 = vmatpush1.msra.mxu0 0.0
    %2924 = vmatprep.subr.mxu0 0.0
    %2925 = vmatpush1.msra.mxu0 0.0
    %2926 = vmatprep.subr.mxu0 0.0
    %2927 = vmatpush1.msra.mxu0 0.0
    %2928 = vmatprep.subr.mxu0 0.0
    %2929 = vmatpush1.msra.mxu0 0.0
    %2930 = vmatprep.subr.mxu0 0.0
    %2931 = vmatpush1.msra.mxu0 0.0
    %2932 = vmatprep.mubr.f32.mxu0 0.0
    %2933 = vmatmul.mubr.f32.gmra.mrb[0].mxu0 %v2687
    %v2934 = vpop.f32.mrb[0].mxu0
    %v2935 = vadd.f32 %v2866, %v2934
    %v2936 = vpop.f32.mrb[0].mxu0
    %2937 = vmatprep.mubr.f32.mxu0 0.0
    %2938 = vmatmul.mubr.f32.gmra.mrb[0].mxu0 %v2690
    %v2939 = vpop.f32.mrb[0].mxu0
    %v2940 = vadd.f32 %v2866, %v2939
    %v2941 = vpop.f32.mrb[0].mxu0
    %2942 = vdwg.mxu0
    %v2943 = vld [vmem:[#allocation6] sm:$0xff]
    %v2944 = vld [vmem:[#allocation6 + $0x8] sm:$0xff]
    %v2945 = vld [vmem:[#allocation6 + $0x10] sm:$0xff]
    %v2946 = vld [vmem:[#allocation6 + $0x18] sm:$0xff]
    %s2947 = scalar_lea.vmem [#allocation6], 32
    %v2948 = vld [vmem:[%s2947] sm:$0xff]
    %v2949 = vld [vmem:[%s2947 + $0x8] sm:$0xff]
    %v2950 = vld [vmem:[%s2947 + $0x10] sm:$0xff]
    %v2951 = vld [vmem:[%s2947 + $0x18] sm:$0xff]
    %s2952 = scalar_lea.vmem [#allocation6], 64
    %v2953 = vld [vmem:[%s2952] sm:$0xff]
    %v2954 = vld [vmem:[%s2952 + $0x8] sm:$0xff]
    %v2955 = vld [vmem:[%s2952 + $0x10] sm:$0xff]
    %v2956 = vld [vmem:[%s2952 + $0x18] sm:$0xff]
    %v2957 = vld [vmem:[#allocation9] sm:$0x1]
    %v2959 = vlaneseq
    %v2960 = vshrl.u32 %v2959, 7
    %v2961 = vsub.s32 0, %v2960
    %v2962 = vrot.slane %v2957, %v2961
    %2964 = vmatprep.subr.mxu0 0.0
    %2965 = vmatpush1.msra.mxu0 %v2943
    %2966 = vmatprep.subr.mxu0 0.0
    %2967 = vmatpush1.msra.mxu0 %v2944
    %2968 = vmatprep.subr.mxu0 0.0
    %2969 = vmatpush1.msra.mxu0 %v2945
    %2970 = vmatprep.subr.mxu0 0.0
    %2971 = vmatpush1.msra.mxu0 %v2946
    %2972 = vmatprep.subr.mxu0 0.0
    %2973 = vmatpush1.msra.mxu0 0.0
    %2974 = vmatprep.subr.mxu0 0.0
    %2975 = vmatpush1.msra.mxu0 0.0
    %2976 = vmatprep.subr.mxu0 0.0
    %2977 = vmatpush1.msra.mxu0 0.0
    %2978 = vmatprep.subr.mxu0 0.0
    %2979 = vmatpush1.msra.mxu0 0.0
    %2980 = vmatprep.subr.mxu0 0.0
    %2981 = vmatpush1.msra.mxu0 0.0
    %2982 = vmatprep.subr.mxu0 0.0
    %2983 = vmatpush1.msra.mxu0 0.0
    %2984 = vmatprep.subr.mxu0 0.0
    %2985 = vmatpush1.msra.mxu0 0.0
    %2986 = vmatprep.subr.mxu0 0.0
    %2987 = vmatpush1.msra.mxu0 0.0
    %2988 = vmatprep.subr.mxu0 0.0
    %2989 = vmatpush1.msra.mxu0 0.0
    %2990 = vmatprep.subr.mxu0 0.0
    %2991 = vmatpush1.msra.mxu0 0.0
    %2992 = vmatprep.subr.mxu0 0.0
    %2993 = vmatpush1.msra.mxu0 0.0
    %2994 = vmatprep.subr.mxu0 0.0
    %2995 = vmatpush1.msra.mxu0 0.0
    %2996 = vmatprep.subr.mxu0 0.0
    %2997 = vmatpush1.msra.mxu0 0.0
    %2998 = vmatprep.subr.mxu0 0.0
    %2999 = vmatpush1.msra.mxu0 0.0
    %3000 = vmatprep.subr.mxu0 0.0
    %3001 = vmatpush1.msra.mxu0 0.0
    %3002 = vmatprep.subr.mxu0 0.0
    %3003 = vmatpush1.msra.mxu0 0.0
    %3004 = vmatprep.subr.mxu0 0.0
    %3005 = vmatpush1.msra.mxu0 0.0
    %3006 = vmatprep.subr.mxu0 0.0
    %3007 = vmatpush1.msra.mxu0 0.0
    %3008 = vmatprep.subr.mxu0 0.0
    %3009 = vmatpush1.msra.mxu0 0.0
    %3010 = vmatprep.subr.mxu0 0.0
    %3011 = vmatpush1.msra.mxu0 0.0
    %3012 = vmatprep.subr.mxu0 0.0
    %3013 = vmatpush1.msra.mxu0 0.0
    %3014 = vmatprep.subr.mxu0 0.0
    %3015 = vmatpush1.msra.mxu0 0.0
    %3016 = vmatprep.subr.mxu0 0.0
    %3017 = vmatpush1.msra.mxu0 0.0
    %3018 = vmatprep.subr.mxu0 0.0
    %3019 = vmatpush1.msra.mxu0 0.0
    %3020 = vmatprep.subr.mxu0 0.0
    %3021 = vmatpush1.msra.mxu0 0.0
    %3022 = vmatprep.subr.mxu0 0.0
    %3023 = vmatpush1.msra.mxu0 0.0
    %3024 = vmatprep.subr.mxu0 0.0
    %3025 = vmatpush1.msra.mxu0 0.0
    %3026 = vmatprep.subr.mxu0 0.0
    %3027 = vmatpush1.msra.mxu0 0.0
    %3028 = vmatprep.mubr.f32.mxu0 0.0
    %3029 = vmatmul.mubr.f32.gmra.mrb[0].mxu0 %v720
    %v3030 = vpop.f32.mrb[0].mxu0
    %v3031 = vadd.f32 0.0, %v3030
    %v3032 = vpop.f32.mrb[0].mxu0
    %3033 = vdwg.mxu0
    %3034 = vmatprep.subr.mxu0 0.0
    %3035 = vmatpush1.msra.mxu0 %v2948
    %3036 = vmatprep.subr.mxu0 0.0
    %3037 = vmatpush1.msra.mxu0 %v2949
    %3038 = vmatprep.subr.mxu0 0.0
    %3039 = vmatpush1.msra.mxu0 %v2950
    %3040 = vmatprep.subr.mxu0 0.0
    %3041 = vmatpush1.msra.mxu0 %v2951
    %3042 = vmatprep.subr.mxu0 0.0
    %3043 = vmatpush1.msra.mxu0 0.0
    %3044 = vmatprep.subr.mxu0 0.0
    %3045 = vmatpush1.msra.mxu0 0.0
    %3046 = vmatprep.subr.mxu0 0.0
    %3047 = vmatpush1.msra.mxu0 0.0
    %3048 = vmatprep.subr.mxu0 0.0
    %3049 = vmatpush1.msra.mxu0 0.0
    %3050 = vmatprep.subr.mxu0 0.0
    %3051 = vmatpush1.msra.mxu0 0.0
    %3052 = vmatprep.subr.mxu0 0.0
    %3053 = vmatpush1.msra.mxu0 0.0
    %3054 = vmatprep.subr.mxu0 0.0
    %3055 = vmatpush1.msra.mxu0 0.0
    %3056 = vmatprep.subr.mxu0 0.0
    %3057 = vmatpush1.msra.mxu0 0.0
    %3058 = vmatprep.subr.mxu0 0.0
    %3059 = vmatpush1.msra.mxu0 0.0
    %3060 = vmatprep.subr.mxu0 0.0
    %3061 = vmatpush1.msra.mxu0 0.0
    %3062 = vmatprep.subr.mxu0 0.0
    %3063 = vmatpush1.msra.mxu0 0.0
    %3064 = vmatprep.subr.mxu0 0.0
    %3065 = vmatpush1.msra.mxu0 0.0
    %3066 = vmatprep.subr.mxu0 0.0
    %3067 = vmatpush1.msra.mxu0 0.0
    %3068 = vmatprep.subr.mxu0 0.0
    %3069 = vmatpush1.msra.mxu0 0.0
    %3070 = vmatprep.subr.mxu0 0.0
    %3071 = vmatpush1.msra.mxu0 0.0
    %3072 = vmatprep.subr.mxu0 0.0
    %3073 = vmatpush1.msra.mxu0 0.0
    %3074 = vmatprep.subr.mxu0 0.0
    %3075 = vmatpush1.msra.mxu0 0.0
    %3076 = vmatprep.subr.mxu0 0.0
    %3077 = vmatpush1.msra.mxu0 0.0
    %3078 = vmatprep.subr.mxu0 0.0
    %3079 = vmatpush1.msra.mxu0 0.0
    %3080 = vmatprep.subr.mxu0 0.0
    %3081 = vmatpush1.msra.mxu0 0.0
    %3082 = vmatprep.subr.mxu0 0.0
    %3083 = vmatpush1.msra.mxu0 0.0
    %3084 = vmatprep.subr.mxu0 0.0
    %3085 = vmatpush1.msra.mxu0 0.0
    %3086 = vmatprep.subr.mxu0 0.0
    %3087 = vmatpush1.msra.mxu0 0.0
    %3088 = vmatprep.subr.mxu0 0.0
    %3089 = vmatpush1.msra.mxu0 0.0
    %3090 = vmatprep.subr.mxu0 0.0
    %3091 = vmatpush1.msra.mxu0 0.0
    %3092 = vmatprep.subr.mxu0 0.0
    %3093 = vmatpush1.msra.mxu0 0.0
    %3094 = vmatprep.subr.mxu0 0.0
    %3095 = vmatpush1.msra.mxu0 0.0
    %3096 = vmatprep.subr.mxu0 0.0
    %3097 = vmatpush1.msra.mxu0 0.0
    %3098 = vmatprep.mubr.f32.mxu0 0.0
    %3099 = vmatmul.mubr.f32.gmra.mrb[0].mxu0 %v720
    %v3100 = vpop.f32.mrb[0].mxu0
    %v3101 = vadd.f32 0.0, %v3100
    %v3102 = vpop.f32.mrb[0].mxu0
    %3103 = vdwg.mxu0
    %v3104 = vadd.f32 %v2759, %v3031
    %v3105 = vxor.u32 %v3104, 2147483648
    %v3106 = vmul.f32 %v3105, 1.442695
    %v3107 = vpow.pop %v3106
    %v3108 = vadd.f32 %v3107, 1.0
    %v3109 = vrcp.pop %v3108
    %v3110 = vmul.f32 1.0, %v3109
    %v3111 = vadd.f32 %v2847, %v3101
    %v3112 = vxor.u32 %v3111, 2147483648
    %v3113 = vmul.f32 %v3112, 1.442695
    %v3114 = vpow.pop %v3113
    %v3115 = vadd.f32 %v3114, 1.0
    %v3116 = vrcp.pop %v3115
    %v3117 = vmul.f32 1.0, %v3116
    %3118 = vmatprep.subr.mxu0 0.0
    %3119 = vmatpush1.msra.mxu0 %v2953
    %3120 = vmatprep.subr.mxu0 0.0
    %3121 = vmatpush1.msra.mxu0 %v2954
    %3122 = vmatprep.subr.mxu0 0.0
    %3123 = vmatpush1.msra.mxu0 %v2955
    %3124 = vmatprep.subr.mxu0 0.0
    %3125 = vmatpush1.msra.mxu0 %v2956
    %3126 = vmatprep.subr.mxu0 0.0
    %3127 = vmatpush1.msra.mxu0 0.0
    %3128 = vmatprep.subr.mxu0 0.0
    %3129 = vmatpush1.msra.mxu0 0.0
    %3130 = vmatprep.subr.mxu0 0.0
    %3131 = vmatpush1.msra.mxu0 0.0
    %3132 = vmatprep.subr.mxu0 0.0
    %3133 = vmatpush1.msra.mxu0 0.0
    %3134 = vmatprep.subr.mxu0 0.0
    %3135 = vmatpush1.msra.mxu0 0.0
    %3136 = vmatprep.subr.mxu0 0.0
    %3137 = vmatpush1.msra.mxu0 0.0
    %3138 = vmatprep.subr.mxu0 0.0
    %3139 = vmatpush1.msra.mxu0 0.0
    %3140 = vmatprep.subr.mxu0 0.0
    %3141 = vmatpush1.msra.mxu0 0.0
    %3142 = vmatprep.subr.mxu0 0.0
    %3143 = vmatpush1.msra.mxu0 0.0
    %3144 = vmatprep.subr.mxu0 0.0
    %3145 = vmatpush1.msra.mxu0 0.0
    %3146 = vmatprep.subr.mxu0 0.0
    %3147 = vmatpush1.msra.mxu0 0.0
    %3148 = vmatprep.subr.mxu0 0.0
    %3149 = vmatpush1.msra.mxu0 0.0
    %3150 = vmatprep.subr.mxu0 0.0
    %3151 = vmatpush1.msra.mxu0 0.0
    %3152 = vmatprep.subr.mxu0 0.0
    %3153 = vmatpush1.msra.mxu0 0.0
    %3154 = vmatprep.subr.mxu0 0.0
    %3155 = vmatpush1.msra.mxu0 0.0
    %3156 = vmatprep.subr.mxu0 0.0
    %3157 = vmatpush1.msra.mxu0 0.0
    %3158 = vmatprep.subr.mxu0 0.0
    %3159 = vmatpush1.msra.mxu0 0.0
    %3160 = vmatprep.subr.mxu0 0.0
    %3161 = vmatpush1.msra.mxu0 0.0
    %3162 = vmatprep.subr.mxu0 0.0
    %3163 = vmatpush1.msra.mxu0 0.0
    %3164 = vmatprep.subr.mxu0 0.0
    %3165 = vmatpush1.msra.mxu0 0.0
    %3166 = vmatprep.subr.mxu0 0.0
    %3167 = vmatpush1.msra.mxu0 0.0
    %3168 = vmatprep.subr.mxu0 0.0
    %3169 = vmatpush1.msra.mxu0 0.0
    %3170 = vmatprep.subr.mxu0 0.0
    %3171 = vmatpush1.msra.mxu0 0.0
    %3172 = vmatprep.subr.mxu0 0.0
    %3173 = vmatpush1.msra.mxu0 0.0
    %3174 = vmatprep.subr.mxu0 0.0
    %3175 = vmatpush1.msra.mxu0 0.0
    %3176 = vmatprep.subr.mxu0 0.0
    %3177 = vmatpush1.msra.mxu0 0.0
    %3178 = vmatprep.subr.mxu0 0.0
    %3179 = vmatpush1.msra.mxu0 0.0
    %3180 = vmatprep.subr.mxu0 0.0
    %3181 = vmatpush1.msra.mxu0 0.0
    %3182 = vmatprep.mubr.f32.mxu0 0.0
    %3183 = vmatmul.mubr.f32.gmra.mrb[0].mxu0 %v720
    %v3184 = vpop.f32.mrb[0].mxu0
    %v3185 = vadd.f32 %v2962, %v3184
    %v3186 = vpop.f32.mrb[0].mxu0
    %3187 = vdwg.mxu0
    %v3188 = vmul.f32 %v3110, %v3185
    %v3189 = vadd.f32 %v2935, %v3188
    %v3190 = vtanh.pop %v3189
    %v3191 = vsub.f32 1.0, %v3117
    %v3192 = vmul.f32 %v3191, %v3190
    %v3193 = vmul.f32 %v3117, 0.0
    %v3194 = vadd.f32 %v3192, %v3193
    %v3196 = vsel %vm332, %v3194, 0
    %3198 = vmatprep.subr.mxu0 0.0
    %3199 = vmatpush1.msra.mxu0 %v2943
    %3200 = vmatprep.subr.mxu0 0.0
    %3201 = vmatpush1.msra.mxu0 %v2944
    %3202 = vmatprep.subr.mxu0 0.0
    %3203 = vmatpush1.msra.mxu0 %v2945
    %3204 = vmatprep.subr.mxu0 0.0
    %3205 = vmatpush1.msra.mxu0 %v2946
    %3206 = vmatprep.subr.mxu0 0.0
    %3207 = vmatpush1.msra.mxu0 0.0
    %3208 = vmatprep.subr.mxu0 0.0
    %3209 = vmatpush1.msra.mxu0 0.0
    %3210 = vmatprep.subr.mxu0 0.0
    %3211 = vmatpush1.msra.mxu0 0.0
    %3212 = vmatprep.subr.mxu0 0.0
    %3213 = vmatpush1.msra.mxu0 0.0
    %3214 = vmatprep.subr.mxu0 0.0
    %3215 = vmatpush1.msra.mxu0 0.0
    %3216 = vmatprep.subr.mxu0 0.0
    %3217 = vmatpush1.msra.mxu0 0.0
    %3218 = vmatprep.subr.mxu0 0.0
    %3219 = vmatpush1.msra.mxu0 0.0
    %3220 = vmatprep.subr.mxu0 0.0
    %3221 = vmatpush1.msra.mxu0 0.0
    %3222 = vmatprep.subr.mxu0 0.0
    %3223 = vmatpush1.msra.mxu0 0.0
    %3224 = vmatprep.subr.mxu0 0.0
    %3225 = vmatpush1.msra.mxu0 0.0
    %3226 = vmatprep.subr.mxu0 0.0
    %3227 = vmatpush1.msra.mxu0 0.0
    %3228 = vmatprep.subr.mxu0 0.0
    %3229 = vmatpush1.msra.mxu0 0.0
    %3230 = vmatprep.subr.mxu0 0.0
    %3231 = vmatpush1.msra.mxu0 0.0
    %3232 = vmatprep.subr.mxu0 0.0
    %3233 = vmatpush1.msra.mxu0 0.0
    %3234 = vmatprep.subr.mxu0 0.0
    %3235 = vmatpush1.msra.mxu0 0.0
    %3236 = vmatprep.subr.mxu0 0.0
    %3237 = vmatpush1.msra.mxu0 0.0
    %3238 = vmatprep.subr.mxu0 0.0
    %3239 = vmatpush1.msra.mxu0 0.0
    %3240 = vmatprep.subr.mxu0 0.0
    %3241 = vmatpush1.msra.mxu0 0.0
    %3242 = vmatprep.subr.mxu0 0.0
    %3243 = vmatpush1.msra.mxu0 0.0
    %3244 = vmatprep.subr.mxu0 0.0
    %3245 = vmatpush1.msra.mxu0 0.0
    %3246 = vmatprep.subr.mxu0 0.0
    %3247 = vmatpush1.msra.mxu0 0.0
    %3248 = vmatprep.subr.mxu0 0.0
    %3249 = vmatpush1.msra.mxu0 0.0
    %3250 = vmatprep.subr.mxu0 0.0
    %3251 = vmatpush1.msra.mxu0 0.0
    %3252 = vmatprep.subr.mxu0 0.0
    %3253 = vmatpush1.msra.mxu0 0.0
    %3254 = vmatprep.subr.mxu0 0.0
    %3255 = vmatpush1.msra.mxu0 0.0
    %3256 = vmatprep.subr.mxu0 0.0
    %3257 = vmatpush1.msra.mxu0 0.0
    %3258 = vmatprep.subr.mxu0 0.0
    %3259 = vmatpush1.msra.mxu0 0.0
    %3260 = vmatprep.subr.mxu0 0.0
    %3261 = vmatpush1.msra.mxu0 0.0
    %3262 = vmatprep.mubr.f32.mxu0 0.0
    %3263 = vmatmul.mubr.f32.gmra.mrb[0].mxu0 %v3196
    %v3264 = vpop.f32.mrb[0].mxu0
    %v3265 = vadd.f32 0.0, %v3264
    %v3266 = vpop.f32.mrb[0].mxu0
    %3267 = vdwg.mxu0
    %3268 = vmatprep.subr.mxu0 0.0
    %3269 = vmatpush1.msra.mxu0 %v2948
    %3270 = vmatprep.subr.mxu0 0.0
    %3271 = vmatpush1.msra.mxu0 %v2949
    %3272 = vmatprep.subr.mxu0 0.0
    %3273 = vmatpush1.msra.mxu0 %v2950
    %3274 = vmatprep.subr.mxu0 0.0
    %3275 = vmatpush1.msra.mxu0 %v2951
    %3276 = vmatprep.subr.mxu0 0.0
    %3277 = vmatpush1.msra.mxu0 0.0
    %3278 = vmatprep.subr.mxu0 0.0
    %3279 = vmatpush1.msra.mxu0 0.0
    %3280 = vmatprep.subr.mxu0 0.0
    %3281 = vmatpush1.msra.mxu0 0.0
    %3282 = vmatprep.subr.mxu0 0.0
    %3283 = vmatpush1.msra.mxu0 0.0
    %3284 = vmatprep.subr.mxu0 0.0
    %3285 = vmatpush1.msra.mxu0 0.0
    %3286 = vmatprep.subr.mxu0 0.0
    %3287 = vmatpush1.msra.mxu0 0.0
    %3288 = vmatprep.subr.mxu0 0.0
    %3289 = vmatpush1.msra.mxu0 0.0
    %3290 = vmatprep.subr.mxu0 0.0
    %3291 = vmatpush1.msra.mxu0 0.0
    %3292 = vmatprep.subr.mxu0 0.0
    %3293 = vmatpush1.msra.mxu0 0.0
    %3294 = vmatprep.subr.mxu0 0.0
    %3295 = vmatpush1.msra.mxu0 0.0
    %3296 = vmatprep.subr.mxu0 0.0
    %3297 = vmatpush1.msra.mxu0 0.0
    %3298 = vmatprep.subr.mxu0 0.0
    %3299 = vmatpush1.msra.mxu0 0.0
    %3300 = vmatprep.subr.mxu0 0.0
    %3301 = vmatpush1.msra.mxu0 0.0
    %3302 = vmatprep.subr.mxu0 0.0
    %3303 = vmatpush1.msra.mxu0 0.0
    %3304 = vmatprep.subr.mxu0 0.0
    %3305 = vmatpush1.msra.mxu0 0.0
    %3306 = vmatprep.subr.mxu0 0.0
    %3307 = vmatpush1.msra.mxu0 0.0
    %3308 = vmatprep.subr.mxu0 0.0
    %3309 = vmatpush1.msra.mxu0 0.0
    %3310 = vmatprep.subr.mxu0 0.0
    %3311 = vmatpush1.msra.mxu0 0.0
    %3312 = vmatprep.subr.mxu0 0.0
    %3313 = vmatpush1.msra.mxu0 0.0
    %3314 = vmatprep.subr.mxu0 0.0
    %3315 = vmatpush1.msra.mxu0 0.0
    %3316 = vmatprep.subr.mxu0 0.0
    %3317 = vmatpush1.msra.mxu0 0.0
    %3318 = vmatprep.subr.mxu0 0.0
    %3319 = vmatpush1.msra.mxu0 0.0
    %3320 = vmatprep.subr.mxu0 0.0
    %3321 = vmatpush1.msra.mxu0 0.0
    %3322 = vmatprep.subr.mxu0 0.0
    %3323 = vmatpush1.msra.mxu0 0.0
    %3324 = vmatprep.subr.mxu0 0.0
    %3325 = vmatpush1.msra.mxu0 0.0
    %3326 = vmatprep.subr.mxu0 0.0
    %3327 = vmatpush1.msra.mxu0 0.0
    %3328 = vmatprep.subr.mxu0 0.0
    %3329 = vmatpush1.msra.mxu0 0.0
    %3330 = vmatprep.subr.mxu0 0.0
    %3331 = vmatpush1.msra.mxu0 0.0
    %3332 = vmatprep.mubr.f32.mxu0 0.0
    %3333 = vmatmul.mubr.f32.gmra.mrb[0].mxu0 %v3196
    %v3334 = vpop.f32.mrb[0].mxu0
    %v3335 = vadd.f32 0.0, %v3334
    %v3336 = vpop.f32.mrb[0].mxu0
    %3337 = vdwg.mxu0
    %v3339 = vrot.slane %v3265, 5
    %v3341 = vadd.f32 %v2759, %v3339
    %v3342 = vxor.u32 %v3341, 2147483648
    %v3343 = vmul.f32 %v3342, 1.442695
    %v3344 = vpow.pop %v3343
    %v3345 = vadd.f32 %v3344, 1.0
    %v3346 = vrcp.pop %v3345
    %v3347 = vmul.f32 1.0, %v3346
    %v3349 = vrot.slane %v3335, 5
    %v3351 = vadd.f32 %v2847, %v3349
    %v3352 = vxor.u32 %v3351, 2147483648
    %v3353 = vmul.f32 %v3352, 1.442695
    %v3354 = vpow.pop %v3353
    %v3355 = vadd.f32 %v3354, 1.0
    %v3356 = vrcp.pop %v3355
    %v3357 = vmul.f32 1.0, %v3356
    %3358 = vmatprep.subr.mxu0 0.0
    %3359 = vmatpush1.msra.mxu0 %v2953
    %3360 = vmatprep.subr.mxu0 0.0
    %3361 = vmatpush1.msra.mxu0 %v2954
    %3362 = vmatprep.subr.mxu0 0.0
    %3363 = vmatpush1.msra.mxu0 %v2955
    %3364 = vmatprep.subr.mxu0 0.0
    %3365 = vmatpush1.msra.mxu0 %v2956
    %3366 = vmatprep.subr.mxu0 0.0
    %3367 = vmatpush1.msra.mxu0 0.0
    %3368 = vmatprep.subr.mxu0 0.0
    %3369 = vmatpush1.msra.mxu0 0.0
    %3370 = vmatprep.subr.mxu0 0.0
    %3371 = vmatpush1.msra.mxu0 0.0
    %3372 = vmatprep.subr.mxu0 0.0
    %3373 = vmatpush1.msra.mxu0 0.0
    %3374 = vmatprep.subr.mxu0 0.0
    %3375 = vmatpush1.msra.mxu0 0.0
    %3376 = vmatprep.subr.mxu0 0.0
    %3377 = vmatpush1.msra.mxu0 0.0
    %3378 = vmatprep.subr.mxu0 0.0
    %3379 = vmatpush1.msra.mxu0 0.0
    %3380 = vmatprep.subr.mxu0 0.0
    %3381 = vmatpush1.msra.mxu0 0.0
    %3382 = vmatprep.subr.mxu0 0.0
    %3383 = vmatpush1.msra.mxu0 0.0
    %3384 = vmatprep.subr.mxu0 0.0
    %3385 = vmatpush1.msra.mxu0 0.0
    %3386 = vmatprep.subr.mxu0 0.0
    %3387 = vmatpush1.msra.mxu0 0.0
    %3388 = vmatprep.subr.mxu0 0.0
    %3389 = vmatpush1.msra.mxu0 0.0
    %3390 = vmatprep.subr.mxu0 0.0
    %3391 = vmatpush1.msra.mxu0 0.0
    %3392 = vmatprep.subr.mxu0 0.0
    %3393 = vmatpush1.msra.mxu0 0.0
    %3394 = vmatprep.subr.mxu0 0.0
    %3395 = vmatpush1.msra.mxu0 0.0
    %3396 = vmatprep.subr.mxu0 0.0
    %3397 = vmatpush1.msra.mxu0 0.0
    %3398 = vmatprep.subr.mxu0 0.0
    %3399 = vmatpush1.msra.mxu0 0.0
    %3400 = vmatprep.subr.mxu0 0.0
    %3401 = vmatpush1.msra.mxu0 0.0
    %3402 = vmatprep.subr.mxu0 0.0
    %3403 = vmatpush1.msra.mxu0 0.0
    %3404 = vmatprep.subr.mxu0 0.0
    %3405 = vmatpush1.msra.mxu0 0.0
    %3406 = vmatprep.subr.mxu0 0.0
    %3407 = vmatpush1.msra.mxu0 0.0
    %3408 = vmatprep.subr.mxu0 0.0
    %3409 = vmatpush1.msra.mxu0 0.0
    %3410 = vmatprep.subr.mxu0 0.0
    %3411 = vmatpush1.msra.mxu0 0.0
    %3412 = vmatprep.subr.mxu0 0.0
    %3413 = vmatpush1.msra.mxu0 0.0
    %3414 = vmatprep.subr.mxu0 0.0
    %3415 = vmatpush1.msra.mxu0 0.0
    %3416 = vmatprep.subr.mxu0 0.0
    %3417 = vmatpush1.msra.mxu0 0.0
    %3418 = vmatprep.subr.mxu0 0.0
    %3419 = vmatpush1.msra.mxu0 0.0
    %3420 = vmatprep.subr.mxu0 0.0
    %3421 = vmatpush1.msra.mxu0 0.0
    %3422 = vmatprep.mubr.f32.mxu0 0.0
    %3423 = vmatmul.mubr.f32.gmra.mrb[0].mxu0 %v3196
    %v3424 = vpop.f32.mrb[0].mxu0
    %v3425 = vadd.f32 %v2962, %v3424
    %v3426 = vpop.f32.mrb[0].mxu0
    %3427 = vdwg.mxu0
    %v3429 = vrot.slane %v3425, 5
    %v3431 = vmul.f32 %v3347, %v3429
    %v3432 = vadd.f32 %v2935, %v3431
    %v3433 = vtanh.pop %v3432
    %v3434 = vsub.f32 1.0, %v3357
    %v3435 = vmul.f32 %v3434, %v3433
    %v3436 = vrot.slane %v3194, 5
    %v3438 = vmul.f32 %v3357, %v3436
    %v3439 = vadd.f32 %v3435, %v3438
    %v3441 = vrot.slane %v3439, 3
    %v3442 = vsel %vm332, %v3441, 0
    %3444 = vmatprep.subr.mxu0 0.0
    %3445 = vmatpush1.msra.mxu0 %v2943
    %3446 = vmatprep.subr.mxu0 0.0
    %3447 = vmatpush1.msra.mxu0 %v2944
    %3448 = vmatprep.subr.mxu0 0.0
    %3449 = vmatpush1.msra.mxu0 %v2945
    %3450 = vmatprep.subr.mxu0 0.0
    %3451 = vmatpush1.msra.mxu0 %v2946
    %3452 = vmatprep.subr.mxu0 0.0
    %3453 = vmatpush1.msra.mxu0 0.0
    %3454 = vmatprep.subr.mxu0 0.0
    %3455 = vmatpush1.msra.mxu0 0.0
    %3456 = vmatprep.subr.mxu0 0.0
    %3457 = vmatpush1.msra.mxu0 0.0
    %3458 = vmatprep.subr.mxu0 0.0
    %3459 = vmatpush1.msra.mxu0 0.0
    %3460 = vmatprep.subr.mxu0 0.0
    %3461 = vmatpush1.msra.mxu0 0.0
    %3462 = vmatprep.subr.mxu0 0.0
    %3463 = vmatpush1.msra.mxu0 0.0
    %3464 = vmatprep.subr.mxu0 0.0
    %3465 = vmatpush1.msra.mxu0 0.0
    %3466 = vmatprep.subr.mxu0 0.0
    %3467 = vmatpush1.msra.mxu0 0.0
    %3468 = vmatprep.subr.mxu0 0.0
    %3469 = vmatpush1.msra.mxu0 0.0
    %3470 = vmatprep.subr.mxu0 0.0
    %3471 = vmatpush1.msra.mxu0 0.0
    %3472 = vmatprep.subr.mxu0 0.0
    %3473 = vmatpush1.msra.mxu0 0.0
    %3474 = vmatprep.subr.mxu0 0.0
    %3475 = vmatpush1.msra.mxu0 0.0
    %3476 = vmatprep.subr.mxu0 0.0
    %3477 = vmatpush1.msra.mxu0 0.0
    %3478 = vmatprep.subr.mxu0 0.0
    %3479 = vmatpush1.msra.mxu0 0.0
    %3480 = vmatprep.subr.mxu0 0.0
    %3481 = vmatpush1.msra.mxu0 0.0
    %3482 = vmatprep.subr.mxu0 0.0
    %3483 = vmatpush1.msra.mxu0 0.0
    %3484 = vmatprep.subr.mxu0 0.0
    %3485 = vmatpush1.msra.mxu0 0.0
    %3486 = vmatprep.subr.mxu0 0.0
    %3487 = vmatpush1.msra.mxu0 0.0
    %3488 = vmatprep.subr.mxu0 0.0
    %3489 = vmatpush1.msra.mxu0 0.0
    %3490 = vmatprep.subr.mxu0 0.0
    %3491 = vmatpush1.msra.mxu0 0.0
    %3492 = vmatprep.subr.mxu0 0.0
    %3493 = vmatpush1.msra.mxu0 0.0
    %3494 = vmatprep.subr.mxu0 0.0
    %3495 = vmatpush1.msra.mxu0 0.0
    %3496 = vmatprep.subr.mxu0 0.0
    %3497 = vmatpush1.msra.mxu0 0.0
    %3498 = vmatprep.subr.mxu0 0.0
    %3499 = vmatpush1.msra.mxu0 0.0
    %3500 = vmatprep.subr.mxu0 0.0
    %3501 = vmatpush1.msra.mxu0 0.0
    %3502 = vmatprep.subr.mxu0 0.0
    %3503 = vmatpush1.msra.mxu0 0.0
    %3504 = vmatprep.subr.mxu0 0.0
    %3505 = vmatpush1.msra.mxu0 0.0
    %3506 = vmatprep.subr.mxu0 0.0
    %3507 = vmatpush1.msra.mxu0 0.0
    %3508 = vmatprep.mubr.f32.mxu0 0.0
    %3509 = vmatmul.mubr.f32.gmra.mrb[0].mxu0 %v3442
    %v3510 = vpop.f32.mrb[0].mxu0
    %v3511 = vadd.f32 0.0, %v3510
    %v3512 = vpop.f32.mrb[0].mxu0
    %3513 = vdwg.mxu0
    %3514 = vmatprep.subr.mxu0 0.0
    %3515 = vmatpush1.msra.mxu0 %v2948
    %3516 = vmatprep.subr.mxu0 0.0
    %3517 = vmatpush1.msra.mxu0 %v2949
    %3518 = vmatprep.subr.mxu0 0.0
    %3519 = vmatpush1.msra.mxu0 %v2950
    %3520 = vmatprep.subr.mxu0 0.0
    %3521 = vmatpush1.msra.mxu0 %v2951
    %3522 = vmatprep.subr.mxu0 0.0
    %3523 = vmatpush1.msra.mxu0 0.0
    %3524 = vmatprep.subr.mxu0 0.0
    %3525 = vmatpush1.msra.mxu0 0.0
    %3526 = vmatprep.subr.mxu0 0.0
    %3527 = vmatpush1.msra.mxu0 0.0
    %3528 = vmatprep.subr.mxu0 0.0
    %3529 = vmatpush1.msra.mxu0 0.0
    %3530 = vmatprep.subr.mxu0 0.0
    %3531 = vmatpush1.msra.mxu0 0.0
    %3532 = vmatprep.subr.mxu0 0.0
    %3533 = vmatpush1.msra.mxu0 0.0
    %3534 = vmatprep.subr.mxu0 0.0
    %3535 = vmatpush1.msra.mxu0 0.0
    %3536 = vmatprep.subr.mxu0 0.0
    %3537 = vmatpush1.msra.mxu0 0.0
    %3538 = vmatprep.subr.mxu0 0.0
    %3539 = vmatpush1.msra.mxu0 0.0
    %3540 = vmatprep.subr.mxu0 0.0
    %3541 = vmatpush1.msra.mxu0 0.0
    %3542 = vmatprep.subr.mxu0 0.0
    %3543 = vmatpush1.msra.mxu0 0.0
    %3544 = vmatprep.subr.mxu0 0.0
    %3545 = vmatpush1.msra.mxu0 0.0
    %3546 = vmatprep.subr.mxu0 0.0
    %3547 = vmatpush1.msra.mxu0 0.0
    %3548 = vmatprep.subr.mxu0 0.0
    %3549 = vmatpush1.msra.mxu0 0.0
    %3550 = vmatprep.subr.mxu0 0.0
    %3551 = vmatpush1.msra.mxu0 0.0
    %3552 = vmatprep.subr.mxu0 0.0
    %3553 = vmatpush1.msra.mxu0 0.0
    %3554 = vmatprep.subr.mxu0 0.0
    %3555 = vmatpush1.msra.mxu0 0.0
    %3556 = vmatprep.subr.mxu0 0.0
    %3557 = vmatpush1.msra.mxu0 0.0
    %3558 = vmatprep.subr.mxu0 0.0
    %3559 = vmatpush1.msra.mxu0 0.0
    %3560 = vmatprep.subr.mxu0 0.0
    %3561 = vmatpush1.msra.mxu0 0.0
    %3562 = vmatprep.subr.mxu0 0.0
    %3563 = vmatpush1.msra.mxu0 0.0
    %3564 = vmatprep.subr.mxu0 0.0
    %3565 = vmatpush1.msra.mxu0 0.0
    %3566 = vmatprep.subr.mxu0 0.0
    %3567 = vmatpush1.msra.mxu0 0.0
    %3568 = vmatprep.subr.mxu0 0.0
    %3569 = vmatpush1.msra.mxu0 0.0
    %3570 = vmatprep.subr.mxu0 0.0
    %3571 = vmatpush1.msra.mxu0 0.0
    %3572 = vmatprep.subr.mxu0 0.0
    %3573 = vmatpush1.msra.mxu0 0.0
    %3574 = vmatprep.subr.mxu0 0.0
    %3575 = vmatpush1.msra.mxu0 0.0
    %3576 = vmatprep.subr.mxu0 0.0
    %3577 = vmatpush1.msra.mxu0 0.0
    %3578 = vmatprep.mubr.f32.mxu0 0.0
    %3579 = vmatmul.mubr.f32.gmra.mrb[0].mxu0 %v3442
    %v3580 = vpop.f32.mrb[0].mxu0
    %v3581 = vadd.f32 0.0, %v3580
    %v3582 = vpop.f32.mrb[0].mxu0
    %3583 = vdwg.mxu0
    %v3585 = vrot.slane %v3511, 2
    %v3587 = vadd.f32 %v2759, %v3585
    %v3588 = vadd.f32 %v2764, %v3585
    %v3589 = vxor.u32 %v3587, 2147483648
    %v3590 = vxor.u32 %v3588, 2147483648
    %v3591 = vmul.f32 %v3589, 1.442695
    %v3592 = vpow.pop %v3591
    %v3593 = vmul.f32 %v3590, 1.442695
    %v3594 = vpow.pop %v3593
    %v3595 = vadd.f32 %v3592, 1.0
    %v3596 = vadd.f32 %v3594, 1.0
    %v3597 = vrcp.pop %v3595
    %v3598 = vmul.f32 1.0, %v3597
    %v3599 = vrcp.pop %v3596
    %v3600 = vmul.f32 1.0, %v3599
    %v3602 = vrot.slane %v3581, 2
    %v3604 = vadd.f32 %v2847, %v3602
    %v3605 = vadd.f32 %v2852, %v3602
    %v3606 = vxor.u32 %v3604, 2147483648
    %v3607 = vxor.u32 %v3605, 2147483648
    %v3608 = vmul.f32 %v3606, 1.442695
    %v3609 = vpow.pop %v3608
    %v3610 = vmul.f32 %v3607, 1.442695
    %v3611 = vpow.pop %v3610
    %v3612 = vadd.f32 %v3609, 1.0
    %v3613 = vadd.f32 %v3611, 1.0
    %v3614 = vrcp.pop %v3612
    %v3615 = vmul.f32 1.0, %v3614
    %v3616 = vrcp.pop %v3613
    %v3617 = vmul.f32 1.0, %v3616
    %3618 = vmatprep.subr.mxu0 0.0
    %3619 = vmatpush1.msra.mxu0 %v2953
    %3620 = vmatprep.subr.mxu0 0.0
    %3621 = vmatpush1.msra.mxu0 %v2954
    %3622 = vmatprep.subr.mxu0 0.0
    %3623 = vmatpush1.msra.mxu0 %v2955
    %3624 = vmatprep.subr.mxu0 0.0
    %3625 = vmatpush1.msra.mxu0 %v2956
    %3626 = vmatprep.subr.mxu0 0.0
    %3627 = vmatpush1.msra.mxu0 0.0
    %3628 = vmatprep.subr.mxu0 0.0
    %3629 = vmatpush1.msra.mxu0 0.0
    %3630 = vmatprep.subr.mxu0 0.0
    %3631 = vmatpush1.msra.mxu0 0.0
    %3632 = vmatprep.subr.mxu0 0.0
    %3633 = vmatpush1.msra.mxu0 0.0
    %3634 = vmatprep.subr.mxu0 0.0
    %3635 = vmatpush1.msra.mxu0 0.0
    %3636 = vmatprep.subr.mxu0 0.0
    %3637 = vmatpush1.msra.mxu0 0.0
    %3638 = vmatprep.subr.mxu0 0.0
    %3639 = vmatpush1.msra.mxu0 0.0
    %3640 = vmatprep.subr.mxu0 0.0
    %3641 = vmatpush1.msra.mxu0 0.0
    %3642 = vmatprep.subr.mxu0 0.0
    %3643 = vmatpush1.msra.mxu0 0.0
    %3644 = vmatprep.subr.mxu0 0.0
    %3645 = vmatpush1.msra.mxu0 0.0
    %3646 = vmatprep.subr.mxu0 0.0
    %3647 = vmatpush1.msra.mxu0 0.0
    %3648 = vmatprep.subr.mxu0 0.0
    %3649 = vmatpush1.msra.mxu0 0.0
    %3650 = vmatprep.subr.mxu0 0.0
    %3651 = vmatpush1.msra.mxu0 0.0
    %3652 = vmatprep.subr.mxu0 0.0
    %3653 = vmatpush1.msra.mxu0 0.0
    %3654 = vmatprep.subr.mxu0 0.0
    %3655 = vmatpush1.msra.mxu0 0.0
    %3656 = vmatprep.subr.mxu0 0.0
    %3657 = vmatpush1.msra.mxu0 0.0
    %3658 = vmatprep.subr.mxu0 0.0
    %3659 = vmatpush1.msra.mxu0 0.0
    %3660 = vmatprep.subr.mxu0 0.0
    %3661 = vmatpush1.msra.mxu0 0.0
    %3662 = vmatprep.subr.mxu0 0.0
    %3663 = vmatpush1.msra.mxu0 0.0
    %3664 = vmatprep.subr.mxu0 0.0
    %3665 = vmatpush1.msra.mxu0 0.0
    %3666 = vmatprep.subr.mxu0 0.0
    %3667 = vmatpush1.msra.mxu0 0.0
    %3668 = vmatprep.subr.mxu0 0.0
    %3669 = vmatpush1.msra.mxu0 0.0
    %3670 = vmatprep.subr.mxu0 0.0
    %3671 = vmatpush1.msra.mxu0 0.0
    %3672 = vmatprep.subr.mxu0 0.0
    %3673 = vmatpush1.msra.mxu0 0.0
    %3674 = vmatprep.subr.mxu0 0.0
    %3675 = vmatpush1.msra.mxu0 0.0
    %3676 = vmatprep.subr.mxu0 0.0
    %3677 = vmatpush1.msra.mxu0 0.0
    %3678 = vmatprep.subr.mxu0 0.0
    %3679 = vmatpush1.msra.mxu0 0.0
    %3680 = vmatprep.subr.mxu0 0.0
    %3681 = vmatpush1.msra.mxu0 0.0
    %3682 = vmatprep.mubr.f32.mxu0 0.0
    %3683 = vmatmul.mubr.f32.gmra.mrb[0].mxu0 %v3442
    %v3684 = vpop.f32.mrb[0].mxu0
    %v3685 = vadd.f32 %v2962, %v3684
    %v3686 = vpop.f32.mrb[0].mxu0
    %3687 = vdwg.mxu0
    %v3689 = vrot.slane %v3685, 2
    %v3691 = vmul.f32 %v3598, %v3689
    %v3692 = vmul.f32 %v3600, %v3689
    %v3693 = vadd.f32 %v2935, %v3691
    %v3694 = vadd.f32 %v2940, %v3692
    %v3695 = vtanh.pop %v3693
    %v3696 = vtanh.pop %v3694
    %v3697 = vsub.f32 1.0, %v3615
    %v3698 = vsub.f32 1.0, %v3617
    %v3699 = vmul.f32 %v3697, %v3695
    %v3700 = vmul.f32 %v3698, %v3696
    %v3701 = vrot.slane %v3439, 5
    %v3703 = vmul.f32 %v3615, %v3701
    %v3704 = vmul.f32 %v3617, %v3701
    %v3705 = vadd.f32 %v3699, %v3703
    %v3706 = vadd.f32 %v3700, %v3704
    %v3707 = vld [vmem:[%s11] sm:$0x7]
    %3709 = vset.pattern.permute.xlu0 2
    %3710 = vperm.xlu0 %3709, %v3707
    %v3711 = vpop.permute.xlu0 %3710
    %v3715 = vrot.slane %v3705, 6
    %v3716 = vrot.slane %v3706, 6
    %v3717 = vsel %vm212, %v3715, %v3716
    %v3719 = vmul.f32 %v3711, %v3717
    %v3720 = vsub.f32 1.0, %v3707
    %3722 = vset.pattern.permute.xlu0 2
    %3723 = vperm.xlu0 %3722, %v3720
    %v3724 = vpop.permute.xlu0 %3723
    %v3727 = vmul.f32 %v3724, %v3441
    %v3728 = vadd.f32 %v3719, %v3727
    %vm3729 = vcmask 256000
    %v3730 = vsel %vm3729, %v3728, 0.0
    %v3731 = vrot.slane %v3730, 4
    %v3732 = vadd.f32 %v3730, %v3731
    %v3733 = vrot.slane %v3732, 2
    %v3734 = vadd.f32 %v3732, %v3733
    %v3735 = vrot.slane %v3734, 1
    %v3736 = vadd.f32 %v3734, %v3735
    %v3737 = vmul.f32 %v3736, 0.33333334
    %v3738 = vld [vmem:[%s12] sm:$0xff]
    %v3739 = vld [vmem:[%s12 + $0x8] sm:$0xff]
    %v3740 = vld [vmem:[%s12 + $0x10] sm:$0xff]
    %v3741 = vld [vmem:[%s12 + $0x18] sm:$0xff]
    %v3743 = vsel %vm332, %v3737, 0
    %3745 = vmatprep.subr.mxu0 0.0
    %3746 = vmatpush1.msra.mxu0 %v3738
    %3747 = vmatprep.subr.mxu0 0.0
    %3748 = vmatpush1.msra.mxu0 %v3739
    %3749 = vmatprep.subr.mxu0 0.0
    %3750 = vmatpush1.msra.mxu0 %v3740
    %3751 = vmatprep.subr.mxu0 0.0
    %3752 = vmatpush1.msra.mxu0 %v3741
    %3753 = vmatprep.subr.mxu0 0.0
    %3754 = vmatpush1.msra.mxu0 0.0
    %3755 = vmatprep.subr.mxu0 0.0
    %3756 = vmatpush1.msra.mxu0 0.0
    %3757 = vmatprep.subr.mxu0 0.0
    %3758 = vmatpush1.msra.mxu0 0.0
    %3759 = vmatprep.subr.mxu0 0.0
    %3760 = vmatpush1.msra.mxu0 0.0
    %3761 = vmatprep.subr.mxu0 0.0
    %3762 = vmatpush1.msra.mxu0 0.0
    %3763 = vmatprep.subr.mxu0 0.0
    %3764 = vmatpush1.msra.mxu0 0.0
    %3765 = vmatprep.subr.mxu0 0.0
    %3766 = vmatpush1.msra.mxu0 0.0
    %3767 = vmatprep.subr.mxu0 0.0
    %3768 = vmatpush1.msra.mxu0 0.0
    %3769 = vmatprep.subr.mxu0 0.0
    %3770 = vmatpush1.msra.mxu0 0.0
    %3771 = vmatprep.subr.mxu0 0.0
    %3772 = vmatpush1.msra.mxu0 0.0
    %3773 = vmatprep.subr.mxu0 0.0
    %3774 = vmatpush1.msra.mxu0 0.0
    %3775 = vmatprep.subr.mxu0 0.0
    %3776 = vmatpush1.msra.mxu0 0.0
    %3777 = vmatprep.subr.mxu0 0.0
    %3778 = vmatpush1.msra.mxu0 0.0
    %3779 = vmatprep.subr.mxu0 0.0
    %3780 = vmatpush1.msra.mxu0 0.0
    %3781 = vmatprep.subr.mxu0 0.0
    %3782 = vmatpush1.msra.mxu0 0.0
    %3783 = vmatprep.subr.mxu0 0.0
    %3784 = vmatpush1.msra.mxu0 0.0
    %3785 = vmatprep.subr.mxu0 0.0
    %3786 = vmatpush1.msra.mxu0 0.0
    %3787 = vmatprep.subr.mxu0 0.0
    %3788 = vmatpush1.msra.mxu0 0.0
    %3789 = vmatprep.subr.mxu0 0.0
    %3790 = vmatpush1.msra.mxu0 0.0
    %3791 = vmatprep.subr.mxu0 0.0
    %3792 = vmatpush1.msra.mxu0 0.0
    %3793 = vmatprep.subr.mxu0 0.0
    %3794 = vmatpush1.msra.mxu0 0.0
    %3795 = vmatprep.subr.mxu0 0.0
    %3796 = vmatpush1.msra.mxu0 0.0
    %3797 = vmatprep.subr.mxu0 0.0
    %3798 = vmatpush1.msra.mxu0 0.0
    %3799 = vmatprep.subr.mxu0 0.0
    %3800 = vmatpush1.msra.mxu0 0.0
    %3801 = vmatprep.subr.mxu0 0.0
    %3802 = vmatpush1.msra.mxu0 0.0
    %3803 = vmatprep.subr.mxu0 0.0
    %3804 = vmatpush1.msra.mxu0 0.0
    %3805 = vmatprep.subr.mxu0 0.0
    %3806 = vmatpush1.msra.mxu0 0.0
    %3807 = vmatprep.subr.mxu0 0.0
    %3808 = vmatpush1.msra.mxu0 0.0
    %3809 = vmatprep.mubr.f32.mxu0 0.0
    %3810 = vmatmul.mubr.f32.gmra.mrb[0].mxu0 %v3743
    %v3811 = vpop.f32.mrb[0].mxu0
    %v3812 = vadd.f32 0.0, %v3811
    %v3813 = vpop.f32.mrb[0].mxu0
    %3814 = vdwg.mxu0
    %v3815 = vld [vmem:[#allocation10] sm:$0xff]
    %v3816 = vld [vmem:[#allocation10 + $0x8] sm:$0xff]
    %v3817 = vld [vmem:[#allocation10 + $0x10] sm:$0xff]
    %v3818 = vld [vmem:[#allocation10 + $0x18] sm:$0xff]
    %v3820 = vsel %vm332, %v2590, 0
    %3822 = vmatprep.subr.mxu0 0.0
    %3823 = vmatpush1.msra.mxu0 %v3815
    %3824 = vmatprep.subr.mxu0 0.0
    %3825 = vmatpush1.msra.mxu0 %v3816
    %3826 = vmatprep.subr.mxu0 0.0
    %3827 = vmatpush1.msra.mxu0 %v3817
    %3828 = vmatprep.subr.mxu0 0.0
    %3829 = vmatpush1.msra.mxu0 %v3818
    %3830 = vmatprep.subr.mxu0 0.0
    %3831 = vmatpush1.msra.mxu0 0.0
    %3832 = vmatprep.subr.mxu0 0.0
    %3833 = vmatpush1.msra.mxu0 0.0
    %3834 = vmatprep.subr.mxu0 0.0
    %3835 = vmatpush1.msra.mxu0 0.0
    %3836 = vmatprep.subr.mxu0 0.0
    %3837 = vmatpush1.msra.mxu0 0.0
    %3838 = vmatprep.subr.mxu0 0.0
    %3839 = vmatpush1.msra.mxu0 0.0
    %3840 = vmatprep.subr.mxu0 0.0
    %3841 = vmatpush1.msra.mxu0 0.0
    %3842 = vmatprep.subr.mxu0 0.0
    %3843 = vmatpush1.msra.mxu0 0.0
    %3844 = vmatprep.subr.mxu0 0.0
    %3845 = vmatpush1.msra.mxu0 0.0
    %3846 = vmatprep.subr.mxu0 0.0
    %3847 = vmatpush1.msra.mxu0 0.0
    %3848 = vmatprep.subr.mxu0 0.0
    %3849 = vmatpush1.msra.mxu0 0.0
    %3850 = vmatprep.subr.mxu0 0.0
    %3851 = vmatpush1.msra.mxu0 0.0
    %3852 = vmatprep.subr.mxu0 0.0
    %3853 = vmatpush1.msra.mxu0 0.0
    %3854 = vmatprep.subr.mxu0 0.0
    %3855 = vmatpush1.msra.mxu0 0.0
    %3856 = vmatprep.subr.mxu0 0.0
    %3857 = vmatpush1.msra.mxu0 0.0
    %3858 = vmatprep.subr.mxu0 0.0
    %3859 = vmatpush1.msra.mxu0 0.0
    %3860 = vmatprep.subr.mxu0 0.0
    %3861 = vmatpush1.msra.mxu0 0.0
    %3862 = vmatprep.subr.mxu0 0.0
    %3863 = vmatpush1.msra.mxu0 0.0
    %3864 = vmatprep.subr.mxu0 0.0
    %3865 = vmatpush1.msra.mxu0 0.0
    %3866 = vmatprep.subr.mxu0 0.0
    %3867 = vmatpush1.msra.mxu0 0.0
    %3868 = vmatprep.subr.mxu0 0.0
    %3869 = vmatpush1.msra.mxu0 0.0
    %3870 = vmatprep.subr.mxu0 0.0
    %3871 = vmatpush1.msra.mxu0 0.0
    %3872 = vmatprep.subr.mxu0 0.0
    %3873 = vmatpush1.msra.mxu0 0.0
    %3874 = vmatprep.subr.mxu0 0.0
    %3875 = vmatpush1.msra.mxu0 0.0
    %3876 = vmatprep.subr.mxu0 0.0
    %3877 = vmatpush1.msra.mxu0 0.0
    %3878 = vmatprep.subr.mxu0 0.0
    %3879 = vmatpush1.msra.mxu0 0.0
    %3880 = vmatprep.subr.mxu0 0.0
    %3881 = vmatpush1.msra.mxu0 0.0
    %3882 = vmatprep.subr.mxu0 0.0
    %3883 = vmatpush1.msra.mxu0 0.0
    %3884 = vmatprep.subr.mxu0 0.0
    %3885 = vmatpush1.msra.mxu0 0.0
    %3886 = vmatprep.mubr.f32.mxu0 0.0
    %3887 = vmatmul.mubr.f32.gmra.mrb[0].mxu0 %v3820
    %v3888 = vpop.f32.mrb[0].mxu0
    %v3889 = vadd.f32 0.0, %v3888
    %v3890 = vpop.f32.mrb[0].mxu0
    %3891 = vdwg.mxu0
    %v3892 = vlaneseq
    %v3893 = vshrl.u32 %v3892, 7
    %v3894 = vsub.s32 0, %v3893
    %v3895 = vrot.slane %v3812, %v3894
    %v3896 = vadd.f32 %v3895, %v3889
    %v3897 = vtanh.pop %v3896
    %v3898 = vld [vmem:[%s14] sm:$0xff]
    %v3899 = vld [vmem:[%s14 + $0x8] sm:$0xff]
    %v3900 = vld [vmem:[%s14 + $0x10] sm:$0xff]
    %v3901 = vld [vmem:[%s14 + $0x18] sm:$0xff]
    %v3903 = vsel %vm332, %v3897, 0
    %3905 = vmatprep.subr.mxu0 0.0
    %3906 = vmatpush1.msra.mxu0 %v3898
    %3907 = vmatprep.subr.mxu0 0.0
    %3908 = vmatpush1.msra.mxu0 %v3899
    %3909 = vmatprep.subr.mxu0 0.0
    %3910 = vmatpush1.msra.mxu0 %v3900
    %3911 = vmatprep.subr.mxu0 0.0
    %3912 = vmatpush1.msra.mxu0 %v3901
    %3913 = vmatprep.subr.mxu0 0.0
    %3914 = vmatpush1.msra.mxu0 0.0
    %3915 = vmatprep.subr.mxu0 0.0
    %3916 = vmatpush1.msra.mxu0 0.0
    %3917 = vmatprep.subr.mxu0 0.0
    %3918 = vmatpush1.msra.mxu0 0.0
    %3919 = vmatprep.subr.mxu0 0.0
    %3920 = vmatpush1.msra.mxu0 0.0
    %3921 = vmatprep.subr.mxu0 0.0
    %3922 = vmatpush1.msra.mxu0 0.0
    %3923 = vmatprep.subr.mxu0 0.0
    %3924 = vmatpush1.msra.mxu0 0.0
    %3925 = vmatprep.subr.mxu0 0.0
    %3926 = vmatpush1.msra.mxu0 0.0
    %3927 = vmatprep.subr.mxu0 0.0
    %3928 = vmatpush1.msra.mxu0 0.0
    %3929 = vmatprep.subr.mxu0 0.0
    %3930 = vmatpush1.msra.mxu0 0.0
    %3931 = vmatprep.subr.mxu0 0.0
    %3932 = vmatpush1.msra.mxu0 0.0
    %3933 = vmatprep.subr.mxu0 0.0
    %3934 = vmatpush1.msra.mxu0 0.0
    %3935 = vmatprep.subr.mxu0 0.0
    %3936 = vmatpush1.msra.mxu0 0.0
    %3937 = vmatprep.subr.mxu0 0.0
    %3938 = vmatpush1.msra.mxu0 0.0
    %3939 = vmatprep.subr.mxu0 0.0
    %3940 = vmatpush1.msra.mxu0 0.0
    %3941 = vmatprep.subr.mxu0 0.0
    %3942 = vmatpush1.msra.mxu0 0.0
    %3943 = vmatprep.subr.mxu0 0.0
    %3944 = vmatpush1.msra.mxu0 0.0
    %3945 = vmatprep.subr.mxu0 0.0
    %3946 = vmatpush1.msra.mxu0 0.0
    %3947 = vmatprep.subr.mxu0 0.0
    %3948 = vmatpush1.msra.mxu0 0.0
    %3949 = vmatprep.subr.mxu0 0.0
    %3950 = vmatpush1.msra.mxu0 0.0
    %3951 = vmatprep.subr.mxu0 0.0
    %3952 = vmatpush1.msra.mxu0 0.0
    %3953 = vmatprep.subr.mxu0 0.0
    %3954 = vmatpush1.msra.mxu0 0.0
    %3955 = vmatprep.subr.mxu0 0.0
    %3956 = vmatpush1.msra.mxu0 0.0
    %3957 = vmatprep.subr.mxu0 0.0
    %3958 = vmatpush1.msra.mxu0 0.0
    %3959 = vmatprep.subr.mxu0 0.0
    %3960 = vmatpush1.msra.mxu0 0.0
    %3961 = vmatprep.subr.mxu0 0.0
    %3962 = vmatpush1.msra.mxu0 0.0
    %3963 = vmatprep.subr.mxu0 0.0
    %3964 = vmatpush1.msra.mxu0 0.0
    %3965 = vmatprep.subr.mxu0 0.0
    %3966 = vmatpush1.msra.mxu0 0.0
    %3967 = vmatprep.subr.mxu0 0.0
    %3968 = vmatpush1.msra.mxu0 0.0
    %3969 = vmatprep.mubr.f32.mxu0 0.0
    %3970 = vmatmul.mubr.f32.gmra.mrb[0].mxu0 %v3903
    %v3971 = vpop.f32.mrb[0].mxu0
    %v3972 = vadd.f32 0.0, %v3971
    %v3973 = vpop.f32.mrb[0].mxu0
    %3974 = vdwg.mxu0
    %vm3975 = vcmask 7168
    %v3976 = vsel %vm3975, %v3972, -inf
    %v3977 = vrot.slane %v3976, 4
    %v3978 = vmax.f32 %v3976, %v3977
    %v3979 = vrot.slane %v3978, 2
    %v3980 = vmax.f32 %v3978, %v3979
    %v3981 = vrot.slane %v3980, 1
    %v3982 = vmax.f32 %v3980, %v3981
    %v3983 = vsub.f32 %v3972, %v3982
    %v3984 = vmul.f32 %v3983, 1.442695
    %v3985 = vpow.pop %v3984
    %v3986 = vsel %vm3975, %v3985, 0.0
    %v3987 = vrot.slane %v3986, 4
    %v3988 = vadd.f32 %v3986, %v3987
    %v3989 = vrot.slane %v3988, 2
    %v3990 = vadd.f32 %v3988, %v3989
    %v3991 = vrot.slane %v3990, 1
    %v3992 = vadd.f32 %v3990, %v3991
    %v3993 = vrcp.pop %v3992
    %v3994 = vmul.f32 %v3985, %v3993
    %3995 = vst.msk [vmem:[%s15] sm:$0xff] %vm3975, %v3994
    // Predicated region
    $region86: #{rnn_gcn_forward.1} parent=1 // pred_check
      _
    $region87: #{rnn_gcn_forward.1} parent=1 // pred_check_branch
      %3997 = sbr.rel (0) target = $region89
    $region88: #{rnn_gcn_forward.1} parent=1 // pred_region
      _
    $region89: #{rnn_gcn_forward.1} parent=1 // pred_fallthru
      _
    // Predicated region
    $region90: #{rnn_gcn_forward.1} parent=1 // pred_check
      _
    $region91: #{rnn_gcn_forward.1} parent=1 // pred_check_branch
      %3999 = sbr.rel (0) target = $region93
    $region92: #{rnn_gcn_forward.1} parent=1 // pred_region
      _
    $region93: #{rnn_gcn_forward.1} parent=1 // pred_fallthru
      _
    %4000 = vsyncpa [#allocation3], 1
    %4001 = vsyncpa [#allocation5], 1
    %4002 = vsyncpa [#allocation8], 1
    %4003 = vsyncpa [#allocation11], 1

</llo_original>
